<compile_context>
chip_gen: v5e
topology: v5e:2x2
jax: 0.10.0
libtpu: 0.0.40
codegen_flags: <defaults>
</compile_context>

<pallas_src>
import math
import functools

import jax
import jax.numpy as jnp
from jax import lax
from jax.experimental import pallas as pl
from jax.experimental.pallas import tpu as pltpu

# ----------------------------- config (small synthetic sizes) -----------------------------
VOCAB = 64            # n_embeddings
VOCAB_PAD = 128       # lane-dense LM-head output width (sliced back to VOCAB outside)
E = 32                # embeddings_size
HEADS = 4             # n_heads
HEAD_DIM = E // HEADS
LAYERS = 2            # n_layers
FF = 4 * E            # feed-forward hidden
SEQ = 8
BATCH = 2
N_POS = 16            # n_pos_embeddings
PAD_IDX = 0           # padding_idx
LN_EPS = 1e-5
GRID = 2              # parallel grid steps over the concatenated batch (v7x: 2 TCs)


# ----------------------------- fused Pallas kernel -----------------------------
def _make_fused_kernel(gb, seq, layers, heads, head_dim):
    """gb = batches handled per grid step; m = gb*seq activation rows per step."""
    m = gb * seq
    e = heads * head_dim
    scale = 1.0 / math.sqrt(head_dim)

    def _ln(x, g, b):
        mu = jnp.mean(x, axis=-1, keepdims=True)
        var = jnp.mean(jnp.square(x - mu), axis=-1, keepdims=True)
        return (x - mu) * lax.rsqrt(var + LN_EPS) * g + b

    def kernel(x_ref, kb_ref, rm_ref,
               wqkv_ref, bqkv_ref, wo_ref, bo_ref, ln1g_ref, ln1b_ref,
               wff1_ref, bff1_ref, wff2_ref, bff2_ref, ln2g_ref, ln2b_ref,
               lm_ref, h_out_ref, logits_ref, attn_scratch):
        x = x_ref[...]                                               # (m, E)

        for l in range(layers):                                      # static unroll
            # --- fused QKV projection (weights resident in VMEM) ---
            qkv = jnp.dot(x, wqkv_ref[l],
                          preferred_element_type=jnp.float32) + bqkv_ref[l]   # (m, 3E)

            # --- attention: all batches & heads of this grid step inside the kernel ---
            for bi in range(gb):
                r0 = bi * seq
                kb = kb_ref[bi]                                      # (1, seq) key-pad bias
                for h in range(heads):
                    c0 = h * head_dim
                    q = qkv[r0:r0 + seq, c0:c0 + head_dim] * scale   # (seq, d)
                    k = qkv[r0:r0 + seq, e + c0:e + c0 + head_dim]
                    v = qkv[r0:r0 + seq, 2 * e + c0:2 * e + c0 + head_dim]
                    # contract last dims directly — no explicit transpose of k
                    s = lax.dot_general(q, k, (((1,), (1,)), ((), ())),
                                        preferred_element_type=jnp.float32)
                    s = s + kb                                       # (seq, seq)
                    mmax = jnp.max(s, axis=-1, keepdims=True)
                    p = jnp.exp(s - mmax)
                    denom = jnp.sum(p, axis=-1, keepdims=True)
                    p = p * pl.reciprocal(denom, approx=True)        # EUP, not a VALU divide
                    o = jnp.dot(p, v, preferred_element_type=jnp.float32)
                    attn_scratch[pl.ds(r0, seq), pl.ds(c0, head_dim)] = o

            # --- output projection + fused residual + post-LN ---
            a = jnp.dot(attn_scratch[...], wo_ref[l],
                        preferred_element_type=jnp.float32) + bo_ref[l]
            x = _ln(x + a, ln1g_ref[l], ln1b_ref[l])

            # --- feed-forward (GELU fused) + fused residual + post-LN ---
            f = jax.nn.gelu(jnp.dot(x, wff1_ref[l],
                                    preferred_element_type=jnp.float32) + bff1_ref[l])
            f = jnp.dot(f, wff2_ref[l], preferred_element_type=jnp.float32) + bff2_ref[l]
            x = _ln(x + f, ln2g_ref[l], ln2b_ref[l])

        # zero padded positions, write hidden + tied-embedding logits (lane-dense 128)
        x = x * rm_ref[...]
        h_out_ref[...] = x
        logits_ref[...] = jnp.dot(x, lm_ref[...], preferred_element_type=jnp.float32)

    return kernel


def fused_forward(x0, key_bias, row_mask, p, lm_w):
    """x0: (B2*S, E); key_bias: (B2, 1, S); row_mask: (B2*S, 1); lm_w: (E, VOCAB_PAD)."""
    b2s, e = x0.shape
    b2, _, s = key_bias.shape
    assert b2 % GRID == 0
    gb = b2 // GRID
    m = gb * s

    kernel = _make_fused_kernel(gb, s, LAYERS, HEADS, HEAD_DIM)

    def full(arr):
        n = arr.ndim
        return pl.BlockSpec(arr.shape, lambda g, _n=n: (0,) * _n)   # resident, no re-fetch

    hidden, logits = pl.pallas_call(
        kernel,
        out_shape=(jax.ShapeDtypeStruct((b2s, e), jnp.float32),
                   jax.ShapeDtypeStruct((b2s, VOCAB_PAD), jnp.float32)),
        grid=(GRID,),
        in_specs=[
            pl.BlockSpec((m, e), lambda g: (g, 0)),          # activations
            pl.BlockSpec((gb, 1, s), lambda g: (g, 0, 0)),   # key-padding bias
            pl.BlockSpec((m, 1), lambda g: (g, 0)),          # row mask
            full(p["w_qkv"]), full(p["b_qkv"]), full(p["w_o"]), full(p["b_o"]),
            full(p["ln1_g"]), full(p["ln1_b"]),
            full(p["w_ff1"]), full(p["b_ff1"]), full(p["w_ff2"]), full(p["b_ff2"]),
            full(p["ln2_g"]), full(p["ln2_b"]),
            full(lm_w),
        ],
        out_specs=(pl.BlockSpec((m, e), lambda g: (g, 0)),
                   pl.BlockSpec((m, VOCAB_PAD), lambda g: (g, 0))),
        scratch_shapes=[pltpu.VMEM((m, e), jnp.float32)],
        compiler_params=pltpu.CompilerParams(dimension_semantics=("parallel",)),
    )(x0, key_bias, row_mask,
      p["w_qkv"], p["b_qkv"], p["w_o"], p["b_o"], p["ln1_g"], p["ln1_b"],
      p["w_ff1"], p["b_ff1"], p["w_ff2"], p["b_ff2"], p["ln2_g"], p["ln2_b"],
      lm_w)
    return hidden, logits


# ----------------------------- parameter init (deterministic, stacked per-layer) -----------------------------
def init_params(key):
    def norm(k, shape, std=0.02):
        return std * jax.random.normal(k, shape, dtype=jnp.float32)

    keys = jax.random.split(key, 6)
    emb = norm(keys[0], (VOCAB, E)).at[PAD_IDX].set(0.0)      # token emb (tied with pre_softmax)
    pos_emb = norm(keys[1], (N_POS + 1, E)).at[0].set(0.0)    # position 0 reserved for padding
    return dict(
        emb=emb, pos_emb=pos_emb,
        w_qkv=norm(keys[2], (LAYERS, E, 3 * E)),
        b_qkv=jnp.zeros((LAYERS, 1, 3 * E), jnp.float32),
        w_o=norm(keys[3], (LAYERS, E, E)),
        b_o=jnp.zeros((LAYERS, 1, E), jnp.float32),
        ln1_g=jnp.ones((LAYERS, 1, E), jnp.float32),
        ln1_b=jnp.zeros((LAYERS, 1, E), jnp.float32),
        w_ff1=norm(keys[4], (LAYERS, E, FF)),
        b_ff1=jnp.zeros((LAYERS, 1, FF), jnp.float32),
        w_ff2=norm(keys[5], (LAYERS, FF, E)),
        b_ff2=jnp.zeros((LAYERS, 1, E), jnp.float32),
        ln2_g=jnp.ones((LAYERS, 1, E), jnp.float32),
        ln2_b=jnp.zeros((LAYERS, 1, E), jnp.float32),
    )


# ----------------------------- model forward -----------------------------
def transformer_model_forward(params, persona, dialog):
    """Mirrors TransformerModel.forward(persona, dialog): encode both, apply tied LM head."""
    B, S = persona.shape
    tokens = jnp.concatenate([persona, dialog], axis=0)        # one batched pass (B2 = 2B)
    B2 = tokens.shape[0]

    padding_mask = tokens == PAD_IDX
    positions = (jnp.arange(1, S + 1, dtype=jnp.int32)[None, :]
                 * (~padding_mask).astype(jnp.int32))

    x = jnp.take(params["emb"], tokens, axis=0) * math.sqrt(E)   # normalize_embeddings
    x = x + jnp.take(params["pos_emb"], positions, axis=0)       # (B2, S, E)
    x0 = x.reshape(B2 * S, E).astype(jnp.float32)

    key_bias = jnp.where(padding_mask, -1e9, 0.0).astype(jnp.float32)[:, None, :]  # (B2,1,S)
    row_mask = jnp.where(padding_mask, 0.0, 1.0).astype(jnp.float32).reshape(B2 * S, 1)

    # tied LM head: emb^T padded to a lane-dense 128-wide output, zeros beyond VOCAB
    lm_w = jnp.zeros((E, VOCAB_PAD), jnp.float32).at[:, :VOCAB].set(params["emb"].T)

    hidden2d, logits2d = fused_forward(x0, key_bias, row_mask, params, lm_w)

    hidden = hidden2d.reshape(B2, S, E)
    logits = logits2d[:, :VOCAB].reshape(B2, S, VOCAB)

    enc_persona, enc_dialog = hidden[:B], hidden[B:]
    enc_persona_generated, enc_dialog_generated = logits[:B], logits[B:]
    return enc_persona, enc_persona_generated, enc_dialog, enc_dialog_generated


# ----------------------------- main -----------------------------
if __name__ == "__main__":
    key = jax.random.PRNGKey(0)
    wkey, pkey, dkey = jax.random.split(key, 3)

    params = init_params(wkey)

    persona = jax.random.randint(pkey, (BATCH, SEQ), 1, VOCAB, dtype=jnp.int32)
    dialog = jax.random.randint(dkey, (BATCH, SEQ), 1, VOCAB, dtype=jnp.int32)
    # introduce some trailing padding (padding_idx = 0)
    persona = persona.at[:, -2:].set(PAD_IDX)
    dialog = dialog.at[0, -3:].set(PAD_IDX)

    fwd = jax.jit(functools.partial(transformer_model_forward, params))
    enc_p, gen_p, enc_d, gen_d = fwd(persona, dialog)
    jax.block_until_ready((enc_p, gen_p, enc_d, gen_d))

    assert enc_p.shape == (BATCH, SEQ, E)
    assert gen_p.shape == (BATCH, SEQ, VOCAB)
    assert enc_d.shape == (BATCH, SEQ, E)
    assert gen_d.shape == (BATCH, SEQ, VOCAB)
    assert bool(jnp.isfinite(gen_p).all()) and bool(jnp.isfinite(gen_d).all())
    print("KERNEL_OK")
</pallas_src>

<mosaic_0001>
module attributes {stable_mosaic.version = 11 : i64} {
  func.func @kernel(%arg0: i32, %arg1: memref<16x32xf32, #tpu.memory_space<vmem>>, %arg2: memref<2x1x8xf32, #tpu.memory_space<vmem>>, %arg3: memref<16x1xf32, #tpu.memory_space<vmem>>, %arg4: memref<2x32x96xf32, #tpu.memory_space<vmem>>, %arg5: memref<2x1x96xf32, #tpu.memory_space<vmem>>, %arg6: memref<2x32x32xf32, #tpu.memory_space<vmem>>, %arg7: memref<2x1x32xf32, #tpu.memory_space<vmem>>, %arg8: memref<2x1x32xf32, #tpu.memory_space<vmem>>, %arg9: memref<2x1x32xf32, #tpu.memory_space<vmem>>, %arg10: memref<2x32x128xf32, #tpu.memory_space<vmem>>, %arg11: memref<2x1x128xf32, #tpu.memory_space<vmem>>, %arg12: memref<2x128x32xf32, #tpu.memory_space<vmem>>, %arg13: memref<2x1x32xf32, #tpu.memory_space<vmem>>, %arg14: memref<2x1x32xf32, #tpu.memory_space<vmem>>, %arg15: memref<2x1x32xf32, #tpu.memory_space<vmem>>, %arg16: memref<32x128xf32, #tpu.memory_space<vmem>>, %arg17: memref<16x32xf32, #tpu.memory_space<vmem>>, %arg18: memref<16x128xf32, #tpu.memory_space<vmem>>, %arg19: memref<16x32xf32, #tpu.memory_space<vmem>>) attributes {dimension_semantics = [#tpu.dimension_semantics<parallel>], iteration_bounds = array<i64: 2>, scalar_prefetch = 0 : i64, scratch_operands = 1 : i64, tpu.core_type = #tpu.core_type<tc>, window_params = [{transform_indices = @transform_0, window_bounds = array<i64: 16, 32>}, {transform_indices = @transform_1, window_bounds = array<i64: 2, 1, 8>}, {transform_indices = @transform_2, window_bounds = array<i64: 16, 1>}, {pipeline_mode = #tpu.pipeline_mode<synchronous>, transform_indices = @transform_3, window_bounds = array<i64: 2, 32, 96>}, {pipeline_mode = #tpu.pipeline_mode<synchronous>, transform_indices = @transform_4, window_bounds = array<i64: 2, 1, 96>}, {pipeline_mode = #tpu.pipeline_mode<synchronous>, transform_indices = @transform_5, window_bounds = array<i64: 2, 32, 32>}, {pipeline_mode = #tpu.pipeline_mode<synchronous>, transform_indices = @transform_6, window_bounds = array<i64: 2, 1, 32>}, {pipeline_mode = #tpu.pipeline_mode<synchronous>, transform_indices = @transform_7, window_bounds = array<i64: 2, 1, 32>}, {pipeline_mode = #tpu.pipeline_mode<synchronous>, transform_indices = @transform_8, window_bounds = array<i64: 2, 1, 32>}, {pipeline_mode = #tpu.pipeline_mode<synchronous>, transform_indices = @transform_9, window_bounds = array<i64: 2, 32, 128>}, {pipeline_mode = #tpu.pipeline_mode<synchronous>, transform_indices = @transform_10, window_bounds = array<i64: 2, 1, 128>}, {pipeline_mode = #tpu.pipeline_mode<synchronous>, transform_indices = @transform_11, window_bounds = array<i64: 2, 128, 32>}, {pipeline_mode = #tpu.pipeline_mode<synchronous>, transform_indices = @transform_12, window_bounds = array<i64: 2, 1, 32>}, {pipeline_mode = #tpu.pipeline_mode<synchronous>, transform_indices = @transform_13, window_bounds = array<i64: 2, 1, 32>}, {pipeline_mode = #tpu.pipeline_mode<synchronous>, transform_indices = @transform_14, window_bounds = array<i64: 2, 1, 32>}, {pipeline_mode = #tpu.pipeline_mode<synchronous>, transform_indices = @transform_15, window_bounds = array<i64: 32, 128>}, {transform_indices = @transform_16, window_bounds = array<i64: 16, 32>}, {transform_indices = @transform_17, window_bounds = array<i64: 16, 128>}]} {
    %c0 = arith.constant 0 : index
    %c0_0 = arith.constant 0 : index
    %0 = vector.load %arg1[%c0, %c0_0] : memref<16x32xf32, #tpu.memory_space<vmem>>, vector<16x32xf32>
    %c0_1 = arith.constant 0 : index
    %c0_2 = arith.constant 0 : index
    %c0_3 = arith.constant 0 : index
    %1 = vector.load %arg4[%c0_1, %c0_2, %c0_3] : memref<2x32x96xf32, #tpu.memory_space<vmem>>, vector<1x32x96xf32>
    %2 = vector.shape_cast %1 : vector<1x32x96xf32> to vector<32x96xf32>
    %cst = arith.constant dense<0.000000e+00> : vector<16x96xf32>
    %3 = tpu.matmul %0, %2, %cst {dimension_numbers = #tpu.dot_dimension_numbers<[1], [0], [0], [1], [0, 0, 1, 1], [], []>} : vector<16x32xf32>, vector<32x96xf32>, vector<16x96xf32> -> vector<16x96xf32>
    %c0_4 = arith.constant 0 : index
    %c0_5 = arith.constant 0 : index
    %c0_6 = arith.constant 0 : index
    %4 = vector.load %arg5[%c0_4, %c0_5, %c0_6] : memref<2x1x96xf32, #tpu.memory_space<vmem>>, vector<1x1x96xf32>
    %5 = vector.shape_cast %4 : vector<1x1x96xf32> to vector<1x96xf32>
    %6 = vector.broadcast %5 : vector<1x96xf32> to vector<16x96xf32>
    %7 = arith.addf %3, %6 : vector<16x96xf32>
    %c0_7 = arith.constant 0 : index
    %c0_8 = arith.constant 0 : index
    %c0_9 = arith.constant 0 : index
    %8 = vector.load %arg2[%c0_7, %c0_8, %c0_9] : memref<2x1x8xf32, #tpu.memory_space<vmem>>, vector<1x1x8xf32>
    %9 = vector.shape_cast %8 : vector<1x1x8xf32> to vector<1x8xf32>
    %10 = vector.extract_strided_slice %7 {offsets = [0, 0], sizes = [8, 8], strides = [1, 1]} : vector<16x96xf32> to vector<8x8xf32>
    %cst_10 = arith.constant 0.353553385 : f32
    %11 = vector.broadcast %cst_10 : f32 to vector<8x8xf32>
    %12 = arith.mulf %10, %11 : vector<8x8xf32>
    %13 = vector.extract_strided_slice %7 {offsets = [0, 32], sizes = [8, 8], strides = [1, 1]} : vector<16x96xf32> to vector<8x8xf32>
    %14 = vector.extract_strided_slice %7 {offsets = [0, 64], sizes = [8, 8], strides = [1, 1]} : vector<16x96xf32> to vector<8x8xf32>
    %cst_11 = arith.constant dense<0.000000e+00> : vector<8x8xf32>
    %15 = tpu.matmul %12, %13, %cst_11 {dimension_numbers = #tpu.dot_dimension_numbers<[1], [1], [0], [0], [0, 0, 1, 0], [], []>} : vector<8x8xf32>, vector<8x8xf32>, vector<8x8xf32> -> vector<8x8xf32>
    %16 = vector.broadcast %9 : vector<1x8xf32> to vector<8x8xf32>
    %17 = arith.addf %15, %16 : vector<8x8xf32>
    %cst_12 = arith.constant dense<0xFF800000> : vector<8xf32>
    %18 = vector.multi_reduction <maximumf>, %17, %cst_12 [1] : vector<8x8xf32> to vector<8xf32>
    %19 = vector.shape_cast %18 : vector<8xf32> to vector<8x1xf32>
    %20 = vector.broadcast %19 : vector<8x1xf32> to vector<8x8xf32>
    %21 = arith.subf %17, %20 : vector<8x8xf32>
    %22 = math.exp %21 : vector<8x8xf32>
    %cst_13 = arith.constant dense<0.000000e+00> : vector<8xf32>
    %23 = vector.multi_reduction <add>, %22, %cst_13 [1] : vector<8x8xf32> to vector<8xf32>
    %24 = vector.shape_cast %23 : vector<8xf32> to vector<8x1xf32>
    %25 = tpu.reciprocal %24 {approx = true} : vector<8x1xf32> -> vector<8x1xf32>
    %26 = vector.broadcast %25 : vector<8x1xf32> to vector<8x8xf32>
    %27 = arith.mulf %22, %26 : vector<8x8xf32>
    %cst_14 = arith.constant dense<0.000000e+00> : vector<8x8xf32>
    %28 = tpu.matmul %27, %14, %cst_14 {dimension_numbers = #tpu.dot_dimension_numbers<[1], [0], [0], [1], [0, 0, 1, 1], [], []>} : vector<8x8xf32>, vector<8x8xf32>, vector<8x8xf32> -> vector<8x8xf32>
    %c0_15 = arith.constant 0 : index
    %c0_16 = arith.constant 0 : index
    %29 = vector.load %arg19[%c0_15, %c0_16] : memref<16x32xf32, #tpu.memory_space<vmem>>, vector<8x8xf32>
    tpu.vector_store %arg19[%c0_15, %c0_16], %28 {strides = array<i32>} : memref<16x32xf32, #tpu.memory_space<vmem>>, vector<8x8xf32>,
    %30 = vector.extract_strided_slice %7 {offsets = [0, 8], sizes = [8, 8], strides = [1, 1]} : vector<16x96xf32> to vector<8x8xf32>
    %cst_17 = arith.constant 0.353553385 : f32
    %31 = vector.broadcast %cst_17 : f32 to vector<8x8xf32>
    %32 = arith.mulf %30, %31 : vector<8x8xf32>
    %33 = vector.extract_strided_slice %7 {offsets = [0, 40], sizes = [8, 8], strides = [1, 1]} : vector<16x96xf32> to vector<8x8xf32>
    %34 = vector.extract_strided_slice %7 {offsets = [0, 72], sizes = [8, 8], strides = [1, 1]} : vector<16x96xf32> to vector<8x8xf32>
    %cst_18 = arith.constant dense<0.000000e+00> : vector<8x8xf32>
    %35 = tpu.matmul %32, %33, %cst_18 {dimension_numbers = #tpu.dot_dimension_numbers<[1], [1], [0], [0], [0, 0, 1, 0], [], []>} : vector<8x8xf32>, vector<8x8xf32>, vector<8x8xf32> -> vector<8x8xf32>
    %36 = vector.broadcast %9 : vector<1x8xf32> to vector<8x8xf32>
    %37 = arith.addf %35, %36 : vector<8x8xf32>
    %cst_19 = arith.constant dense<0xFF800000> : vector<8xf32>
    %38 = vector.multi_reduction <maximumf>, %37, %cst_19 [1] : vector<8x8xf32> to vector<8xf32>
    %39 = vector.shape_cast %38 : vector<8xf32> to vector<8x1xf32>
    %40 = vector.broadcast %39 : vector<8x1xf32> to vector<8x8xf32>
    %41 = arith.subf %37, %40 : vector<8x8xf32>
    %42 = math.exp %41 : vector<8x8xf32>
    %cst_20 = arith.constant dense<0.000000e+00> : vector<8xf32>
    %43 = vector.multi_reduction <add>, %42, %cst_20 [1] : vector<8x8xf32> to vector<8xf32>
    %44 = vector.shape_cast %43 : vector<8xf32> to vector<8x1xf32>
    %45 = tpu.reciprocal %44 {approx = true} : vector<8x1xf32> -> vector<8x1xf32>
    %46 = vector.broadcast %45 : vector<8x1xf32> to vector<8x8xf32>
    %47 = arith.mulf %42, %46 : vector<8x8xf32>
    %cst_21 = arith.constant dense<0.000000e+00> : vector<8x8xf32>
    %48 = tpu.matmul %47, %34, %cst_21 {dimension_numbers = #tpu.dot_dimension_numbers<[1], [0], [0], [1], [0, 0, 1, 1], [], []>} : vector<8x8xf32>, vector<8x8xf32>, vector<8x8xf32> -> vector<8x8xf32>
    %c0_22 = arith.constant 0 : index
    %c8 = arith.constant 8 : index
    %49 = vector.load %arg19[%c0_22, %c8] : memref<16x32xf32, #tpu.memory_space<vmem>>, vector<8x8xf32>
    tpu.vector_store %arg19[%c0_22, %c8], %48 {strides = array<i32>} : memref<16x32xf32, #tpu.memory_space<vmem>>, vector<8x8xf32>,
    %50 = vector.extract_strided_slice %7 {offsets = [0, 16], sizes = [8, 8], strides = [1, 1]} : vector<16x96xf32> to vector<8x8xf32>
    %cst_23 = arith.constant 0.353553385 : f32
    %51 = vector.broadcast %cst_23 : f32 to vector<8x8xf32>
    %52 = arith.mulf %50, %51 : vector<8x8xf32>
    %53 = vector.extract_strided_slice %7 {offsets = [0, 48], sizes = [8, 8], strides = [1, 1]} : vector<16x96xf32> to vector<8x8xf32>
    %54 = vector.extract_strided_slice %7 {offsets = [0, 80], sizes = [8, 8], strides = [1, 1]} : vector<16x96xf32> to vector<8x8xf32>
    %cst_24 = arith.constant dense<0.000000e+00> : vector<8x8xf32>
    %55 = tpu.matmul %52, %53, %cst_24 {dimension_numbers = #tpu.dot_dimension_numbers<[1], [1], [0], [0], [0, 0, 1, 0], [], []>} : vector<8x8xf32>, vector<8x8xf32>, vector<8x8xf32> -> vector<8x8xf32>
    %56 = vector.broadcast %9 : vector<1x8xf32> to vector<8x8xf32>
    %57 = arith.addf %55, %56 : vector<8x8xf32>
    %cst_25 = arith.constant dense<0xFF800000> : vector<8xf32>
    %58 = vector.multi_reduction <maximumf>, %57, %cst_25 [1] : vector<8x8xf32> to vector<8xf32>
    %59 = vector.shape_cast %58 : vector<8xf32> to vector<8x1xf32>
    %60 = vector.broadcast %59 : vector<8x1xf32> to vector<8x8xf32>
    %61 = arith.subf %57, %60 : vector<8x8xf32>
    %62 = math.exp %61 : vector<8x8xf32>
    %cst_26 = arith.constant dense<0.000000e+00> : vector<8xf32>
    %63 = vector.multi_reduction <add>, %62, %cst_26 [1] : vector<8x8xf32> to vector<8xf32>
    %64 = vector.shape_cast %63 : vector<8xf32> to vector<8x1xf32>
    %65 = tpu.reciprocal %64 {approx = true} : vector<8x1xf32> -> vector<8x1xf32>
    %66 = vector.broadcast %65 : vector<8x1xf32> to vector<8x8xf32>
    %67 = arith.mulf %62, %66 : vector<8x8xf32>
    %cst_27 = arith.constant dense<0.000000e+00> : vector<8x8xf32>
    %68 = tpu.matmul %67, %54, %cst_27 {dimension_numbers = #tpu.dot_dimension_numbers<[1], [0], [0], [1], [0, 0, 1, 1], [], []>} : vector<8x8xf32>, vector<8x8xf32>, vector<8x8xf32> -> vector<8x8xf32>
    %c0_28 = arith.constant 0 : index
    %c16 = arith.constant 16 : index
    %69 = vector.load %arg19[%c0_28, %c16] : memref<16x32xf32, #tpu.memory_space<vmem>>, vector<8x8xf32>
    tpu.vector_store %arg19[%c0_28, %c16], %68 {strides = array<i32>} : memref<16x32xf32, #tpu.memory_space<vmem>>, vector<8x8xf32>,
    %70 = vector.extract_strided_slice %7 {offsets = [0, 24], sizes = [8, 8], strides = [1, 1]} : vector<16x96xf32> to vector<8x8xf32>
    %cst_29 = arith.constant 0.353553385 : f32
    %71 = vector.broadcast %cst_29 : f32 to vector<8x8xf32>
    %72 = arith.mulf %70, %71 : vector<8x8xf32>
    %73 = vector.extract_strided_slice %7 {offsets = [0, 56], sizes = [8, 8], strides = [1, 1]} : vector<16x96xf32> to vector<8x8xf32>
    %74 = vector.extract_strided_slice %7 {offsets = [0, 88], sizes = [8, 8], strides = [1, 1]} : vector<16x96xf32> to vector<8x8xf32>
    %cst_30 = arith.constant dense<0.000000e+00> : vector<8x8xf32>
    %75 = tpu.matmul %72, %73, %cst_30 {dimension_numbers = #tpu.dot_dimension_numbers<[1], [1], [0], [0], [0, 0, 1, 0], [], []>} : vector<8x8xf32>, vector<8x8xf32>, vector<8x8xf32> -> vector<8x8xf32>
    %76 = vector.broadcast %9 : vector<1x8xf32> to vector<8x8xf32>
    %77 = arith.addf %75, %76 : vector<8x8xf32>
    %cst_31 = arith.constant dense<0xFF800000> : vector<8xf32>
    %78 = vector.multi_reduction <maximumf>, %77, %cst_31 [1] : vector<8x8xf32> to vector<8xf32>
    %79 = vector.shape_cast %78 : vector<8xf32> to vector<8x1xf32>
    %80 = vector.broadcast %79 : vector<8x1xf32> to vector<8x8xf32>
    %81 = arith.subf %77, %80 : vector<8x8xf32>
    %82 = math.exp %81 : vector<8x8xf32>
    %cst_32 = arith.constant dense<0.000000e+00> : vector<8xf32>
    %83 = vector.multi_reduction <add>, %82, %cst_32 [1] : vector<8x8xf32> to vector<8xf32>
    %84 = vector.shape_cast %83 : vector<8xf32> to vector<8x1xf32>
    %85 = tpu.reciprocal %84 {approx = true} : vector<8x1xf32> -> vector<8x1xf32>
    %86 = vector.broadcast %85 : vector<8x1xf32> to vector<8x8xf32>
    %87 = arith.mulf %82, %86 : vector<8x8xf32>
    %cst_33 = arith.constant dense<0.000000e+00> : vector<8x8xf32>
    %88 = tpu.matmul %87, %74, %cst_33 {dimension_numbers = #tpu.dot_dimension_numbers<[1], [0], [0], [1], [0, 0, 1, 1], [], []>} : vector<8x8xf32>, vector<8x8xf32>, vector<8x8xf32> -> vector<8x8xf32>
    %c0_34 = arith.constant 0 : index
    %c24 = arith.constant 24 : index
    %89 = vector.load %arg19[%c0_34, %c24] : memref<16x32xf32, #tpu.memory_space<vmem>>, vector<8x8xf32>
    tpu.vector_store %arg19[%c0_34, %c24], %88 {strides = array<i32>} : memref<16x32xf32, #tpu.memory_space<vmem>>, vector<8x8xf32>,
    %c1 = arith.constant 1 : index
    %c0_35 = arith.constant 0 : index
    %c0_36 = arith.constant 0 : index
    %90 = vector.load %arg2[%c1, %c0_35, %c0_36] : memref<2x1x8xf32, #tpu.memory_space<vmem>>, vector<1x1x8xf32>
    %91 = vector.shape_cast %90 : vector<1x1x8xf32> to vector<1x8xf32>
    %92 = vector.extract_strided_slice %7 {offsets = [8, 0], sizes = [8, 8], strides = [1, 1]} : vector<16x96xf32> to vector<8x8xf32>
    %cst_37 = arith.constant 0.353553385 : f32
    %93 = vector.broadcast %cst_37 : f32 to vector<8x8xf32>
    %94 = arith.mulf %92, %93 : vector<8x8xf32>
    %95 = vector.extract_strided_slice %7 {offsets = [8, 32], sizes = [8, 8], strides = [1, 1]} : vector<16x96xf32> to vector<8x8xf32>
    %96 = vector.extract_strided_slice %7 {offsets = [8, 64], sizes = [8, 8], strides = [1, 1]} : vector<16x96xf32> to vector<8x8xf32>
    %cst_38 = arith.constant dense<0.000000e+00> : vector<8x8xf32>
    %97 = tpu.matmul %94, %95, %cst_38 {dimension_numbers = #tpu.dot_dimension_numbers<[1], [1], [0], [0], [0, 0, 1, 0], [], []>} : vector<8x8xf32>, vector<8x8xf32>, vector<8x8xf32> -> vector<8x8xf32>
    %98 = vector.broadcast %91 : vector<1x8xf32> to vector<8x8xf32>
    %99 = arith.addf %97, %98 : vector<8x8xf32>
    %cst_39 = arith.constant dense<0xFF800000> : vector<8xf32>
    %100 = vector.multi_reduction <maximumf>, %99, %cst_39 [1] : vector<8x8xf32> to vector<8xf32>
    %101 = vector.shape_cast %100 : vector<8xf32> to vector<8x1xf32>
    %102 = vector.broadcast %101 : vector<8x1xf32> to vector<8x8xf32>
    %103 = arith.subf %99, %102 : vector<8x8xf32>
    %104 = math.exp %103 : vector<8x8xf32>
    %cst_40 = arith.constant dense<0.000000e+00> : vector<8xf32>
    %105 = vector.multi_reduction <add>, %104, %cst_40 [1] : vector<8x8xf32> to vector<8xf32>
    %106 = vector.shape_cast %105 : vector<8xf32> to vector<8x1xf32>
    %107 = tpu.reciprocal %106 {approx = true} : vector<8x1xf32> -> vector<8x1xf32>
    %108 = vector.broadcast %107 : vector<8x1xf32> to vector<8x8xf32>
    %109 = arith.mulf %104, %108 : vector<8x8xf32>
    %cst_41 = arith.constant dense<0.000000e+00> : vector<8x8xf32>
    %110 = tpu.matmul %109, %96, %cst_41 {dimension_numbers = #tpu.dot_dimension_numbers<[1], [0], [0], [1], [0, 0, 1, 1], [], []>} : vector<8x8xf32>, vector<8x8xf32>, vector<8x8xf32> -> vector<8x8xf32>
    %c8_42 = arith.constant 8 : index
    %c0_43 = arith.constant 0 : index
    %111 = vector.load %arg19[%c8_42, %c0_43] : memref<16x32xf32, #tpu.memory_space<vmem>>, vector<8x8xf32>
    tpu.vector_store %arg19[%c8_42, %c0_43], %110 {strides = array<i32>} : memref<16x32xf32, #tpu.memory_space<vmem>>, vector<8x8xf32>,
    %112 = vector.extract_strided_slice %7 {offsets = [8, 8], sizes = [8, 8], strides = [1, 1]} : vector<16x96xf32> to vector<8x8xf32>
    %cst_44 = arith.constant 0.353553385 : f32
    %113 = vector.broadcast %cst_44 : f32 to vector<8x8xf32>
    %114 = arith.mulf %112, %113 : vector<8x8xf32>
    %115 = vector.extract_strided_slice %7 {offsets = [8, 40], sizes = [8, 8], strides = [1, 1]} : vector<16x96xf32> to vector<8x8xf32>
    %116 = vector.extract_strided_slice %7 {offsets = [8, 72], sizes = [8, 8], strides = [1, 1]} : vector<16x96xf32> to vector<8x8xf32>
    %cst_45 = arith.constant dense<0.000000e+00> : vector<8x8xf32>
    %117 = tpu.matmul %114, %115, %cst_45 {dimension_numbers = #tpu.dot_dimension_numbers<[1], [1], [0], [0], [0, 0, 1, 0], [], []>} : vector<8x8xf32>, vector<8x8xf32>, vector<8x8xf32> -> vector<8x8xf32>
    %118 = vector.broadcast %91 : vector<1x8xf32> to vector<8x8xf32>
    %119 = arith.addf %117, %118 : vector<8x8xf32>
    %cst_46 = arith.constant dense<0xFF800000> : vector<8xf32>
    %120 = vector.multi_reduction <maximumf>, %119, %cst_46 [1] : vector<8x8xf32> to vector<8xf32>
    %121 = vector.shape_cast %120 : vector<8xf32> to vector<8x1xf32>
    %122 = vector.broadcast %121 : vector<8x1xf32> to vector<8x8xf32>
    %123 = arith.subf %119, %122 : vector<8x8xf32>
    %124 = math.exp %123 : vector<8x8xf32>
    %cst_47 = arith.constant dense<0.000000e+00> : vector<8xf32>
    %125 = vector.multi_reduction <add>, %124, %cst_47 [1] : vector<8x8xf32> to vector<8xf32>
    %126 = vector.shape_cast %125 : vector<8xf32> to vector<8x1xf32>
    %127 = tpu.reciprocal %126 {approx = true} : vector<8x1xf32> -> vector<8x1xf32>
    %128 = vector.broadcast %127 : vector<8x1xf32> to vector<8x8xf32>
    %129 = arith.mulf %124, %128 : vector<8x8xf32>
    %cst_48 = arith.constant dense<0.000000e+00> : vector<8x8xf32>
    %130 = tpu.matmul %129, %116, %cst_48 {dimension_numbers = #tpu.dot_dimension_numbers<[1], [0], [0], [1], [0, 0, 1, 1], [], []>} : vector<8x8xf32>, vector<8x8xf32>, vector<8x8xf32> -> vector<8x8xf32>
    %c8_49 = arith.constant 8 : index
    %c8_50 = arith.constant 8 : index
    %131 = vector.load %arg19[%c8_49, %c8_50] : memref<16x32xf32, #tpu.memory_space<vmem>>, vector<8x8xf32>
    tpu.vector_store %arg19[%c8_49, %c8_50], %130 {strides = array<i32>} : memref<16x32xf32, #tpu.memory_space<vmem>>, vector<8x8xf32>,
    %132 = vector.extract_strided_slice %7 {offsets = [8, 16], sizes = [8, 8], strides = [1, 1]} : vector<16x96xf32> to vector<8x8xf32>
    %cst_51 = arith.constant 0.353553385 : f32
    %133 = vector.broadcast %cst_51 : f32 to vector<8x8xf32>
    %134 = arith.mulf %132, %133 : vector<8x8xf32>
    %135 = vector.extract_strided_slice %7 {offsets = [8, 48], sizes = [8, 8], strides = [1, 1]} : vector<16x96xf32> to vector<8x8xf32>
    %136 = vector.extract_strided_slice %7 {offsets = [8, 80], sizes = [8, 8], strides = [1, 1]} : vector<16x96xf32> to vector<8x8xf32>
    %cst_52 = arith.constant dense<0.000000e+00> : vector<8x8xf32>
    %137 = tpu.matmul %134, %135, %cst_52 {dimension_numbers = #tpu.dot_dimension_numbers<[1], [1], [0], [0], [0, 0, 1, 0], [], []>} : vector<8x8xf32>, vector<8x8xf32>, vector<8x8xf32> -> vector<8x8xf32>
    %138 = vector.broadcast %91 : vector<1x8xf32> to vector<8x8xf32>
    %139 = arith.addf %137, %138 : vector<8x8xf32>
    %cst_53 = arith.constant dense<0xFF800000> : vector<8xf32>
    %140 = vector.multi_reduction <maximumf>, %139, %cst_53 [1] : vector<8x8xf32> to vector<8xf32>
    %141 = vector.shape_cast %140 : vector<8xf32> to vector<8x1xf32>
    %142 = vector.broadcast %141 : vector<8x1xf32> to vector<8x8xf32>
    %143 = arith.subf %139, %142 : vector<8x8xf32>
    %144 = math.exp %143 : vector<8x8xf32>
    %cst_54 = arith.constant dense<0.000000e+00> : vector<8xf32>
    %145 = vector.multi_reduction <add>, %144, %cst_54 [1] : vector<8x8xf32> to vector<8xf32>
    %146 = vector.shape_cast %145 : vector<8xf32> to vector<8x1xf32>
    %147 = tpu.reciprocal %146 {approx = true} : vector<8x1xf32> -> vector<8x1xf32>
    %148 = vector.broadcast %147 : vector<8x1xf32> to vector<8x8xf32>
    %149 = arith.mulf %144, %148 : vector<8x8xf32>
    %cst_55 = arith.constant dense<0.000000e+00> : vector<8x8xf32>
    %150 = tpu.matmul %149, %136, %cst_55 {dimension_numbers = #tpu.dot_dimension_numbers<[1], [0], [0], [1], [0, 0, 1, 1], [], []>} : vector<8x8xf32>, vector<8x8xf32>, vector<8x8xf32> -> vector<8x8xf32>
    %c8_56 = arith.constant 8 : index
    %c16_57 = arith.constant 16 : index
    %151 = vector.load %arg19[%c8_56, %c16_57] : memref<16x32xf32, #tpu.memory_space<vmem>>, vector<8x8xf32>
    tpu.vector_store %arg19[%c8_56, %c16_57], %150 {strides = array<i32>} : memref<16x32xf32, #tpu.memory_space<vmem>>, vector<8x8xf32>,
    %152 = vector.extract_strided_slice %7 {offsets = [8, 24], sizes = [8, 8], strides = [1, 1]} : vector<16x96xf32> to vector<8x8xf32>
    %cst_58 = arith.constant 0.353553385 : f32
    %153 = vector.broadcast %cst_58 : f32 to vector<8x8xf32>
    %154 = arith.mulf %152, %153 : vector<8x8xf32>
    %155 = vector.extract_strided_slice %7 {offsets = [8, 56], sizes = [8, 8], strides = [1, 1]} : vector<16x96xf32> to vector<8x8xf32>
    %156 = vector.extract_strided_slice %7 {offsets = [8, 88], sizes = [8, 8], strides = [1, 1]} : vector<16x96xf32> to vector<8x8xf32>
    %cst_59 = arith.constant dense<0.000000e+00> : vector<8x8xf32>
    %157 = tpu.matmul %154, %155, %cst_59 {dimension_numbers = #tpu.dot_dimension_numbers<[1], [1], [0], [0], [0, 0, 1, 0], [], []>} : vector<8x8xf32>, vector<8x8xf32>, vector<8x8xf32> -> vector<8x8xf32>
    %158 = vector.broadcast %91 : vector<1x8xf32> to vector<8x8xf32>
    %159 = arith.addf %157, %158 : vector<8x8xf32>
    %cst_60 = arith.constant dense<0xFF800000> : vector<8xf32>
    %160 = vector.multi_reduction <maximumf>, %159, %cst_60 [1] : vector<8x8xf32> to vector<8xf32>
    %161 = vector.shape_cast %160 : vector<8xf32> to vector<8x1xf32>
    %162 = vector.broadcast %161 : vector<8x1xf32> to vector<8x8xf32>
    %163 = arith.subf %159, %162 : vector<8x8xf32>
    %164 = math.exp %163 : vector<8x8xf32>
    %cst_61 = arith.constant dense<0.000000e+00> : vector<8xf32>
    %165 = vector.multi_reduction <add>, %164, %cst_61 [1] : vector<8x8xf32> to vector<8xf32>
    %166 = vector.shape_cast %165 : vector<8xf32> to vector<8x1xf32>
    %167 = tpu.reciprocal %166 {approx = true} : vector<8x1xf32> -> vector<8x1xf32>
    %168 = vector.broadcast %167 : vector<8x1xf32> to vector<8x8xf32>
    %169 = arith.mulf %164, %168 : vector<8x8xf32>
    %cst_62 = arith.constant dense<0.000000e+00> : vector<8x8xf32>
    %170 = tpu.matmul %169, %156, %cst_62 {dimension_numbers = #tpu.dot_dimension_numbers<[1], [0], [0], [1], [0, 0, 1, 1], [], []>} : vector<8x8xf32>, vector<8x8xf32>, vector<8x8xf32> -> vector<8x8xf32>
    %c8_63 = arith.constant 8 : index
    %c24_64 = arith.constant 24 : index
    %171 = vector.load %arg19[%c8_63, %c24_64] : memref<16x32xf32, #tpu.memory_space<vmem>>, vector<8x8xf32>
    tpu.vector_store %arg19[%c8_63, %c24_64], %170 {strides = array<i32>} : memref<16x32xf32, #tpu.memory_space<vmem>>, vector<8x8xf32>,
    %c0_65 = arith.constant 0 : index
    %c0_66 = arith.constant 0 : index
    %172 = vector.load %arg19[%c0_65, %c0_66] : memref<16x32xf32, #tpu.memory_space<vmem>>, vector<16x32xf32>
    %c0_67 = arith.constant 0 : index
    %c0_68 = arith.constant 0 : index
    %c0_69 = arith.constant 0 : index
    %173 = vector.load %arg6[%c0_67, %c0_68, %c0_69] : memref<2x32x32xf32, #tpu.memory_space<vmem>>, vector<1x32x32xf32>
    %174 = vector.shape_cast %173 : vector<1x32x32xf32> to vector<32x32xf32>
    %cst_70 = arith.constant dense<0.000000e+00> : vector<16x32xf32>
    %175 = tpu.matmul %172, %174, %cst_70 {dimension_numbers = #tpu.dot_dimension_numbers<[1], [0], [0], [1], [0, 0, 1, 1], [], []>} : vector<16x32xf32>, vector<32x32xf32>, vector<16x32xf32> -> vector<16x32xf32>
    %c0_71 = arith.constant 0 : index
    %c0_72 = arith.constant 0 : index
    %c0_73 = arith.constant 0 : index
    %176 = vector.load %arg7[%c0_71, %c0_72, %c0_73] : memref<2x1x32xf32, #tpu.memory_space<vmem>>, vector<1x1x32xf32>
    %177 = vector.shape_cast %176 : vector<1x1x32xf32> to vector<1x32xf32>
    %178 = vector.broadcast %177 : vector<1x32xf32> to vector<16x32xf32>
    %179 = arith.addf %175, %178 : vector<16x32xf32>
    %180 = arith.addf %0, %179 : vector<16x32xf32>
    %c0_74 = arith.constant 0 : index
    %c0_75 = arith.constant 0 : index
    %c0_76 = arith.constant 0 : index
    %181 = vector.load %arg8[%c0_74, %c0_75, %c0_76] : memref<2x1x32xf32, #tpu.memory_space<vmem>>, vector<1x1x32xf32>
    %182 = vector.shape_cast %181 : vector<1x1x32xf32> to vector<1x32xf32>
    %c0_77 = arith.constant 0 : index
    %c0_78 = arith.constant 0 : index
    %c0_79 = arith.constant 0 : index
    %183 = vector.load %arg9[%c0_77, %c0_78, %c0_79] : memref<2x1x32xf32, #tpu.memory_space<vmem>>, vector<1x1x32xf32>
    %184 = vector.shape_cast %183 : vector<1x1x32xf32> to vector<1x32xf32>
    %cst_80 = arith.constant dense<0.000000e+00> : vector<16xf32>
    %185 = vector.multi_reduction <add>, %180, %cst_80 [1] : vector<16x32xf32> to vector<16xf32>
    %186 = vector.shape_cast %185 : vector<16xf32> to vector<16x1xf32>
    %cst_81 = arith.constant 3.200000e+01 : f32
    %187 = vector.broadcast %cst_81 : f32 to vector<16x1xf32>
    %188 = arith.divf %186, %187 : vector<16x1xf32>
    %189 = vector.broadcast %188 : vector<16x1xf32> to vector<16x32xf32>
    %190 = arith.subf %180, %189 : vector<16x32xf32>
    %191 = arith.mulf %190, %190 : vector<16x32xf32>
    %cst_82 = arith.constant dense<0.000000e+00> : vector<16xf32>
    %192 = vector.multi_reduction <add>, %191, %cst_82 [1] : vector<16x32xf32> to vector<16xf32>
    %193 = vector.shape_cast %192 : vector<16xf32> to vector<16x1xf32>
    %cst_83 = arith.constant 3.200000e+01 : f32
    %194 = vector.broadcast %cst_83 : f32 to vector<16x1xf32>
    %195 = arith.divf %193, %194 : vector<16x1xf32>
    %196 = vector.broadcast %188 : vector<16x1xf32> to vector<16x32xf32>
    %197 = arith.subf %180, %196 : vector<16x32xf32>
    %cst_84 = arith.constant 9.99999974E-6 : f32
    %198 = vector.broadcast %cst_84 : f32 to vector<16x1xf32>
    %199 = arith.addf %195, %198 : vector<16x1xf32>
    %200 = math.rsqrt %199 : vector<16x1xf32>
    %201 = vector.broadcast %200 : vector<16x1xf32> to vector<16x32xf32>
    %202 = arith.mulf %197, %201 : vector<16x32xf32>
    %203 = vector.broadcast %182 : vector<1x32xf32> to vector<16x32xf32>
    %204 = arith.mulf %202, %203 : vector<16x32xf32>
    %205 = vector.broadcast %184 : vector<1x32xf32> to vector<16x32xf32>
    %206 = arith.addf %204, %205 : vector<16x32xf32>
    %c0_85 = arith.constant 0 : index
    %c0_86 = arith.constant 0 : index
    %c0_87 = arith.constant 0 : index
    %207 = vector.load %arg10[%c0_85, %c0_86, %c0_87] : memref<2x32x128xf32, #tpu.memory_space<vmem>>, vector<1x32x128xf32>
    %208 = vector.shape_cast %207 : vector<1x32x128xf32> to vector<32x128xf32>
    %cst_88 = arith.constant dense<0.000000e+00> : vector<16x128xf32>
    %209 = tpu.matmul %206, %208, %cst_88 {dimension_numbers = #tpu.dot_dimension_numbers<[1], [0], [0], [1], [0, 0, 1, 1], [], []>} : vector<16x32xf32>, vector<32x128xf32>, vector<16x128xf32> -> vector<16x128xf32>
    %c0_89 = arith.constant 0 : index
    %c0_90 = arith.constant 0 : index
    %c0_91 = arith.constant 0 : index
    %210 = vector.load %arg11[%c0_89, %c0_90, %c0_91] : memref<2x1x128xf32, #tpu.memory_space<vmem>>, vector<1x1x128xf32>
    %211 = vector.shape_cast %210 : vector<1x1x128xf32> to vector<1x128xf32>
    %212 = vector.broadcast %211 : vector<1x128xf32> to vector<16x128xf32>
    %213 = arith.addf %209, %212 : vector<16x128xf32>
    %214 = arith.mulf %213, %213 : vector<16x128xf32>
    %215 = arith.mulf %213, %214 : vector<16x128xf32>
    %cst_92 = arith.constant 4.471500e-02 : f32
    %216 = vector.broadcast %cst_92 : f32 to vector<16x128xf32>
    %217 = arith.mulf %216, %215 : vector<16x128xf32>
    %218 = arith.addf %213, %217 : vector<16x128xf32>
    %cst_93 = arith.constant 0.797884583 : f32
    %219 = vector.broadcast %cst_93 : f32 to vector<16x128xf32>
    %220 = arith.mulf %219, %218 : vector<16x128xf32>
    %221 = math.tanh %220 : vector<16x128xf32>
    %cst_94 = arith.constant 1.000000e+00 : f32
    %222 = vector.broadcast %cst_94 : f32 to vector<16x128xf32>
    %223 = arith.addf %222, %221 : vector<16x128xf32>
    %cst_95 = arith.constant 5.000000e-01 : f32
    %224 = vector.broadcast %cst_95 : f32 to vector<16x128xf32>
    %225 = arith.mulf %224, %223 : vector<16x128xf32>
    %226 = arith.mulf %213, %225 : vector<16x128xf32>
    %c0_96 = arith.constant 0 : index
    %c0_97 = arith.constant 0 : index
    %c0_98 = arith.constant 0 : index
    %227 = vector.load %arg12[%c0_96, %c0_97, %c0_98] : memref<2x128x32xf32, #tpu.memory_space<vmem>>, vector<1x128x32xf32>
    %228 = vector.shape_cast %227 : vector<1x128x32xf32> to vector<128x32xf32>
    %cst_99 = arith.constant dense<0.000000e+00> : vector<16x32xf32>
    %229 = tpu.matmul %226, %228, %cst_99 {dimension_numbers = #tpu.dot_dimension_numbers<[1], [0], [0], [1], [0, 0, 1, 1], [], []>} : vector<16x128xf32>, vector<128x32xf32>, vector<16x32xf32> -> vector<16x32xf32>
    %c0_100 = arith.constant 0 : index
    %c0_101 = arith.constant 0 : index
    %c0_102 = arith.constant 0 : index
    %230 = vector.load %arg13[%c0_100, %c0_101, %c0_102] : memref<2x1x32xf32, #tpu.memory_space<vmem>>, vector<1x1x32xf32>
    %231 = vector.shape_cast %230 : vector<1x1x32xf32> to vector<1x32xf32>
    %232 = vector.broadcast %231 : vector<1x32xf32> to vector<16x32xf32>
    %233 = arith.addf %229, %232 : vector<16x32xf32>
    %234 = arith.addf %206, %233 : vector<16x32xf32>
    %c0_103 = arith.constant 0 : index
    %c0_104 = arith.constant 0 : index
    %c0_105 = arith.constant 0 : index
    %235 = vector.load %arg14[%c0_103, %c0_104, %c0_105] : memref<2x1x32xf32, #tpu.memory_space<vmem>>, vector<1x1x32xf32>
    %236 = vector.shape_cast %235 : vector<1x1x32xf32> to vector<1x32xf32>
    %c0_106 = arith.constant 0 : index
    %c0_107 = arith.constant 0 : index
    %c0_108 = arith.constant 0 : index
    %237 = vector.load %arg15[%c0_106, %c0_107, %c0_108] : memref<2x1x32xf32, #tpu.memory_space<vmem>>, vector<1x1x32xf32>
    %238 = vector.shape_cast %237 : vector<1x1x32xf32> to vector<1x32xf32>
    %cst_109 = arith.constant dense<0.000000e+00> : vector<16xf32>
    %239 = vector.multi_reduction <add>, %234, %cst_109 [1] : vector<16x32xf32> to vector<16xf32>
    %240 = vector.shape_cast %239 : vector<16xf32> to vector<16x1xf32>
    %cst_110 = arith.constant 3.200000e+01 : f32
    %241 = vector.broadcast %cst_110 : f32 to vector<16x1xf32>
    %242 = arith.divf %240, %241 : vector<16x1xf32>
    %243 = vector.broadcast %242 : vector<16x1xf32> to vector<16x32xf32>
    %244 = arith.subf %234, %243 : vector<16x32xf32>
    %245 = arith.mulf %244, %244 : vector<16x32xf32>
    %cst_111 = arith.constant dense<0.000000e+00> : vector<16xf32>
    %246 = vector.multi_reduction <add>, %245, %cst_111 [1] : vector<16x32xf32> to vector<16xf32>
    %247 = vector.shape_cast %246 : vector<16xf32> to vector<16x1xf32>
    %cst_112 = arith.constant 3.200000e+01 : f32
    %248 = vector.broadcast %cst_112 : f32 to vector<16x1xf32>
    %249 = arith.divf %247, %248 : vector<16x1xf32>
    %250 = vector.broadcast %242 : vector<16x1xf32> to vector<16x32xf32>
    %251 = arith.subf %234, %250 : vector<16x32xf32>
    %cst_113 = arith.constant 9.99999974E-6 : f32
    %252 = vector.broadcast %cst_113 : f32 to vector<16x1xf32>
    %253 = arith.addf %249, %252 : vector<16x1xf32>
    %254 = math.rsqrt %253 : vector<16x1xf32>
    %255 = vector.broadcast %254 : vector<16x1xf32> to vector<16x32xf32>
    %256 = arith.mulf %251, %255 : vector<16x32xf32>
    %257 = vector.broadcast %236 : vector<1x32xf32> to vector<16x32xf32>
    %258 = arith.mulf %256, %257 : vector<16x32xf32>
    %259 = vector.broadcast %238 : vector<1x32xf32> to vector<16x32xf32>
    %260 = arith.addf %258, %259 : vector<16x32xf32>
    %c1_114 = arith.constant 1 : index
    %c0_115 = arith.constant 0 : index
    %c0_116 = arith.constant 0 : index
    %261 = vector.load %arg4[%c1_114, %c0_115, %c0_116] : memref<2x32x96xf32, #tpu.memory_space<vmem>>, vector<1x32x96xf32>
    %262 = vector.shape_cast %261 : vector<1x32x96xf32> to vector<32x96xf32>
    %cst_117 = arith.constant dense<0.000000e+00> : vector<16x96xf32>
    %263 = tpu.matmul %260, %262, %cst_117 {dimension_numbers = #tpu.dot_dimension_numbers<[1], [0], [0], [1], [0, 0, 1, 1], [], []>} : vector<16x32xf32>, vector<32x96xf32>, vector<16x96xf32> -> vector<16x96xf32>
    %c1_118 = arith.constant 1 : index
    %c0_119 = arith.constant 0 : index
    %c0_120 = arith.constant 0 : index
    %264 = vector.load %arg5[%c1_118, %c0_119, %c0_120] : memref<2x1x96xf32, #tpu.memory_space<vmem>>, vector<1x1x96xf32>
    %265 = vector.shape_cast %264 : vector<1x1x96xf32> to vector<1x96xf32>
    %266 = vector.broadcast %265 : vector<1x96xf32> to vector<16x96xf32>
    %267 = arith.addf %263, %266 : vector<16x96xf32>
    %c0_121 = arith.constant 0 : index
    %c0_122 = arith.constant 0 : index
    %c0_123 = arith.constant 0 : index
    %268 = vector.load %arg2[%c0_121, %c0_122, %c0_123] : memref<2x1x8xf32, #tpu.memory_space<vmem>>, vector<1x1x8xf32>
    %269 = vector.shape_cast %268 : vector<1x1x8xf32> to vector<1x8xf32>
    %270 = vector.extract_strided_slice %267 {offsets = [0, 0], sizes = [8, 8], strides = [1, 1]} : vector<16x96xf32> to vector<8x8xf32>
    %cst_124 = arith.constant 0.353553385 : f32
    %271 = vector.broadcast %cst_124 : f32 to vector<8x8xf32>
    %272 = arith.mulf %270, %271 : vector<8x8xf32>
    %273 = vector.extract_strided_slice %267 {offsets = [0, 32], sizes = [8, 8], strides = [1, 1]} : vector<16x96xf32> to vector<8x8xf32>
    %274 = vector.extract_strided_slice %267 {offsets = [0, 64], sizes = [8, 8], strides = [1, 1]} : vector<16x96xf32> to vector<8x8xf32>
    %cst_125 = arith.constant dense<0.000000e+00> : vector<8x8xf32>
    %275 = tpu.matmul %272, %273, %cst_125 {dimension_numbers = #tpu.dot_dimension_numbers<[1], [1], [0], [0], [0, 0, 1, 0], [], []>} : vector<8x8xf32>, vector<8x8xf32>, vector<8x8xf32> -> vector<8x8xf32>
    %276 = vector.broadcast %269 : vector<1x8xf32> to vector<8x8xf32>
    %277 = arith.addf %275, %276 : vector<8x8xf32>
    %cst_126 = arith.constant dense<0xFF800000> : vector<8xf32>
    %278 = vector.multi_reduction <maximumf>, %277, %cst_126 [1] : vector<8x8xf32> to vector<8xf32>
    %279 = vector.shape_cast %278 : vector<8xf32> to vector<8x1xf32>
    %280 = vector.broadcast %279 : vector<8x1xf32> to vector<8x8xf32>
    %281 = arith.subf %277, %280 : vector<8x8xf32>
    %282 = math.exp %281 : vector<8x8xf32>
    %cst_127 = arith.constant dense<0.000000e+00> : vector<8xf32>
    %283 = vector.multi_reduction <add>, %282, %cst_127 [1] : vector<8x8xf32> to vector<8xf32>
    %284 = vector.shape_cast %283 : vector<8xf32> to vector<8x1xf32>
    %285 = tpu.reciprocal %284 {approx = true} : vector<8x1xf32> -> vector<8x1xf32>
    %286 = vector.broadcast %285 : vector<8x1xf32> to vector<8x8xf32>
    %287 = arith.mulf %282, %286 : vector<8x8xf32>
    %cst_128 = arith.constant dense<0.000000e+00> : vector<8x8xf32>
    %288 = tpu.matmul %287, %274, %cst_128 {dimension_numbers = #tpu.dot_dimension_numbers<[1], [0], [0], [1], [0, 0, 1, 1], [], []>} : vector<8x8xf32>, vector<8x8xf32>, vector<8x8xf32> -> vector<8x8xf32>
    %c0_129 = arith.constant 0 : index
    %c0_130 = arith.constant 0 : index
    %289 = vector.load %arg19[%c0_129, %c0_130] : memref<16x32xf32, #tpu.memory_space<vmem>>, vector<8x8xf32>
    tpu.vector_store %arg19[%c0_129, %c0_130], %288 {strides = array<i32>} : memref<16x32xf32, #tpu.memory_space<vmem>>, vector<8x8xf32>,
    %290 = vector.extract_strided_slice %267 {offsets = [0, 8], sizes = [8, 8], strides = [1, 1]} : vector<16x96xf32> to vector<8x8xf32>
    %cst_131 = arith.constant 0.353553385 : f32
    %291 = vector.broadcast %cst_131 : f32 to vector<8x8xf32>
    %292 = arith.mulf %290, %291 : vector<8x8xf32>
    %293 = vector.extract_strided_slice %267 {offsets = [0, 40], sizes = [8, 8], strides = [1, 1]} : vector<16x96xf32> to vector<8x8xf32>
    %294 = vector.extract_strided_slice %267 {offsets = [0, 72], sizes = [8, 8], strides = [1, 1]} : vector<16x96xf32> to vector<8x8xf32>
    %cst_132 = arith.constant dense<0.000000e+00> : vector<8x8xf32>
    %295 = tpu.matmul %292, %293, %cst_132 {dimension_numbers = #tpu.dot_dimension_numbers<[1], [1], [0], [0], [0, 0, 1, 0], [], []>} : vector<8x8xf32>, vector<8x8xf32>, vector<8x8xf32> -> vector<8x8xf32>
    %296 = vector.broadcast %269 : vector<1x8xf32> to vector<8x8xf32>
    %297 = arith.addf %295, %296 : vector<8x8xf32>
    %cst_133 = arith.constant dense<0xFF800000> : vector<8xf32>
    %298 = vector.multi_reduction <maximumf>, %297, %cst_133 [1] : vector<8x8xf32> to vector<8xf32>
    %299 = vector.shape_cast %298 : vector<8xf32> to vector<8x1xf32>
    %300 = vector.broadcast %299 : vector<8x1xf32> to vector<8x8xf32>
    %301 = arith.subf %297, %300 : vector<8x8xf32>
    %302 = math.exp %301 : vector<8x8xf32>
    %cst_134 = arith.constant dense<0.000000e+00> : vector<8xf32>
    %303 = vector.multi_reduction <add>, %302, %cst_134 [1] : vector<8x8xf32> to vector<8xf32>
    %304 = vector.shape_cast %303 : vector<8xf32> to vector<8x1xf32>
    %305 = tpu.reciprocal %304 {approx = true} : vector<8x1xf32> -> vector<8x1xf32>
    %306 = vector.broadcast %305 : vector<8x1xf32> to vector<8x8xf32>
    %307 = arith.mulf %302, %306 : vector<8x8xf32>
    %cst_135 = arith.constant dense<0.000000e+00> : vector<8x8xf32>
    %308 = tpu.matmul %307, %294, %cst_135 {dimension_numbers = #tpu.dot_dimension_numbers<[1], [0], [0], [1], [0, 0, 1, 1], [], []>} : vector<8x8xf32>, vector<8x8xf32>, vector<8x8xf32> -> vector<8x8xf32>
    %c0_136 = arith.constant 0 : index
    %c8_137 = arith.constant 8 : index
    %309 = vector.load %arg19[%c0_136, %c8_137] : memref<16x32xf32, #tpu.memory_space<vmem>>, vector<8x8xf32>
    tpu.vector_store %arg19[%c0_136, %c8_137], %308 {strides = array<i32>} : memref<16x32xf32, #tpu.memory_space<vmem>>, vector<8x8xf32>,
    %310 = vector.extract_strided_slice %267 {offsets = [0, 16], sizes = [8, 8], strides = [1, 1]} : vector<16x96xf32> to vector<8x8xf32>
    %cst_138 = arith.constant 0.353553385 : f32
    %311 = vector.broadcast %cst_138 : f32 to vector<8x8xf32>
    %312 = arith.mulf %310, %311 : vector<8x8xf32>
    %313 = vector.extract_strided_slice %267 {offsets = [0, 48], sizes = [8, 8], strides = [1, 1]} : vector<16x96xf32> to vector<8x8xf32>
    %314 = vector.extract_strided_slice %267 {offsets = [0, 80], sizes = [8, 8], strides = [1, 1]} : vector<16x96xf32> to vector<8x8xf32>
    %cst_139 = arith.constant dense<0.000000e+00> : vector<8x8xf32>
    %315 = tpu.matmul %312, %313, %cst_139 {dimension_numbers = #tpu.dot_dimension_numbers<[1], [1], [0], [0], [0, 0, 1, 0], [], []>} : vector<8x8xf32>, vector<8x8xf32>, vector<8x8xf32> -> vector<8x8xf32>
    %316 = vector.broadcast %269 : vector<1x8xf32> to vector<8x8xf32>
    %317 = arith.addf %315, %316 : vector<8x8xf32>
    %cst_140 = arith.constant dense<0xFF800000> : vector<8xf32>
    %318 = vector.multi_reduction <maximumf>, %317, %cst_140 [1] : vector<8x8xf32> to vector<8xf32>
    %319 = vector.shape_cast %318 : vector<8xf32> to vector<8x1xf32>
    %320 = vector.broadcast %319 : vector<8x1xf32> to vector<8x8xf32>
    %321 = arith.subf %317, %320 : vector<8x8xf32>
    %322 = math.exp %321 : vector<8x8xf32>
    %cst_141 = arith.constant dense<0.000000e+00> : vector<8xf32>
    %323 = vector.multi_reduction <add>, %322, %cst_141 [1] : vector<8x8xf32> to vector<8xf32>
    %324 = vector.shape_cast %323 : vector<8xf32> to vector<8x1xf32>
    %325 = tpu.reciprocal %324 {approx = true} : vector<8x1xf32> -> vector<8x1xf32>
    %326 = vector.broadcast %325 : vector<8x1xf32> to vector<8x8xf32>
    %327 = arith.mulf %322, %326 : vector<8x8xf32>
    %cst_142 = arith.constant dense<0.000000e+00> : vector<8x8xf32>
    %328 = tpu.matmul %327, %314, %cst_142 {dimension_numbers = #tpu.dot_dimension_numbers<[1], [0], [0], [1], [0, 0, 1, 1], [], []>} : vector<8x8xf32>, vector<8x8xf32>, vector<8x8xf32> -> vector<8x8xf32>
    %c0_143 = arith.constant 0 : index
    %c16_144 = arith.constant 16 : index
    %329 = vector.load %arg19[%c0_143, %c16_144] : memref<16x32xf32, #tpu.memory_space<vmem>>, vector<8x8xf32>
    tpu.vector_store %arg19[%c0_143, %c16_144], %328 {strides = array<i32>} : memref<16x32xf32, #tpu.memory_space<vmem>>, vector<8x8xf32>,
    %330 = vector.extract_strided_slice %267 {offsets = [0, 24], sizes = [8, 8], strides = [1, 1]} : vector<16x96xf32> to vector<8x8xf32>
    %cst_145 = arith.constant 0.353553385 : f32
    %331 = vector.broadcast %cst_145 : f32 to vector<8x8xf32>
    %332 = arith.mulf %330, %331 : vector<8x8xf32>
    %333 = vector.extract_strided_slice %267 {offsets = [0, 56], sizes = [8, 8], strides = [1, 1]} : vector<16x96xf32> to vector<8x8xf32>
    %334 = vector.extract_strided_slice %267 {offsets = [0, 88], sizes = [8, 8], strides = [1, 1]} : vector<16x96xf32> to vector<8x8xf32>
    %cst_146 = arith.constant dense<0.000000e+00> : vector<8x8xf32>
    %335 = tpu.matmul %332, %333, %cst_146 {dimension_numbers = #tpu.dot_dimension_numbers<[1], [1], [0], [0], [0, 0, 1, 0], [], []>} : vector<8x8xf32>, vector<8x8xf32>, vector<8x8xf32> -> vector<8x8xf32>
    %336 = vector.broadcast %269 : vector<1x8xf32> to vector<8x8xf32>
    %337 = arith.addf %335, %336 : vector<8x8xf32>
    %cst_147 = arith.constant dense<0xFF800000> : vector<8xf32>
    %338 = vector.multi_reduction <maximumf>, %337, %cst_147 [1] : vector<8x8xf32> to vector<8xf32>
    %339 = vector.shape_cast %338 : vector<8xf32> to vector<8x1xf32>
    %340 = vector.broadcast %339 : vector<8x1xf32> to vector<8x8xf32>
    %341 = arith.subf %337, %340 : vector<8x8xf32>
    %342 = math.exp %341 : vector<8x8xf32>
    %cst_148 = arith.constant dense<0.000000e+00> : vector<8xf32>
    %343 = vector.multi_reduction <add>, %342, %cst_148 [1] : vector<8x8xf32> to vector<8xf32>
    %344 = vector.shape_cast %343 : vector<8xf32> to vector<8x1xf32>
    %345 = tpu.reciprocal %344 {approx = true} : vector<8x1xf32> -> vector<8x1xf32>
    %346 = vector.broadcast %345 : vector<8x1xf32> to vector<8x8xf32>
    %347 = arith.mulf %342, %346 : vector<8x8xf32>
    %cst_149 = arith.constant dense<0.000000e+00> : vector<8x8xf32>
    %348 = tpu.matmul %347, %334, %cst_149 {dimension_numbers = #tpu.dot_dimension_numbers<[1], [0], [0], [1], [0, 0, 1, 1], [], []>} : vector<8x8xf32>, vector<8x8xf32>, vector<8x8xf32> -> vector<8x8xf32>
    %c0_150 = arith.constant 0 : index
    %c24_151 = arith.constant 24 : index
    %349 = vector.load %arg19[%c0_150, %c24_151] : memref<16x32xf32, #tpu.memory_space<vmem>>, vector<8x8xf32>
    tpu.vector_store %arg19[%c0_150, %c24_151], %348 {strides = array<i32>} : memref<16x32xf32, #tpu.memory_space<vmem>>, vector<8x8xf32>,
    %c1_152 = arith.constant 1 : index
    %c0_153 = arith.constant 0 : index
    %c0_154 = arith.constant 0 : index
    %350 = vector.load %arg2[%c1_152, %c0_153, %c0_154] : memref<2x1x8xf32, #tpu.memory_space<vmem>>, vector<1x1x8xf32>
    %351 = vector.shape_cast %350 : vector<1x1x8xf32> to vector<1x8xf32>
    %352 = vector.extract_strided_slice %267 {offsets = [8, 0], sizes = [8, 8], strides = [1, 1]} : vector<16x96xf32> to vector<8x8xf32>
    %cst_155 = arith.constant 0.353553385 : f32
    %353 = vector.broadcast %cst_155 : f32 to vector<8x8xf32>
    %354 = arith.mulf %352, %353 : vector<8x8xf32>
    %355 = vector.extract_strided_slice %267 {offsets = [8, 32], sizes = [8, 8], strides = [1, 1]} : vector<16x96xf32> to vector<8x8xf32>
    %356 = vector.extract_strided_slice %267 {offsets = [8, 64], sizes = [8, 8], strides = [1, 1]} : vector<16x96xf32> to vector<8x8xf32>
    %cst_156 = arith.constant dense<0.000000e+00> : vector<8x8xf32>
    %357 = tpu.matmul %354, %355, %cst_156 {dimension_numbers = #tpu.dot_dimension_numbers<[1], [1], [0], [0], [0, 0, 1, 0], [], []>} : vector<8x8xf32>, vector<8x8xf32>, vector<8x8xf32> -> vector<8x8xf32>
    %358 = vector.broadcast %351 : vector<1x8xf32> to vector<8x8xf32>
    %359 = arith.addf %357, %358 : vector<8x8xf32>
    %cst_157 = arith.constant dense<0xFF800000> : vector<8xf32>
    %360 = vector.multi_reduction <maximumf>, %359, %cst_157 [1] : vector<8x8xf32> to vector<8xf32>
    %361 = vector.shape_cast %360 : vector<8xf32> to vector<8x1xf32>
    %362 = vector.broadcast %361 : vector<8x1xf32> to vector<8x8xf32>
    %363 = arith.subf %359, %362 : vector<8x8xf32>
    %364 = math.exp %363 : vector<8x8xf32>
    %cst_158 = arith.constant dense<0.000000e+00> : vector<8xf32>
    %365 = vector.multi_reduction <add>, %364, %cst_158 [1] : vector<8x8xf32> to vector<8xf32>
    %366 = vector.shape_cast %365 : vector<8xf32> to vector<8x1xf32>
    %367 = tpu.reciprocal %366 {approx = true} : vector<8x1xf32> -> vector<8x1xf32>
    %368 = vector.broadcast %367 : vector<8x1xf32> to vector<8x8xf32>
    %369 = arith.mulf %364, %368 : vector<8x8xf32>
    %cst_159 = arith.constant dense<0.000000e+00> : vector<8x8xf32>
    %370 = tpu.matmul %369, %356, %cst_159 {dimension_numbers = #tpu.dot_dimension_numbers<[1], [0], [0], [1], [0, 0, 1, 1], [], []>} : vector<8x8xf32>, vector<8x8xf32>, vector<8x8xf32> -> vector<8x8xf32>
    %c8_160 = arith.constant 8 : index
    %c0_161 = arith.constant 0 : index
    %371 = vector.load %arg19[%c8_160, %c0_161] : memref<16x32xf32, #tpu.memory_space<vmem>>, vector<8x8xf32>
    tpu.vector_store %arg19[%c8_160, %c0_161], %370 {strides = array<i32>} : memref<16x32xf32, #tpu.memory_space<vmem>>, vector<8x8xf32>,
    %372 = vector.extract_strided_slice %267 {offsets = [8, 8], sizes = [8, 8], strides = [1, 1]} : vector<16x96xf32> to vector<8x8xf32>
    %cst_162 = arith.constant 0.353553385 : f32
    %373 = vector.broadcast %cst_162 : f32 to vector<8x8xf32>
    %374 = arith.mulf %372, %373 : vector<8x8xf32>
    %375 = vector.extract_strided_slice %267 {offsets = [8, 40], sizes = [8, 8], strides = [1, 1]} : vector<16x96xf32> to vector<8x8xf32>
    %376 = vector.extract_strided_slice %267 {offsets = [8, 72], sizes = [8, 8], strides = [1, 1]} : vector<16x96xf32> to vector<8x8xf32>
    %cst_163 = arith.constant dense<0.000000e+00> : vector<8x8xf32>
    %377 = tpu.matmul %374, %375, %cst_163 {dimension_numbers = #tpu.dot_dimension_numbers<[1], [1], [0], [0], [0, 0, 1, 0], [], []>} : vector<8x8xf32>, vector<8x8xf32>, vector<8x8xf32> -> vector<8x8xf32>
    %378 = vector.broadcast %351 : vector<1x8xf32> to vector<8x8xf32>
    %379 = arith.addf %377, %378 : vector<8x8xf32>
    %cst_164 = arith.constant dense<0xFF800000> : vector<8xf32>
    %380 = vector.multi_reduction <maximumf>, %379, %cst_164 [1] : vector<8x8xf32> to vector<8xf32>
    %381 = vector.shape_cast %380 : vector<8xf32> to vector<8x1xf32>
    %382 = vector.broadcast %381 : vector<8x1xf32> to vector<8x8xf32>
    %383 = arith.subf %379, %382 : vector<8x8xf32>
    %384 = math.exp %383 : vector<8x8xf32>
    %cst_165 = arith.constant dense<0.000000e+00> : vector<8xf32>
    %385 = vector.multi_reduction <add>, %384, %cst_165 [1] : vector<8x8xf32> to vector<8xf32>
    %386 = vector.shape_cast %385 : vector<8xf32> to vector<8x1xf32>
    %387 = tpu.reciprocal %386 {approx = true} : vector<8x1xf32> -> vector<8x1xf32>
    %388 = vector.broadcast %387 : vector<8x1xf32> to vector<8x8xf32>
    %389 = arith.mulf %384, %388 : vector<8x8xf32>
    %cst_166 = arith.constant dense<0.000000e+00> : vector<8x8xf32>
    %390 = tpu.matmul %389, %376, %cst_166 {dimension_numbers = #tpu.dot_dimension_numbers<[1], [0], [0], [1], [0, 0, 1, 1], [], []>} : vector<8x8xf32>, vector<8x8xf32>, vector<8x8xf32> -> vector<8x8xf32>
    %c8_167 = arith.constant 8 : index
    %c8_168 = arith.constant 8 : index
    %391 = vector.load %arg19[%c8_167, %c8_168] : memref<16x32xf32, #tpu.memory_space<vmem>>, vector<8x8xf32>
    tpu.vector_store %arg19[%c8_167, %c8_168], %390 {strides = array<i32>} : memref<16x32xf32, #tpu.memory_space<vmem>>, vector<8x8xf32>,
    %392 = vector.extract_strided_slice %267 {offsets = [8, 16], sizes = [8, 8], strides = [1, 1]} : vector<16x96xf32> to vector<8x8xf32>
    %cst_169 = arith.constant 0.353553385 : f32
    %393 = vector.broadcast %cst_169 : f32 to vector<8x8xf32>
    %394 = arith.mulf %392, %393 : vector<8x8xf32>
    %395 = vector.extract_strided_slice %267 {offsets = [8, 48], sizes = [8, 8], strides = [1, 1]} : vector<16x96xf32> to vector<8x8xf32>
    %396 = vector.extract_strided_slice %267 {offsets = [8, 80], sizes = [8, 8], strides = [1, 1]} : vector<16x96xf32> to vector<8x8xf32>
    %cst_170 = arith.constant dense<0.000000e+00> : vector<8x8xf32>
    %397 = tpu.matmul %394, %395, %cst_170 {dimension_numbers = #tpu.dot_dimension_numbers<[1], [1], [0], [0], [0, 0, 1, 0], [], []>} : vector<8x8xf32>, vector<8x8xf32>, vector<8x8xf32> -> vector<8x8xf32>
    %398 = vector.broadcast %351 : vector<1x8xf32> to vector<8x8xf32>
    %399 = arith.addf %397, %398 : vector<8x8xf32>
    %cst_171 = arith.constant dense<0xFF800000> : vector<8xf32>
    %400 = vector.multi_reduction <maximumf>, %399, %cst_171 [1] : vector<8x8xf32> to vector<8xf32>
    %401 = vector.shape_cast %400 : vector<8xf32> to vector<8x1xf32>
    %402 = vector.broadcast %401 : vector<8x1xf32> to vector<8x8xf32>
    %403 = arith.subf %399, %402 : vector<8x8xf32>
    %404 = math.exp %403 : vector<8x8xf32>
    %cst_172 = arith.constant dense<0.000000e+00> : vector<8xf32>
    %405 = vector.multi_reduction <add>, %404, %cst_172 [1] : vector<8x8xf32> to vector<8xf32>
    %406 = vector.shape_cast %405 : vector<8xf32> to vector<8x1xf32>
    %407 = tpu.reciprocal %406 {approx = true} : vector<8x1xf32> -> vector<8x1xf32>
    %408 = vector.broadcast %407 : vector<8x1xf32> to vector<8x8xf32>
    %409 = arith.mulf %404, %408 : vector<8x8xf32>
    %cst_173 = arith.constant dense<0.000000e+00> : vector<8x8xf32>
    %410 = tpu.matmul %409, %396, %cst_173 {dimension_numbers = #tpu.dot_dimension_numbers<[1], [0], [0], [1], [0, 0, 1, 1], [], []>} : vector<8x8xf32>, vector<8x8xf32>, vector<8x8xf32> -> vector<8x8xf32>
    %c8_174 = arith.constant 8 : index
    %c16_175 = arith.constant 16 : index
    %411 = vector.load %arg19[%c8_174, %c16_175] : memref<16x32xf32, #tpu.memory_space<vmem>>, vector<8x8xf32>
    tpu.vector_store %arg19[%c8_174, %c16_175], %410 {strides = array<i32>} : memref<16x32xf32, #tpu.memory_space<vmem>>, vector<8x8xf32>,
    %412 = vector.extract_strided_slice %267 {offsets = [8, 24], sizes = [8, 8], strides = [1, 1]} : vector<16x96xf32> to vector<8x8xf32>
    %cst_176 = arith.constant 0.353553385 : f32
    %413 = vector.broadcast %cst_176 : f32 to vector<8x8xf32>
    %414 = arith.mulf %412, %413 : vector<8x8xf32>
    %415 = vector.extract_strided_slice %267 {offsets = [8, 56], sizes = [8, 8], strides = [1, 1]} : vector<16x96xf32> to vector<8x8xf32>
    %416 = vector.extract_strided_slice %267 {offsets = [8, 88], sizes = [8, 8], strides = [1, 1]} : vector<16x96xf32> to vector<8x8xf32>
    %cst_177 = arith.constant dense<0.000000e+00> : vector<8x8xf32>
    %417 = tpu.matmul %414, %415, %cst_177 {dimension_numbers = #tpu.dot_dimension_numbers<[1], [1], [0], [0], [0, 0, 1, 0], [], []>} : vector<8x8xf32>, vector<8x8xf32>, vector<8x8xf32> -> vector<8x8xf32>
    %418 = vector.broadcast %351 : vector<1x8xf32> to vector<8x8xf32>
    %419 = arith.addf %417, %418 : vector<8x8xf32>
    %cst_178 = arith.constant dense<0xFF800000> : vector<8xf32>
    %420 = vector.multi_reduction <maximumf>, %419, %cst_178 [1] : vector<8x8xf32> to vector<8xf32>
    %421 = vector.shape_cast %420 : vector<8xf32> to vector<8x1xf32>
    %422 = vector.broadcast %421 : vector<8x1xf32> to vector<8x8xf32>
    %423 = arith.subf %419, %422 : vector<8x8xf32>
    %424 = math.exp %423 : vector<8x8xf32>
    %cst_179 = arith.constant dense<0.000000e+00> : vector<8xf32>
    %425 = vector.multi_reduction <add>, %424, %cst_179 [1] : vector<8x8xf32> to vector<8xf32>
    %426 = vector.shape_cast %425 : vector<8xf32> to vector<8x1xf32>
    %427 = tpu.reciprocal %426 {approx = true} : vector<8x1xf32> -> vector<8x1xf32>
    %428 = vector.broadcast %427 : vector<8x1xf32> to vector<8x8xf32>
    %429 = arith.mulf %424, %428 : vector<8x8xf32>
    %cst_180 = arith.constant dense<0.000000e+00> : vector<8x8xf32>
    %430 = tpu.matmul %429, %416, %cst_180 {dimension_numbers = #tpu.dot_dimension_numbers<[1], [0], [0], [1], [0, 0, 1, 1], [], []>} : vector<8x8xf32>, vector<8x8xf32>, vector<8x8xf32> -> vector<8x8xf32>
    %c8_181 = arith.constant 8 : index
    %c24_182 = arith.constant 24 : index
    %431 = vector.load %arg19[%c8_181, %c24_182] : memref<16x32xf32, #tpu.memory_space<vmem>>, vector<8x8xf32>
    tpu.vector_store %arg19[%c8_181, %c24_182], %430 {strides = array<i32>} : memref<16x32xf32, #tpu.memory_space<vmem>>, vector<8x8xf32>,
    %c0_183 = arith.constant 0 : index
    %c0_184 = arith.constant 0 : index
    %432 = vector.load %arg19[%c0_183, %c0_184] : memref<16x32xf32, #tpu.memory_space<vmem>>, vector<16x32xf32>
    %c1_185 = arith.constant 1 : index
    %c0_186 = arith.constant 0 : index
    %c0_187 = arith.constant 0 : index
    %433 = vector.load %arg6[%c1_185, %c0_186, %c0_187] : memref<2x32x32xf32, #tpu.memory_space<vmem>>, vector<1x32x32xf32>
    %434 = vector.shape_cast %433 : vector<1x32x32xf32> to vector<32x32xf32>
    %cst_188 = arith.constant dense<0.000000e+00> : vector<16x32xf32>
    %435 = tpu.matmul %432, %434, %cst_188 {dimension_numbers = #tpu.dot_dimension_numbers<[1], [0], [0], [1], [0, 0, 1, 1], [], []>} : vector<16x32xf32>, vector<32x32xf32>, vector<16x32xf32> -> vector<16x32xf32>
    %c1_189 = arith.constant 1 : index
    %c0_190 = arith.constant 0 : index
    %c0_191 = arith.constant 0 : index
    %436 = vector.load %arg7[%c1_189, %c0_190, %c0_191] : memref<2x1x32xf32, #tpu.memory_space<vmem>>, vector<1x1x32xf32>
    %437 = vector.shape_cast %436 : vector<1x1x32xf32> to vector<1x32xf32>
    %438 = vector.broadcast %437 : vector<1x32xf32> to vector<16x32xf32>
    %439 = arith.addf %435, %438 : vector<16x32xf32>
    %440 = arith.addf %260, %439 : vector<16x32xf32>
    %c1_192 = arith.constant 1 : index
    %c0_193 = arith.constant 0 : index
    %c0_194 = arith.constant 0 : index
    %441 = vector.load %arg8[%c1_192, %c0_193, %c0_194] : memref<2x1x32xf32, #tpu.memory_space<vmem>>, vector<1x1x32xf32>
    %442 = vector.shape_cast %441 : vector<1x1x32xf32> to vector<1x32xf32>
    %c1_195 = arith.constant 1 : index
    %c0_196 = arith.constant 0 : index
    %c0_197 = arith.constant 0 : index
    %443 = vector.load %arg9[%c1_195, %c0_196, %c0_197] : memref<2x1x32xf32, #tpu.memory_space<vmem>>, vector<1x1x32xf32>
    %444 = vector.shape_cast %443 : vector<1x1x32xf32> to vector<1x32xf32>
    %cst_198 = arith.constant dense<0.000000e+00> : vector<16xf32>
    %445 = vector.multi_reduction <add>, %440, %cst_198 [1] : vector<16x32xf32> to vector<16xf32>
    %446 = vector.shape_cast %445 : vector<16xf32> to vector<16x1xf32>
    %cst_199 = arith.constant 3.200000e+01 : f32
    %447 = vector.broadcast %cst_199 : f32 to vector<16x1xf32>
    %448 = arith.divf %446, %447 : vector<16x1xf32>
    %449 = vector.broadcast %448 : vector<16x1xf32> to vector<16x32xf32>
    %450 = arith.subf %440, %449 : vector<16x32xf32>
    %451 = arith.mulf %450, %450 : vector<16x32xf32>
    %cst_200 = arith.constant dense<0.000000e+00> : vector<16xf32>
    %452 = vector.multi_reduction <add>, %451, %cst_200 [1] : vector<16x32xf32> to vector<16xf32>
    %453 = vector.shape_cast %452 : vector<16xf32> to vector<16x1xf32>
    %cst_201 = arith.constant 3.200000e+01 : f32
    %454 = vector.broadcast %cst_201 : f32 to vector<16x1xf32>
    %455 = arith.divf %453, %454 : vector<16x1xf32>
    %456 = vector.broadcast %448 : vector<16x1xf32> to vector<16x32xf32>
    %457 = arith.subf %440, %456 : vector<16x32xf32>
    %cst_202 = arith.constant 9.99999974E-6 : f32
    %458 = vector.broadcast %cst_202 : f32 to vector<16x1xf32>
    %459 = arith.addf %455, %458 : vector<16x1xf32>
    %460 = math.rsqrt %459 : vector<16x1xf32>
    %461 = vector.broadcast %460 : vector<16x1xf32> to vector<16x32xf32>
    %462 = arith.mulf %457, %461 : vector<16x32xf32>
    %463 = vector.broadcast %442 : vector<1x32xf32> to vector<16x32xf32>
    %464 = arith.mulf %462, %463 : vector<16x32xf32>
    %465 = vector.broadcast %444 : vector<1x32xf32> to vector<16x32xf32>
    %466 = arith.addf %464, %465 : vector<16x32xf32>
    %c1_203 = arith.constant 1 : index
    %c0_204 = arith.constant 0 : index
    %c0_205 = arith.constant 0 : index
    %467 = vector.load %arg10[%c1_203, %c0_204, %c0_205] : memref<2x32x128xf32, #tpu.memory_space<vmem>>, vector<1x32x128xf32>
    %468 = vector.shape_cast %467 : vector<1x32x128xf32> to vector<32x128xf32>
    %cst_206 = arith.constant dense<0.000000e+00> : vector<16x128xf32>
    %469 = tpu.matmul %466, %468, %cst_206 {dimension_numbers = #tpu.dot_dimension_numbers<[1], [0], [0], [1], [0, 0, 1, 1], [], []>} : vector<16x32xf32>, vector<32x128xf32>, vector<16x128xf32> -> vector<16x128xf32>
    %c1_207 = arith.constant 1 : index
    %c0_208 = arith.constant 0 : index
    %c0_209 = arith.constant 0 : index
    %470 = vector.load %arg11[%c1_207, %c0_208, %c0_209] : memref<2x1x128xf32, #tpu.memory_space<vmem>>, vector<1x1x128xf32>
    %471 = vector.shape_cast %470 : vector<1x1x128xf32> to vector<1x128xf32>
    %472 = vector.broadcast %471 : vector<1x128xf32> to vector<16x128xf32>
    %473 = arith.addf %469, %472 : vector<16x128xf32>
    %474 = arith.mulf %473, %473 : vector<16x128xf32>
    %475 = arith.mulf %473, %474 : vector<16x128xf32>
    %cst_210 = arith.constant 4.471500e-02 : f32
    %476 = vector.broadcast %cst_210 : f32 to vector<16x128xf32>
    %477 = arith.mulf %476, %475 : vector<16x128xf32>
    %478 = arith.addf %473, %477 : vector<16x128xf32>
    %cst_211 = arith.constant 0.797884583 : f32
    %479 = vector.broadcast %cst_211 : f32 to vector<16x128xf32>
    %480 = arith.mulf %479, %478 : vector<16x128xf32>
    %481 = math.tanh %480 : vector<16x128xf32>
    %cst_212 = arith.constant 1.000000e+00 : f32
    %482 = vector.broadcast %cst_212 : f32 to vector<16x128xf32>
    %483 = arith.addf %482, %481 : vector<16x128xf32>
    %cst_213 = arith.constant 5.000000e-01 : f32
    %484 = vector.broadcast %cst_213 : f32 to vector<16x128xf32>
    %485 = arith.mulf %484, %483 : vector<16x128xf32>
    %486 = arith.mulf %473, %485 : vector<16x128xf32>
    %c1_214 = arith.constant 1 : index
    %c0_215 = arith.constant 0 : index
    %c0_216 = arith.constant 0 : index
    %487 = vector.load %arg12[%c1_214, %c0_215, %c0_216] : memref<2x128x32xf32, #tpu.memory_space<vmem>>, vector<1x128x32xf32>
    %488 = vector.shape_cast %487 : vector<1x128x32xf32> to vector<128x32xf32>
    %cst_217 = arith.constant dense<0.000000e+00> : vector<16x32xf32>
    %489 = tpu.matmul %486, %488, %cst_217 {dimension_numbers = #tpu.dot_dimension_numbers<[1], [0], [0], [1], [0, 0, 1, 1], [], []>} : vector<16x128xf32>, vector<128x32xf32>, vector<16x32xf32> -> vector<16x32xf32>
    %c1_218 = arith.constant 1 : index
    %c0_219 = arith.constant 0 : index
    %c0_220 = arith.constant 0 : index
    %490 = vector.load %arg13[%c1_218, %c0_219, %c0_220] : memref<2x1x32xf32, #tpu.memory_space<vmem>>, vector<1x1x32xf32>
    %491 = vector.shape_cast %490 : vector<1x1x32xf32> to vector<1x32xf32>
    %492 = vector.broadcast %491 : vector<1x32xf32> to vector<16x32xf32>
    %493 = arith.addf %489, %492 : vector<16x32xf32>
    %494 = arith.addf %466, %493 : vector<16x32xf32>
    %c1_221 = arith.constant 1 : index
    %c0_222 = arith.constant 0 : index
    %c0_223 = arith.constant 0 : index
    %495 = vector.load %arg14[%c1_221, %c0_222, %c0_223] : memref<2x1x32xf32, #tpu.memory_space<vmem>>, vector<1x1x32xf32>
    %496 = vector.shape_cast %495 : vector<1x1x32xf32> to vector<1x32xf32>
    %c1_224 = arith.constant 1 : index
    %c0_225 = arith.constant 0 : index
    %c0_226 = arith.constant 0 : index
    %497 = vector.load %arg15[%c1_224, %c0_225, %c0_226] : memref<2x1x32xf32, #tpu.memory_space<vmem>>, vector<1x1x32xf32>
    %498 = vector.shape_cast %497 : vector<1x1x32xf32> to vector<1x32xf32>
    %cst_227 = arith.constant dense<0.000000e+00> : vector<16xf32>
    %499 = vector.multi_reduction <add>, %494, %cst_227 [1] : vector<16x32xf32> to vector<16xf32>
    %500 = vector.shape_cast %499 : vector<16xf32> to vector<16x1xf32>
    %cst_228 = arith.constant 3.200000e+01 : f32
    %501 = vector.broadcast %cst_228 : f32 to vector<16x1xf32>
    %502 = arith.divf %500, %501 : vector<16x1xf32>
    %503 = vector.broadcast %502 : vector<16x1xf32> to vector<16x32xf32>
    %504 = arith.subf %494, %503 : vector<16x32xf32>
    %505 = arith.mulf %504, %504 : vector<16x32xf32>
    %cst_229 = arith.constant dense<0.000000e+00> : vector<16xf32>
    %506 = vector.multi_reduction <add>, %505, %cst_229 [1] : vector<16x32xf32> to vector<16xf32>
    %507 = vector.shape_cast %506 : vector<16xf32> to vector<16x1xf32>
    %cst_230 = arith.constant 3.200000e+01 : f32
    %508 = vector.broadcast %cst_230 : f32 to vector<16x1xf32>
    %509 = arith.divf %507, %508 : vector<16x1xf32>
    %510 = vector.broadcast %502 : vector<16x1xf32> to vector<16x32xf32>
    %511 = arith.subf %494, %510 : vector<16x32xf32>
    %cst_231 = arith.constant 9.99999974E-6 : f32
    %512 = vector.broadcast %cst_231 : f32 to vector<16x1xf32>
    %513 = arith.addf %509, %512 : vector<16x1xf32>
    %514 = math.rsqrt %513 : vector<16x1xf32>
    %515 = vector.broadcast %514 : vector<16x1xf32> to vector<16x32xf32>
    %516 = arith.mulf %511, %515 : vector<16x32xf32>
    %517 = vector.broadcast %496 : vector<1x32xf32> to vector<16x32xf32>
    %518 = arith.mulf %516, %517 : vector<16x32xf32>
    %519 = vector.broadcast %498 : vector<1x32xf32> to vector<16x32xf32>
    %520 = arith.addf %518, %519 : vector<16x32xf32>
    %c0_232 = arith.constant 0 : index
    %c0_233 = arith.constant 0 : index
    %521 = vector.load %arg3[%c0_232, %c0_233] : memref<16x1xf32, #tpu.memory_space<vmem>>, vector<16x1xf32>
    %522 = vector.broadcast %521 : vector<16x1xf32> to vector<16x32xf32>
    %523 = arith.mulf %520, %522 : vector<16x32xf32>
    %c0_234 = arith.constant 0 : index
    %c0_235 = arith.constant 0 : index
    %524 = vector.load %arg17[%c0_234, %c0_235] : memref<16x32xf32, #tpu.memory_space<vmem>>, vector<16x32xf32>
    tpu.vector_store %arg17[%c0_234, %c0_235], %523 {strides = array<i32>} : memref<16x32xf32, #tpu.memory_space<vmem>>, vector<16x32xf32>,
    %c0_236 = arith.constant 0 : index
    %c0_237 = arith.constant 0 : index
    %525 = vector.load %arg16[%c0_236, %c0_237] : memref<32x128xf32, #tpu.memory_space<vmem>>, vector<32x128xf32>
    %cst_238 = arith.constant dense<0.000000e+00> : vector<16x128xf32>
    %526 = tpu.matmul %523, %525, %cst_238 {dimension_numbers = #tpu.dot_dimension_numbers<[1], [0], [0], [1], [0, 0, 1, 1], [], []>} : vector<16x32xf32>, vector<32x128xf32>, vector<16x128xf32> -> vector<16x128xf32>
    %c0_239 = arith.constant 0 : index
    %c0_240 = arith.constant 0 : index
    %527 = vector.load %arg18[%c0_239, %c0_240] : memref<16x128xf32, #tpu.memory_space<vmem>>, vector<16x128xf32>
    tpu.vector_store %arg18[%c0_239, %c0_240], %526 {strides = array<i32>} : memref<16x128xf32, #tpu.memory_space<vmem>>, vector<16x128xf32>,
    return
  }
  func.func @transform_0(%arg0: i32) -> (i32, i32) {
    %c0_i32 = arith.constant 0 : i32
    %c0_i32_0 = arith.constant 0 : i32
    return %arg0, %c0_i32 : i32, i32
  }
  func.func @transform_1(%arg0: i32) -> (i32, i32, i32) {
    %c0_i32 = arith.constant 0 : i32
    %c0_i32_0 = arith.constant 0 : i32
    %c0_i32_1 = arith.constant 0 : i32
    return %arg0, %c0_i32, %c0_i32_0 : i32, i32, i32
  }
  func.func @transform_2(%arg0: i32) -> (i32, i32) {
    %c0_i32 = arith.constant 0 : i32
    %c0_i32_0 = arith.constant 0 : i32
    return %arg0, %c0_i32 : i32, i32
  }
  func.func @transform_3(%arg0: i32) -> (i32, i32, i32) {
    %c0_i32 = arith.constant 0 : i32
    %c0_i32_0 = arith.constant 0 : i32
    %c0_i32_1 = arith.constant 0 : i32
    %c0_i32_2 = arith.constant 0 : i32
    return %c0_i32, %c0_i32_0, %c0_i32_1 : i32, i32, i32
  }
  func.func @transform_4(%arg0: i32) -> (i32, i32, i32) {
    %c0_i32 = arith.constant 0 : i32
    %c0_i32_0 = arith.constant 0 : i32
    %c0_i32_1 = arith.constant 0 : i32
    %c0_i32_2 = arith.constant 0 : i32
    return %c0_i32, %c0_i32_0, %c0_i32_1 : i32, i32, i32
  }
  func.func @transform_5(%arg0: i32) -> (i32, i32, i32) {
    %c0_i32 = arith.constant 0 : i32
    %c0_i32_0 = arith.constant 0 : i32
    %c0_i32_1 = arith.constant 0 : i32
    %c0_i32_2 = arith.constant 0 : i32
    return %c0_i32, %c0_i32_0, %c0_i32_1 : i32, i32, i32
  }
  func.func @transform_6(%arg0: i32) -> (i32, i32, i32) {
    %c0_i32 = arith.constant 0 : i32
    %c0_i32_0 = arith.constant 0 : i32
    %c0_i32_1 = arith.constant 0 : i32
    %c0_i32_2 = arith.constant 0 : i32
    return %c0_i32, %c0_i32_0, %c0_i32_1 : i32, i32, i32
  }
  func.func @transform_7(%arg0: i32) -> (i32, i32, i32) {
    %c0_i32 = arith.constant 0 : i32
    %c0_i32_0 = arith.constant 0 : i32
    %c0_i32_1 = arith.constant 0 : i32
    %c0_i32_2 = arith.constant 0 : i32
    return %c0_i32, %c0_i32_0, %c0_i32_1 : i32, i32, i32
  }
  func.func @transform_8(%arg0: i32) -> (i32, i32, i32) {
    %c0_i32 = arith.constant 0 : i32
    %c0_i32_0 = arith.constant 0 : i32
    %c0_i32_1 = arith.constant 0 : i32
    %c0_i32_2 = arith.constant 0 : i32
    return %c0_i32, %c0_i32_0, %c0_i32_1 : i32, i32, i32
  }
  func.func @transform_9(%arg0: i32) -> (i32, i32, i32) {
    %c0_i32 = arith.constant 0 : i32
    %c0_i32_0 = arith.constant 0 : i32
    %c0_i32_1 = arith.constant 0 : i32
    %c0_i32_2 = arith.constant 0 : i32
    return %c0_i32, %c0_i32_0, %c0_i32_1 : i32, i32, i32
  }
  func.func @transform_10(%arg0: i32) -> (i32, i32, i32) {
    %c0_i32 = arith.constant 0 : i32
    %c0_i32_0 = arith.constant 0 : i32
    %c0_i32_1 = arith.constant 0 : i32
    %c0_i32_2 = arith.constant 0 : i32
    return %c0_i32, %c0_i32_0, %c0_i32_1 : i32, i32, i32
  }
  func.func @transform_11(%arg0: i32) -> (i32, i32, i32) {
    %c0_i32 = arith.constant 0 : i32
    %c0_i32_0 = arith.constant 0 : i32
    %c0_i32_1 = arith.constant 0 : i32
    %c0_i32_2 = arith.constant 0 : i32
    return %c0_i32, %c0_i32_0, %c0_i32_1 : i32, i32, i32
  }
  func.func @transform_12(%arg0: i32) -> (i32, i32, i32) {
    %c0_i32 = arith.constant 0 : i32
    %c0_i32_0 = arith.constant 0 : i32
    %c0_i32_1 = arith.constant 0 : i32
    %c0_i32_2 = arith.constant 0 : i32
    return %c0_i32, %c0_i32_0, %c0_i32_1 : i32, i32, i32
  }
  func.func @transform_13(%arg0: i32) -> (i32, i32, i32) {
    %c0_i32 = arith.constant 0 : i32
    %c0_i32_0 = arith.constant 0 : i32
    %c0_i32_1 = arith.constant 0 : i32
    %c0_i32_2 = arith.constant 0 : i32
    return %c0_i32, %c0_i32_0, %c0_i32_1 : i32, i32, i32
  }
  func.func @transform_14(%arg0: i32) -> (i32, i32, i32) {
    %c0_i32 = arith.constant 0 : i32
    %c0_i32_0 = arith.constant 0 : i32
    %c0_i32_1 = arith.constant 0 : i32
    %c0_i32_2 = arith.constant 0 : i32
    return %c0_i32, %c0_i32_0, %c0_i32_1 : i32, i32, i32
  }
  func.func @transform_15(%arg0: i32) -> (i32, i32) {
    %c0_i32 = arith.constant 0 : i32
    %c0_i32_0 = arith.constant 0 : i32
    %c0_i32_1 = arith.constant 0 : i32
    return %c0_i32, %c0_i32_0 : i32, i32
  }
  func.func @transform_16(%arg0: i32) -> (i32, i32) {
    %c0_i32 = arith.constant 0 : i32
    %c0_i32_0 = arith.constant 0 : i32
    return %arg0, %c0_i32 : i32, i32
  }
  func.func @transform_17(%arg0: i32) -> (i32, i32) {
    %c0_i32 = arith.constant 0 : i32
    %c0_i32_0 = arith.constant 0 : i32
    return %arg0, %c0_i32 : i32, i32
  }
}

</mosaic_0001>

<llo_original>
// kernel: transformer_model_forward.1
$region0: #{transformer_model_forward.1}
  #allocation0 [shape = 'u32[]', space=smem, size = 0x4, offset = 0x4, fixed_abs, tag = 'smem constant byte address 0x4 - core index']
  #allocation1 [shape = 'u32[72,128]{1,0:T(1,128)}', space=vmem, size = 0x9000, scoped, tag = 'internal scratch']
  #allocation2 [shape = 'f32[16,32]{1,0:T(8,128)}', space=vmem, size = 0x2000, scoped, tag = 'scratch operand']
  %s0 = inlined_call_operand.vmem [shape: f32[32,32], index: 0, kind: input, shape index: {}]
  %s1 = inlined_call_operand.vmem [shape: f32[4,1,8], index: 1, kind: input, shape index: {}]
  %s2 = inlined_call_operand.vmem [shape: f32[32,1], index: 2, kind: input, shape index: {}]
  %s3 = inlined_call_operand.vmem [shape: f32[2,32,96], index: 3, kind: input, shape index: {}]
  %s4 = inlined_call_operand.vmem [shape: f32[2,1,96], index: 4, kind: input, shape index: {}]
  %s5 = inlined_call_operand.vmem [shape: f32[2,32,32], index: 5, kind: input, shape index: {}]
  %s6 = inlined_call_operand.vmem [shape: f32[2,1,32], index: 6, kind: input, shape index: {}, may-alias: {6,8,12,14}]
  %s7 = inlined_call_operand.vmem [shape: f32[2,1,32], index: 7, kind: input, shape index: {}, may-alias: {7,13}]
  %s8 = inlined_call_operand.vmem [shape: f32[2,1,32], index: 8, kind: input, shape index: {}, may-alias: {6,8,12,14}]
  %s9 = inlined_call_operand.vmem [shape: f32[2,32,128], index: 9, kind: input, shape index: {}]
  %s10 = inlined_call_operand.vmem [shape: f32[2,1,128], index: 10, kind: input, shape index: {}]
  %s11 = inlined_call_operand.vmem [shape: f32[2,128,32], index: 11, kind: input, shape index: {}]
  %s12 = inlined_call_operand.vmem [shape: f32[2,1,32], index: 12, kind: input, shape index: {}, may-alias: {6,8,12,14}]
  %s13 = inlined_call_operand.vmem [shape: f32[2,1,32], index: 13, kind: input, shape index: {}, may-alias: {7,13}]
  %s14 = inlined_call_operand.vmem [shape: f32[2,1,32], index: 14, kind: input, shape index: {}, may-alias: {6,8,12,14}]
  %s15 = inlined_call_operand.vmem [shape: f32[32,128], index: 15, kind: input, shape index: {}]
  %s16 = inlined_call_operand.vmem [shape: f32[32,32], index: 16, kind: output, shape index: {0}]
  %s17 = inlined_call_operand.vmem [shape: f32[32,128], index: 17, kind: output, shape index: {1}]
  %18 = xla_tuple %s16, %s17
  %s19 = sld [smem:[#allocation0]]
  $region105: #{transformer_model_forward.1} parent=0
    _
  %s21 = ssub.s32 1, %s19
  %s22 = scalar_select 0, %s21, %s19
  loop: start=0, step=1, limit=4
  $region2: #{transformer_model_forward.1} parent=0 // loop_pre_header
    _
  $region3: #{transformer_model_forward.1} parent=0 // loop_header
    %s24 = sphi 0, %s28
    %p25 = scmp.ge.s32.totalorder %s24, 4
    %s34 = sphi 0, %s36
    %s37 = sphi 0, %s34
    %s38 = sphi 0, %s37
    %s54 = sphi 0, %s38
    %s60 = sphi 0, %s62
    %s63 = sphi 0, %s60
    %s64 = sphi 0, %s63
    %s80 = sphi 0, %s64
    %s86 = sphi 0, %s88
    %s89 = sphi 0, %s86
    %s90 = sphi 0, %s89
    %s106 = sphi 0, %s90
    %s110 = sphi 0, %s110
    %s112 = sphi 0, %s110
    %s113 = sphi 0, %s112
    %s127 = sphi 0, %s113
    %s131 = sphi 0, %s131
    %s133 = sphi 0, %s131
    %s134 = sphi 0, %s133
    %s148 = sphi 0, %s134
    %s152 = sphi 0, %s152
    %s154 = sphi 0, %s152
    %s155 = sphi 0, %s154
    %s169 = sphi 0, %s155
    %s173 = sphi 0, %s173
    %s175 = sphi 0, %s173
    %s176 = sphi 0, %s175
    %s190 = sphi 0, %s176
    %s194 = sphi 0, %s194
    %s196 = sphi 0, %s194
    %s197 = sphi 0, %s196
    %s211 = sphi 0, %s197
    %s215 = sphi 0, %s215
    %s217 = sphi 0, %s215
    %s218 = sphi 0, %s217
    %s232 = sphi 0, %s218
    %s236 = sphi 0, %s236
    %s238 = sphi 0, %s236
    %s239 = sphi 0, %s238
    %s253 = sphi 0, %s239
    %s257 = sphi 0, %s257
    %s259 = sphi 0, %s257
    %s260 = sphi 0, %s259
    %s274 = sphi 0, %s260
    %s278 = sphi 0, %s278
    %s280 = sphi 0, %s278
    %s281 = sphi 0, %s280
    %s295 = sphi 0, %s281
    %s299 = sphi 0, %s299
    %s301 = sphi 0, %s299
    %s302 = sphi 0, %s301
    %s316 = sphi 0, %s302
    %s320 = sphi 0, %s320
    %s322 = sphi 0, %s320
    %s323 = sphi 0, %s322
    %s337 = sphi 0, %s323
    %s341 = sphi 0, %s341
    %s343 = sphi 0, %s341
    %s344 = sphi 0, %s343
    %s358 = sphi 0, %s344
    %s362 = sphi 0, %s362
    %s364 = sphi 0, %s362
    %s365 = sphi 0, %s364
    %s379 = sphi 0, %s365
    %s385 = sphi 0, %s387
    %s388 = sphi 0, %s385
    %s389 = sphi 0, %s388
    %s405 = sphi 0, %s389
    %s411 = sphi 0, %s413
    %s414 = sphi 0, %s411
    %s415 = sphi 0, %s414
    %s431 = sphi 0, %s415
  $region4: #{transformer_model_forward.1} parent=0 // loop_header_branch
    %27 = sbr.rel (%p25) target = $region8
  $region5: #{transformer_model_forward.1} parent=0 // loop_body
    %s29 = ssub.s32 %s24, 1
    %s30 = ssub.s32 %s24, 2
    %s31 = sadd.s32 %s24, 1
    %s32 = ssub.s32 %s24, %s31
    %p33 = scmp.eq.s32.totalorder %s32, 0
    %s35 = sadd.s32 %s34, 1
    %s36 = scalar_select %p33, %s34, %s35
    %p39 = pneg %p33
    %p40 = scmp.eq.s32.totalorder %s24, 1
    %p41 = por %p39, %p40
    %p42 = scmp.ne.s32.totalorder %s34, %s37
    %p43 = scmp.eq.s32.totalorder %s24, 0
    %p44 = por %p42, %p43
    %p45 = scmp.ne.s32.totalorder %s34, %s37
    %p46 = scmp.eq.s32.totalorder %s29, 1
    %p47 = por %p45, %p46
    %p48 = scmp.ne.s32.totalorder %s37, %s38
    %p49 = scmp.eq.s32.totalorder %s29, 0
    %p50 = por %p48, %p49
    %p51 = scmp.ne.s32.totalorder %s37, %s38
    %p52 = scmp.eq.s32.totalorder %s30, 1
    %p53 = por %p51, %p52
    %p55 = scmp.ne.s32.totalorder %s38, %s54
    %p56 = scmp.eq.s32.totalorder %s30, 0
    %p57 = por %p55, %p56
    %s58 = ssub.s32 %s24, %s31
    %p59 = scmp.eq.s32.totalorder %s58, 0
    %s61 = sadd.s32 %s60, 1
    %s62 = scalar_select %p59, %s60, %s61
    %p65 = pneg %p59
    %p66 = scmp.eq.s32.totalorder %s24, 1
    %p67 = por %p65, %p66
    %p68 = scmp.ne.s32.totalorder %s60, %s63
    %p69 = scmp.eq.s32.totalorder %s24, 0
    %p70 = por %p68, %p69
    %p71 = scmp.ne.s32.totalorder %s60, %s63
    %p72 = scmp.eq.s32.totalorder %s29, 1
    %p73 = por %p71, %p72
    %p74 = scmp.ne.s32.totalorder %s63, %s64
    %p75 = scmp.eq.s32.totalorder %s29, 0
    %p76 = por %p74, %p75
    %p77 = scmp.ne.s32.totalorder %s63, %s64
    %p78 = scmp.eq.s32.totalorder %s30, 1
    %p79 = por %p77, %p78
    %p81 = scmp.ne.s32.totalorder %s64, %s80
    %p82 = scmp.eq.s32.totalorder %s30, 0
    %p83 = por %p81, %p82
    %s84 = ssub.s32 %s24, %s31
    %p85 = scmp.eq.s32.totalorder %s84, 0
    %s87 = sadd.s32 %s86, 1
    %s88 = scalar_select %p85, %s86, %s87
    %p91 = pneg %p85
    %p92 = scmp.eq.s32.totalorder %s24, 1
    %p93 = por %p91, %p92
    %p94 = scmp.ne.s32.totalorder %s86, %s89
    %p95 = scmp.eq.s32.totalorder %s24, 0
    %p96 = por %p94, %p95
    %p97 = scmp.ne.s32.totalorder %s86, %s89
    %p98 = scmp.eq.s32.totalorder %s29, 1
    %p99 = por %p97, %p98
    %p100 = scmp.ne.s32.totalorder %s89, %s90
    %p101 = scmp.eq.s32.totalorder %s29, 0
    %p102 = por %p100, %p101
    %p103 = scmp.ne.s32.totalorder %s89, %s90
    %p104 = scmp.eq.s32.totalorder %s30, 1
    %p105 = por %p103, %p104
    %p107 = scmp.ne.s32.totalorder %s90, %s106
    %p108 = scmp.eq.s32.totalorder %s30, 0
    %p109 = por %p107, %p108
    %s111 = sadd.s32 %s110, 1
    %p114 = scmp.eq.s32.totalorder %s24, 1
    %p115 = scmp.ne.s32.totalorder %s110, %s112
    %p116 = scmp.eq.s32.totalorder %s24, 0
    %p117 = por %p115, %p116
    %p118 = scmp.ne.s32.totalorder %s110, %s112
    %p119 = scmp.eq.s32.totalorder %s29, 1
    %p120 = por %p118, %p119
    %p121 = scmp.ne.s32.totalorder %s112, %s113
    %p122 = scmp.eq.s32.totalorder %s29, 0
    %p123 = por %p121, %p122
    %p124 = scmp.ne.s32.totalorder %s112, %s113
    %p125 = scmp.eq.s32.totalorder %s30, 1
    %p126 = por %p124, %p125
    %p128 = scmp.ne.s32.totalorder %s113, %s127
    %p129 = scmp.eq.s32.totalorder %s30, 0
    %p130 = por %p128, %p129
    %s132 = sadd.s32 %s131, 1
    %p135 = scmp.eq.s32.totalorder %s24, 1
    %p136 = scmp.ne.s32.totalorder %s131, %s133
    %p137 = scmp.eq.s32.totalorder %s24, 0
    %p138 = por %p136, %p137
    %p139 = scmp.ne.s32.totalorder %s131, %s133
    %p140 = scmp.eq.s32.totalorder %s29, 1
    %p141 = por %p139, %p140
    %p142 = scmp.ne.s32.totalorder %s133, %s134
    %p143 = scmp.eq.s32.totalorder %s29, 0
    %p144 = por %p142, %p143
    %p145 = scmp.ne.s32.totalorder %s133, %s134
    %p146 = scmp.eq.s32.totalorder %s30, 1
    %p147 = por %p145, %p146
    %p149 = scmp.ne.s32.totalorder %s134, %s148
    %p150 = scmp.eq.s32.totalorder %s30, 0
    %p151 = por %p149, %p150
    %s153 = sadd.s32 %s152, 1
    %p156 = scmp.eq.s32.totalorder %s24, 1
    %p157 = scmp.ne.s32.totalorder %s152, %s154
    %p158 = scmp.eq.s32.totalorder %s24, 0
    %p159 = por %p157, %p158
    %p160 = scmp.ne.s32.totalorder %s152, %s154
    %p161 = scmp.eq.s32.totalorder %s29, 1
    %p162 = por %p160, %p161
    %p163 = scmp.ne.s32.totalorder %s154, %s155
    %p164 = scmp.eq.s32.totalorder %s29, 0
    %p165 = por %p163, %p164
    %p166 = scmp.ne.s32.totalorder %s154, %s155
    %p167 = scmp.eq.s32.totalorder %s30, 1
    %p168 = por %p166, %p167
    %p170 = scmp.ne.s32.totalorder %s155, %s169
    %p171 = scmp.eq.s32.totalorder %s30, 0
    %p172 = por %p170, %p171
    %s174 = sadd.s32 %s173, 1
    %p177 = scmp.eq.s32.totalorder %s24, 1
    %p178 = scmp.ne.s32.totalorder %s173, %s175
    %p179 = scmp.eq.s32.totalorder %s24, 0
    %p180 = por %p178, %p179
    %p181 = scmp.ne.s32.totalorder %s173, %s175
    %p182 = scmp.eq.s32.totalorder %s29, 1
    %p183 = por %p181, %p182
    %p184 = scmp.ne.s32.totalorder %s175, %s176
    %p185 = scmp.eq.s32.totalorder %s29, 0
    %p186 = por %p184, %p185
    %p187 = scmp.ne.s32.totalorder %s175, %s176
    %p188 = scmp.eq.s32.totalorder %s30, 1
    %p189 = por %p187, %p188
    %p191 = scmp.ne.s32.totalorder %s176, %s190
    %p192 = scmp.eq.s32.totalorder %s30, 0
    %p193 = por %p191, %p192
    %s195 = sadd.s32 %s194, 1
    %p198 = scmp.eq.s32.totalorder %s24, 1
    %p199 = scmp.ne.s32.totalorder %s194, %s196
    %p200 = scmp.eq.s32.totalorder %s24, 0
    %p201 = por %p199, %p200
    %p202 = scmp.ne.s32.totalorder %s194, %s196
    %p203 = scmp.eq.s32.totalorder %s29, 1
    %p204 = por %p202, %p203
    %p205 = scmp.ne.s32.totalorder %s196, %s197
    %p206 = scmp.eq.s32.totalorder %s29, 0
    %p207 = por %p205, %p206
    %p208 = scmp.ne.s32.totalorder %s196, %s197
    %p209 = scmp.eq.s32.totalorder %s30, 1
    %p210 = por %p208, %p209
    %p212 = scmp.ne.s32.totalorder %s197, %s211
    %p213 = scmp.eq.s32.totalorder %s30, 0
    %p214 = por %p212, %p213
    %s216 = sadd.s32 %s215, 1
    %p219 = scmp.eq.s32.totalorder %s24, 1
    %p220 = scmp.ne.s32.totalorder %s215, %s217
    %p221 = scmp.eq.s32.totalorder %s24, 0
    %p222 = por %p220, %p221
    %p223 = scmp.ne.s32.totalorder %s215, %s217
    %p224 = scmp.eq.s32.totalorder %s29, 1
    %p225 = por %p223, %p224
    %p226 = scmp.ne.s32.totalorder %s217, %s218
    %p227 = scmp.eq.s32.totalorder %s29, 0
    %p228 = por %p226, %p227
    %p229 = scmp.ne.s32.totalorder %s217, %s218
    %p230 = scmp.eq.s32.totalorder %s30, 1
    %p231 = por %p229, %p230
    %p233 = scmp.ne.s32.totalorder %s218, %s232
    %p234 = scmp.eq.s32.totalorder %s30, 0
    %p235 = por %p233, %p234
    %s237 = sadd.s32 %s236, 1
    %p240 = scmp.eq.s32.totalorder %s24, 1
    %p241 = scmp.ne.s32.totalorder %s236, %s238
    %p242 = scmp.eq.s32.totalorder %s24, 0
    %p243 = por %p241, %p242
    %p244 = scmp.ne.s32.totalorder %s236, %s238
    %p245 = scmp.eq.s32.totalorder %s29, 1
    %p246 = por %p244, %p245
    %p247 = scmp.ne.s32.totalorder %s238, %s239
    %p248 = scmp.eq.s32.totalorder %s29, 0
    %p249 = por %p247, %p248
    %p250 = scmp.ne.s32.totalorder %s238, %s239
    %p251 = scmp.eq.s32.totalorder %s30, 1
    %p252 = por %p250, %p251
    %p254 = scmp.ne.s32.totalorder %s239, %s253
    %p255 = scmp.eq.s32.totalorder %s30, 0
    %p256 = por %p254, %p255
    %s258 = sadd.s32 %s257, 1
    %p261 = scmp.eq.s32.totalorder %s24, 1
    %p262 = scmp.ne.s32.totalorder %s257, %s259
    %p263 = scmp.eq.s32.totalorder %s24, 0
    %p264 = por %p262, %p263
    %p265 = scmp.ne.s32.totalorder %s257, %s259
    %p266 = scmp.eq.s32.totalorder %s29, 1
    %p267 = por %p265, %p266
    %p268 = scmp.ne.s32.totalorder %s259, %s260
    %p269 = scmp.eq.s32.totalorder %s29, 0
    %p270 = por %p268, %p269
    %p271 = scmp.ne.s32.totalorder %s259, %s260
    %p272 = scmp.eq.s32.totalorder %s30, 1
    %p273 = por %p271, %p272
    %p275 = scmp.ne.s32.totalorder %s260, %s274
    %p276 = scmp.eq.s32.totalorder %s30, 0
    %p277 = por %p275, %p276
    %s279 = sadd.s32 %s278, 1
    %p282 = scmp.eq.s32.totalorder %s24, 1
    %p283 = scmp.ne.s32.totalorder %s278, %s280
    %p284 = scmp.eq.s32.totalorder %s24, 0
    %p285 = por %p283, %p284
    %p286 = scmp.ne.s32.totalorder %s278, %s280
    %p287 = scmp.eq.s32.totalorder %s29, 1
    %p288 = por %p286, %p287
    %p289 = scmp.ne.s32.totalorder %s280, %s281
    %p290 = scmp.eq.s32.totalorder %s29, 0
    %p291 = por %p289, %p290
    %p292 = scmp.ne.s32.totalorder %s280, %s281
    %p293 = scmp.eq.s32.totalorder %s30, 1
    %p294 = por %p292, %p293
    %p296 = scmp.ne.s32.totalorder %s281, %s295
    %p297 = scmp.eq.s32.totalorder %s30, 0
    %p298 = por %p296, %p297
    %s300 = sadd.s32 %s299, 1
    %p303 = scmp.eq.s32.totalorder %s24, 1
    %p304 = scmp.ne.s32.totalorder %s299, %s301
    %p305 = scmp.eq.s32.totalorder %s24, 0
    %p306 = por %p304, %p305
    %p307 = scmp.ne.s32.totalorder %s299, %s301
    %p308 = scmp.eq.s32.totalorder %s29, 1
    %p309 = por %p307, %p308
    %p310 = scmp.ne.s32.totalorder %s301, %s302
    %p311 = scmp.eq.s32.totalorder %s29, 0
    %p312 = por %p310, %p311
    %p313 = scmp.ne.s32.totalorder %s301, %s302
    %p314 = scmp.eq.s32.totalorder %s30, 1
    %p315 = por %p313, %p314
    %p317 = scmp.ne.s32.totalorder %s302, %s316
    %p318 = scmp.eq.s32.totalorder %s30, 0
    %p319 = por %p317, %p318
    %s321 = sadd.s32 %s320, 1
    %p324 = scmp.eq.s32.totalorder %s24, 1
    %p325 = scmp.ne.s32.totalorder %s320, %s322
    %p326 = scmp.eq.s32.totalorder %s24, 0
    %p327 = por %p325, %p326
    %p328 = scmp.ne.s32.totalorder %s320, %s322
    %p329 = scmp.eq.s32.totalorder %s29, 1
    %p330 = por %p328, %p329
    %p331 = scmp.ne.s32.totalorder %s322, %s323
    %p332 = scmp.eq.s32.totalorder %s29, 0
    %p333 = por %p331, %p332
    %p334 = scmp.ne.s32.totalorder %s322, %s323
    %p335 = scmp.eq.s32.totalorder %s30, 1
    %p336 = por %p334, %p335
    %p338 = scmp.ne.s32.totalorder %s323, %s337
    %p339 = scmp.eq.s32.totalorder %s30, 0
    %p340 = por %p338, %p339
    %s342 = sadd.s32 %s341, 1
    %p345 = scmp.eq.s32.totalorder %s24, 1
    %p346 = scmp.ne.s32.totalorder %s341, %s343
    %p347 = scmp.eq.s32.totalorder %s24, 0
    %p348 = por %p346, %p347
    %p349 = scmp.ne.s32.totalorder %s341, %s343
    %p350 = scmp.eq.s32.totalorder %s29, 1
    %p351 = por %p349, %p350
    %p352 = scmp.ne.s32.totalorder %s343, %s344
    %p353 = scmp.eq.s32.totalorder %s29, 0
    %p354 = por %p352, %p353
    %p355 = scmp.ne.s32.totalorder %s343, %s344
    %p356 = scmp.eq.s32.totalorder %s30, 1
    %p357 = por %p355, %p356
    %p359 = scmp.ne.s32.totalorder %s344, %s358
    %p360 = scmp.eq.s32.totalorder %s30, 0
    %p361 = por %p359, %p360
    %s363 = sadd.s32 %s362, 1
    %p366 = scmp.eq.s32.totalorder %s24, 1
    %p367 = scmp.ne.s32.totalorder %s362, %s364
    %p368 = scmp.eq.s32.totalorder %s24, 0
    %p369 = por %p367, %p368
    %p370 = scmp.ne.s32.totalorder %s362, %s364
    %p371 = scmp.eq.s32.totalorder %s29, 1
    %p372 = por %p370, %p371
    %p373 = scmp.ne.s32.totalorder %s364, %s365
    %p374 = scmp.eq.s32.totalorder %s29, 0
    %p375 = por %p373, %p374
    %p376 = scmp.ne.s32.totalorder %s364, %s365
    %p377 = scmp.eq.s32.totalorder %s30, 1
    %p378 = por %p376, %p377
    %p380 = scmp.ne.s32.totalorder %s365, %s379
    %p381 = scmp.eq.s32.totalorder %s30, 0
    %p382 = por %p380, %p381
    %s383 = ssub.s32 %s24, %s31
    %p384 = scmp.eq.s32.totalorder %s383, 0
    %s386 = sadd.s32 %s385, 1
    %s387 = scalar_select %p384, %s385, %s386
    %p390 = pneg %p384
    %p391 = scmp.eq.s32.totalorder %s24, 1
    %p392 = por %p390, %p391
    %p393 = scmp.ne.s32.totalorder %s385, %s388
    %p394 = scmp.eq.s32.totalorder %s24, 0
    %p395 = por %p393, %p394
    %p396 = scmp.ne.s32.totalorder %s385, %s388
    %p397 = scmp.eq.s32.totalorder %s29, 1
    %p398 = por %p396, %p397
    %p399 = scmp.ne.s32.totalorder %s388, %s389
    %p400 = scmp.eq.s32.totalorder %s29, 0
    %p401 = por %p399, %p400
    %p402 = scmp.ne.s32.totalorder %s388, %s389
    %p403 = scmp.eq.s32.totalorder %s30, 1
    %p404 = por %p402, %p403
    %p406 = scmp.ne.s32.totalorder %s389, %s405
    %p407 = scmp.eq.s32.totalorder %s30, 0
    %p408 = por %p406, %p407
    %s409 = ssub.s32 %s24, %s31
    %p410 = scmp.eq.s32.totalorder %s409, 0
    %s412 = sadd.s32 %s411, 1
    %s413 = scalar_select %p410, %s411, %s412
    %p416 = pneg %p410
    %p417 = scmp.eq.s32.totalorder %s24, 1
    %p418 = por %p416, %p417
    %p419 = scmp.ne.s32.totalorder %s411, %s414
    %p420 = scmp.eq.s32.totalorder %s24, 0
    %p421 = por %p419, %p420
    %p422 = scmp.ne.s32.totalorder %s411, %s414
    %p423 = scmp.eq.s32.totalorder %s29, 1
    %p424 = por %p422, %p423
    %p425 = scmp.ne.s32.totalorder %s414, %s415
    %p426 = scmp.eq.s32.totalorder %s29, 0
    %p427 = por %p425, %p426
    %p428 = scmp.ne.s32.totalorder %s414, %s415
    %p429 = scmp.eq.s32.totalorder %s30, 1
    %p430 = por %p428, %p429
    %p432 = scmp.ne.s32.totalorder %s415, %s431
    %p433 = scmp.eq.s32.totalorder %s30, 0
    %p434 = por %p432, %p433
    %p435 = scmp.le.s32.totalorder 1, %s24
    %p436 = scmp.lt.s32.totalorder %s24, 3
    %p437 = pnand %p435, %p436
    %p438 = pneg %p437
    // Predicated region
    $region9: #{transformer_model_forward.1} parent=5 // pred_check
      _
    $region10: #{transformer_model_forward.1} parent=5 // pred_check_branch
      %440 = sbr.rel (%p437) target = $region12
    $region11: #{transformer_model_forward.1} parent=5 // pred_region
      %s441 = ssub.s32 %s24, 1
      // Predicated region
      $region13: #{transformer_model_forward.1} parent=11 // pred_check
        %p442 = pneg %p123
      $region14: #{transformer_model_forward.1} parent=11 // pred_check_branch
        %444 = sbr.rel (%p442) target = $region16
      $region15: #{transformer_model_forward.1} parent=11 // pred_region
        _
      $region16: #{transformer_model_forward.1} parent=11 // pred_fallthru
        _
      // Predicated region
      $region17: #{transformer_model_forward.1} parent=11 // pred_check
        %p445 = pneg %p144
      $region18: #{transformer_model_forward.1} parent=11 // pred_check_branch
        %447 = sbr.rel (%p445) target = $region20
      $region19: #{transformer_model_forward.1} parent=11 // pred_region
        _
      $region20: #{transformer_model_forward.1} parent=11 // pred_fallthru
        _
      // Predicated region
      $region21: #{transformer_model_forward.1} parent=11 // pred_check
        %p448 = pneg %p165
      $region22: #{transformer_model_forward.1} parent=11 // pred_check_branch
        %450 = sbr.rel (%p448) target = $region24
      $region23: #{transformer_model_forward.1} parent=11 // pred_region
        _
      $region24: #{transformer_model_forward.1} parent=11 // pred_fallthru
        _
      // Predicated region
      $region25: #{transformer_model_forward.1} parent=11 // pred_check
        %p451 = pneg %p186
      $region26: #{transformer_model_forward.1} parent=11 // pred_check_branch
        %453 = sbr.rel (%p451) target = $region28
      $region27: #{transformer_model_forward.1} parent=11 // pred_region
        _
      $region28: #{transformer_model_forward.1} parent=11 // pred_fallthru
        _
      // Predicated region
      $region29: #{transformer_model_forward.1} parent=11 // pred_check
        %p454 = pneg %p207
      $region30: #{transformer_model_forward.1} parent=11 // pred_check_branch
        %456 = sbr.rel (%p454) target = $region32
      $region31: #{transformer_model_forward.1} parent=11 // pred_region
        _
      $region32: #{transformer_model_forward.1} parent=11 // pred_fallthru
        _
      // Predicated region
      $region33: #{transformer_model_forward.1} parent=11 // pred_check
        %p457 = pneg %p228
      $region34: #{transformer_model_forward.1} parent=11 // pred_check_branch
        %459 = sbr.rel (%p457) target = $region36
      $region35: #{transformer_model_forward.1} parent=11 // pred_region
        _
      $region36: #{transformer_model_forward.1} parent=11 // pred_fallthru
        _
      // Predicated region
      $region37: #{transformer_model_forward.1} parent=11 // pred_check
        %p460 = pneg %p249
      $region38: #{transformer_model_forward.1} parent=11 // pred_check_branch
        %462 = sbr.rel (%p460) target = $region40
      $region39: #{transformer_model_forward.1} parent=11 // pred_region
        _
      $region40: #{transformer_model_forward.1} parent=11 // pred_fallthru
        _
      // Predicated region
      $region41: #{transformer_model_forward.1} parent=11 // pred_check
        %p463 = pneg %p270
      $region42: #{transformer_model_forward.1} parent=11 // pred_check_branch
        %465 = sbr.rel (%p463) target = $region44
      $region43: #{transformer_model_forward.1} parent=11 // pred_region
        _
      $region44: #{transformer_model_forward.1} parent=11 // pred_fallthru
        _
      // Predicated region
      $region45: #{transformer_model_forward.1} parent=11 // pred_check
        %p466 = pneg %p291
      $region46: #{transformer_model_forward.1} parent=11 // pred_check_branch
        %468 = sbr.rel (%p466) target = $region48
      $region47: #{transformer_model_forward.1} parent=11 // pred_region
        _
      $region48: #{transformer_model_forward.1} parent=11 // pred_fallthru
        _
      // Predicated region
      $region49: #{transformer_model_forward.1} parent=11 // pred_check
        %p469 = pneg %p312
      $region50: #{transformer_model_forward.1} parent=11 // pred_check_branch
        %471 = sbr.rel (%p469) target = $region52
      $region51: #{transformer_model_forward.1} parent=11 // pred_region
        _
      $region52: #{transformer_model_forward.1} parent=11 // pred_fallthru
        _
      // Predicated region
      $region53: #{transformer_model_forward.1} parent=11 // pred_check
        %p472 = pneg %p333
      $region54: #{transformer_model_forward.1} parent=11 // pred_check_branch
        %474 = sbr.rel (%p472) target = $region56
      $region55: #{transformer_model_forward.1} parent=11 // pred_region
        _
      $region56: #{transformer_model_forward.1} parent=11 // pred_fallthru
        _
      // Predicated region
      $region57: #{transformer_model_forward.1} parent=11 // pred_check
        %p475 = pneg %p354
      $region58: #{transformer_model_forward.1} parent=11 // pred_check_branch
        %477 = sbr.rel (%p475) target = $region60
      $region59: #{transformer_model_forward.1} parent=11 // pred_region
        _
      $region60: #{transformer_model_forward.1} parent=11 // pred_fallthru
        _
      // Predicated region
      $region61: #{transformer_model_forward.1} parent=11 // pred_check
        %p478 = pneg %p375
      $region62: #{transformer_model_forward.1} parent=11 // pred_check_branch
        %480 = sbr.rel (%p478) target = $region64
      $region63: #{transformer_model_forward.1} parent=11 // pred_region
        _
      $region64: #{transformer_model_forward.1} parent=11 // pred_fallthru
        _
    $region12: #{transformer_model_forward.1} parent=5 // pred_fallthru
      _
    %p481 = scmp.lt.s32.totalorder %s24, 2
    // Predicated region
    $region65: #{transformer_model_forward.1} parent=5 // pred_check
      %p482 = pneg %p481
    $region66: #{transformer_model_forward.1} parent=5 // pred_check_branch
      %484 = sbr.rel (%p482) target = $region68
    $region67: #{transformer_model_forward.1} parent=5 // pred_region
      // Predicated region
      $region69: #{transformer_model_forward.1} parent=67 // pred_check
        %p485 = pneg %p44
      $region70: #{transformer_model_forward.1} parent=67 // pred_check_branch
        %487 = sbr.rel (%p485) target = $region72
      $region71: #{transformer_model_forward.1} parent=67 // pred_region
        %s488 = smul.u32 2, %s24
        %p489 = scmp.lt.s32.totalorder %s488, 3
        %s490 = scalar_select %p489, %s488, 3
        %s491 = smul.addr %s490, 8
        %s492 = scalar_lea.vmem %s0, %s491
        %s493 = smul.u32 2, %s24
      $region72: #{transformer_model_forward.1} parent=67 // pred_fallthru
        _
      // Predicated region
      $region73: #{transformer_model_forward.1} parent=67 // pred_check
        %p494 = pneg %p70
      $region74: #{transformer_model_forward.1} parent=67 // pred_check_branch
        %496 = sbr.rel (%p494) target = $region76
      $region75: #{transformer_model_forward.1} parent=67 // pred_region
        %s497 = smul.u32 2, %s24
        %p498 = scmp.lt.s32.totalorder %s497, 3
        %s499 = scalar_select %p498, %s497, 3
        %s500 = scalar_lea.vmem %s1, %s499
        %s501 = smul.u32 2, %s24
      $region76: #{transformer_model_forward.1} parent=67 // pred_fallthru
        _
      // Predicated region
      $region77: #{transformer_model_forward.1} parent=67 // pred_check
        %p502 = pneg %p96
      $region78: #{transformer_model_forward.1} parent=67 // pred_check_branch
        %504 = sbr.rel (%p502) target = $region80
      $region79: #{transformer_model_forward.1} parent=67 // pred_region
        %s505 = smul.u32 2, %s24
        %p506 = scmp.lt.s32.totalorder %s505, 3
        %s507 = scalar_select %p506, %s505, 3
        %s508 = smul.addr %s507, 8
        %s509 = scalar_lea.vmem %s2, %s508
        %s510 = smul.u32 2, %s24
      $region80: #{transformer_model_forward.1} parent=67 // pred_fallthru
        _
    $region68: #{transformer_model_forward.1} parent=5 // pred_fallthru
      _
    %p511 = scmp.le.s32.totalorder 1, %s24
    %p512 = scmp.lt.s32.totalorder %s24, 3
    %p513 = pnand %p511, %p512
    %p514 = pneg %p513
    // Predicated region
    $region81: #{transformer_model_forward.1} parent=5 // pred_check
      _
    $region82: #{transformer_model_forward.1} parent=5 // pred_check_branch
      %516 = sbr.rel (%p513) target = $region84
    $region83: #{transformer_model_forward.1} parent=5 // pred_region
      %s517 = ssub.s32 %s24, 1
      %s518 = smul.u32 2, %s29
      %p519 = scmp.lt.s32.totalorder %s518, 3
      %s520 = scalar_select %p519, %s518, 3
      %s521 = smul.addr %s520, 8
      %s522 = scalar_lea.vmem %s0, %s521
      %p523 = pneg %p50
      %p524 = pneg %p47
      %s525 = smul.u32 2, %s29
      %p526 = scmp.lt.s32.totalorder %s525, 3
      %s527 = scalar_select %p526, %s525, 3
      %s528 = scalar_lea.vmem %s1, %s527
      %p529 = pneg %p76
      %p530 = pneg %p73
      %s531 = smul.u32 2, %s29
      %p532 = scmp.lt.s32.totalorder %s531, 3
      %s533 = scalar_select %p532, %s531, 3
      %s534 = smul.addr %s533, 8
      %s535 = scalar_lea.vmem %s2, %s534
      %p536 = pneg %p102
      %p537 = pneg %p99
      %p538 = pneg %p123
      %p539 = pneg %p120
      %p540 = pneg %p144
      %p541 = pneg %p141
      %p542 = pneg %p165
      %p543 = pneg %p162
      %p544 = pneg %p186
      %p545 = pneg %p183
      %p546 = pneg %p207
      %p547 = pneg %p204
      %p548 = pneg %p228
      %p549 = pneg %p225
      %p550 = pneg %p249
      %p551 = pneg %p246
      %p552 = pneg %p270
      %p553 = pneg %p267
      %p554 = pneg %p291
      %p555 = pneg %p288
      %p556 = pneg %p312
      %p557 = pneg %p309
      %p558 = pneg %p333
      %p559 = pneg %p330
      %p560 = pneg %p354
      %p561 = pneg %p351
      %p562 = pneg %p375
      %p563 = pneg %p372
      %p564 = pneg %p401
      %p565 = pneg %p398
      %s566 = smul.u32 2, %s29
      %p567 = scmp.lt.s32.totalorder %s566, 3
      %s568 = scalar_select %p567, %s566, 3
      %s569 = smul.addr %s568, 8
      %s570 = scalar_lea.vmem %s16, %s569
      %p571 = pneg %p427
      %p572 = pneg %p424
      %s573 = smul.u32 2, %s29
      %p574 = scmp.lt.s32.totalorder %s573, 3
      %s575 = scalar_select %p574, %s573, 3
      %s576 = smul.addr %s575, 8
      %s577 = scalar_lea.vmem %s17, %s576
      %s578 = smul.u32 2, %s29
      %p579 = scmp.lt.s32.totalorder %s578, 3
      %s580 = scalar_select %p579, %s578, 3
      %s581 = smul.addr %s580, 8
      %s582 = scalar_lea.vmem %s0, %s581
      %s583 = smul.u32 2, %s29
      %s584 = smul.u32 2, %s29
      %p585 = scmp.lt.s32.totalorder %s584, 3
      %s586 = scalar_select %p585, %s584, 3
      %s587 = scalar_lea.vmem %s1, %s586
      %s588 = smul.u32 2, %s29
      %s589 = smul.u32 2, %s29
      %p590 = scmp.lt.s32.totalorder %s589, 3
      %s591 = scalar_select %p590, %s589, 3
      %s592 = smul.addr %s591, 8
      %s593 = scalar_lea.vmem %s2, %s592
      %s594 = smul.u32 2, %s29
      %s595 = smul.u32 2, %s29
      %p596 = scmp.lt.s32.totalorder %s595, 3
      %s597 = scalar_select %p596, %s595, 3
      %s598 = smul.addr %s597, 8
      %s599 = scalar_lea.vmem %s16, %s598
      %s600 = smul.u32 2, %s29
      %s601 = smul.u32 2, %s29
      %p602 = scmp.lt.s32.totalorder %s601, 3
      %s603 = scalar_select %p602, %s601, 3
      %s604 = smul.addr %s603, 8
      %s605 = scalar_lea.vmem %s17, %s604
      %s606 = smul.u32 2, %s29
      %v607 = vld [vmem:[%s582] sm:$0xff]
      %v608 = vld [vmem:[%s582 + $0x8] sm:$0xff]
      %v609 = vld [vmem:[%s3] sm:$0xff]
      %v610 = vld [vmem:[%s3 + $0x8] sm:$0xff]
      %v611 = vld [vmem:[%s3 + $0x10] sm:$0xff]
      %v612 = vld [vmem:[%s3 + $0x18] sm:$0xff]
      %v613 = vld [vmem:[%s4] sm:$0x1]
      %v615 = vperm.slane %v613, 0
      %vm617 = vcmask 261120
      %v619 = vsel %vm617, %v607, 0
      %v622 = vsel %vm617, %v608, 0
      %624 = vmatpush.msra.mxu0 0.0
      %625 = vmatpush.msra.mxu0 0.0
      %626 = vmatpush.msra.mxu0 0.0
      %627 = vmatpush.msra.mxu0 0.0
      %628 = vmatpush.msra.mxu0 0.0
      %629 = vmatpush.msra.mxu0 0.0
      %630 = vmatpush.msra.mxu0 0.0
      %631 = vmatpush.msra.mxu0 0.0
      %632 = vmatpush.msra.mxu0 0.0
      %633 = vmatpush.msra.mxu0 0.0
      %634 = vmatpush.msra.mxu0 0.0
      %635 = vmatpush.msra.mxu0 0.0
      %636 = vmatpush.msra.mxu0 %v612
      %637 = vmatpush.msra.mxu0 %v611
      %638 = vmatpush.msra.mxu0 %v610
      %639 = vmatpush.msra.mxu0 %v609
      %640 = vmatmul.f32.gmra.mxu0 %v619
      %v641 = vpop.f32.mrf.mxu0
      %v642 = vadd.f32 %v615, %v641
      %643 = vmatmul.f32.gmra.mxu0 %v622
      %v644 = vpop.f32.mrf.mxu0
      %v645 = vadd.f32 %v615, %v644
      %646 = vdwg.mxu0
      %v647 = vld [vmem:[%s587] sm:$0x1]
      %v648 = vmul.f32 %v642, 0.35355338
      %v650 = vperm.slane %v647, 0
      %653 = vrot.lane.b32.xlu0 %v642, 96
      %v654 = vpop.permute.xlu0 %653
      %vm655 = vcmask 64512
      %v657 = vsel %vm655, %v648, 0
      %v659 = vsel %vm655, %v654, 0
      %661 = vmatpush.xpose.msra.mxu0 0.0
      %662 = vmatpush.xpose.msra.mxu0 0.0
      %663 = vmatpush.xpose.msra.mxu0 0.0
      %664 = vmatpush.xpose.msra.mxu0 0.0
      %665 = vmatpush.xpose.msra.mxu0 0.0
      %666 = vmatpush.xpose.msra.mxu0 0.0
      %667 = vmatpush.xpose.msra.mxu0 0.0
      %668 = vmatpush.xpose.msra.mxu0 0.0
      %669 = vmatpush.xpose.msra.mxu0 0.0
      %670 = vmatpush.xpose.msra.mxu0 0.0
      %671 = vmatpush.xpose.msra.mxu0 0.0
      %672 = vmatpush.xpose.msra.mxu0 0.0
      %673 = vmatpush.xpose.msra.mxu0 0.0
      %674 = vmatpush.xpose.msra.mxu0 0.0
      %675 = vmatpush.xpose.msra.mxu0 0.0
      %676 = vmatpush.xpose.msra.mxu0 %v659
      %677 = vmatmul.f32.gmra.mxu0 %v657
      %v678 = vpop.f32.mrf.mxu0
      %v679 = vadd.f32 %v650, %v678
      %680 = vdwg.mxu0
      %v681 = vsel %vm655, %v679, -inf
      %682 = vmax.xlane.f32.xlu0 %v681
      %v683 = vpop.xlane.xlu0 %682
      %v684 = vsub.f32 %v679, %v683
      %v685 = vmul.f32 %v684, 1.442695
      %v686 = vpow.pop %v685
      %v687 = vsel %vm655, %v686, 0.0
      %688 = vadd.xlane.f32.xlu0 %v687
      %v689 = vpop.xlane.xlu0 %688
      %v690 = vrcp.pop %v689
      %v691 = vmul.f32 %v686, %v690
      %692 = vrot.lane.b32.xlu0 %v642, 64
      %v693 = vpop.permute.xlu0 %692
      %v696 = vsel %vm655, %v691, 0
      %698 = vmatpush.msra.mxu0 0.0
      %699 = vmatpush.msra.mxu0 0.0
      %700 = vmatpush.msra.mxu0 0.0
      %701 = vmatpush.msra.mxu0 0.0
      %702 = vmatpush.msra.mxu0 0.0
      %703 = vmatpush.msra.mxu0 0.0
      %704 = vmatpush.msra.mxu0 0.0
      %705 = vmatpush.msra.mxu0 0.0
      %706 = vmatpush.msra.mxu0 0.0
      %707 = vmatpush.msra.mxu0 0.0
      %708 = vmatpush.msra.mxu0 0.0
      %709 = vmatpush.msra.mxu0 0.0
      %710 = vmatpush.msra.mxu0 0.0
      %711 = vmatpush.msra.mxu0 0.0
      %712 = vmatpush.msra.mxu0 0.0
      %713 = vmatpush.msra.mxu0 %v693
      %714 = vmatmul.f32.gmra.mxu0 %v696
      %v715 = vpop.f32.mrf.mxu0
      %v716 = vadd.f32 0.0, %v715
      %717 = vdwg.mxu0
      %718 = vst.msk [vmem:[#allocation2] sm:$0xff] %vm655, %v716
      %719 = vrot.lane.b32.xlu0 %v648, 120
      %v720 = vpop.permute.xlu0 %719
      %721 = vrot.lane.b32.xlu0 %v642, 88
      %v722 = vpop.permute.xlu0 %721
      %v723 = vsel %vm655, %v720, 0
      %v725 = vsel %vm655, %v722, 0
      %727 = vmatpush.xpose.msra.mxu0 0.0
      %728 = vmatpush.xpose.msra.mxu0 0.0
      %729 = vmatpush.xpose.msra.mxu0 0.0
      %730 = vmatpush.xpose.msra.mxu0 0.0
      %731 = vmatpush.xpose.msra.mxu0 0.0
      %732 = vmatpush.xpose.msra.mxu0 0.0
      %733 = vmatpush.xpose.msra.mxu0 0.0
      %734 = vmatpush.xpose.msra.mxu0 0.0
      %735 = vmatpush.xpose.msra.mxu0 0.0
      %736 = vmatpush.xpose.msra.mxu0 0.0
      %737 = vmatpush.xpose.msra.mxu0 0.0
      %738 = vmatpush.xpose.msra.mxu0 0.0
      %739 = vmatpush.xpose.msra.mxu0 0.0
      %740 = vmatpush.xpose.msra.mxu0 0.0
      %741 = vmatpush.xpose.msra.mxu0 0.0
      %742 = vmatpush.xpose.msra.mxu0 %v725
      %743 = vmatmul.f32.gmra.mxu0 %v723
      %v744 = vpop.f32.mrf.mxu0
      %v745 = vadd.f32 %v650, %v744
      %746 = vdwg.mxu0
      %v747 = vsel %vm655, %v745, -inf
      %748 = vmax.xlane.f32.xlu0 %v747
      %v749 = vpop.xlane.xlu0 %748
      %v750 = vsub.f32 %v745, %v749
      %v751 = vmul.f32 %v750, 1.442695
      %v752 = vpow.pop %v751
      %v753 = vsel %vm655, %v752, 0.0
      %754 = vadd.xlane.f32.xlu0 %v753
      %v755 = vpop.xlane.xlu0 %754
      %v756 = vrcp.pop %v755
      %v757 = vmul.f32 %v752, %v756
      %758 = vrot.lane.b32.xlu0 %v642, 56
      %v759 = vpop.permute.xlu0 %758
      %v762 = vsel %vm655, %v757, 0
      %764 = vmatpush.msra.mxu0 0.0
      %765 = vmatpush.msra.mxu0 0.0
      %766 = vmatpush.msra.mxu0 0.0
      %767 = vmatpush.msra.mxu0 0.0
      %768 = vmatpush.msra.mxu0 0.0
      %769 = vmatpush.msra.mxu0 0.0
      %770 = vmatpush.msra.mxu0 0.0
      %771 = vmatpush.msra.mxu0 0.0
      %772 = vmatpush.msra.mxu0 0.0
      %773 = vmatpush.msra.mxu0 0.0
      %774 = vmatpush.msra.mxu0 0.0
      %775 = vmatpush.msra.mxu0 0.0
      %776 = vmatpush.msra.mxu0 0.0
      %777 = vmatpush.msra.mxu0 0.0
      %778 = vmatpush.msra.mxu0 0.0
      %779 = vmatpush.msra.mxu0 %v759
      %780 = vmatmul.f32.gmra.mxu0 %v762
      %v781 = vpop.f32.mrf.mxu0
      %v782 = vadd.f32 0.0, %v781
      %783 = vdwg.mxu0
      %785 = vrot.lane.b32.xlu0 %v782, 8
      %v786 = vpop.permute.xlu0 %785
      %vm788 = vcmask 130112
      %789 = vst.msk [vmem:[#allocation2] sm:$0xff] %vm788, %v786
      %790 = vrot.lane.b32.xlu0 %v648, 112
      %v791 = vpop.permute.xlu0 %790
      %792 = vrot.lane.b32.xlu0 %v642, 80
      %v793 = vpop.permute.xlu0 %792
      %v794 = vsel %vm655, %v791, 0
      %v796 = vsel %vm655, %v793, 0
      %798 = vmatpush.xpose.msra.mxu0 0.0
      %799 = vmatpush.xpose.msra.mxu0 0.0
      %800 = vmatpush.xpose.msra.mxu0 0.0
      %801 = vmatpush.xpose.msra.mxu0 0.0
      %802 = vmatpush.xpose.msra.mxu0 0.0
      %803 = vmatpush.xpose.msra.mxu0 0.0
      %804 = vmatpush.xpose.msra.mxu0 0.0
      %805 = vmatpush.xpose.msra.mxu0 0.0
      %806 = vmatpush.xpose.msra.mxu0 0.0
      %807 = vmatpush.xpose.msra.mxu0 0.0
      %808 = vmatpush.xpose.msra.mxu0 0.0
      %809 = vmatpush.xpose.msra.mxu0 0.0
      %810 = vmatpush.xpose.msra.mxu0 0.0
      %811 = vmatpush.xpose.msra.mxu0 0.0
      %812 = vmatpush.xpose.msra.mxu0 0.0
      %813 = vmatpush.xpose.msra.mxu0 %v796
      %814 = vmatmul.f32.gmra.mxu0 %v794
      %v815 = vpop.f32.mrf.mxu0
      %v816 = vadd.f32 %v650, %v815
      %817 = vdwg.mxu0
      %v818 = vsel %vm655, %v816, -inf
      %819 = vmax.xlane.f32.xlu0 %v818
      %v820 = vpop.xlane.xlu0 %819
      %v821 = vsub.f32 %v816, %v820
      %v822 = vmul.f32 %v821, 1.442695
      %v823 = vpow.pop %v822
      %v824 = vsel %vm655, %v823, 0.0
      %825 = vadd.xlane.f32.xlu0 %v824
      %v826 = vpop.xlane.xlu0 %825
      %v827 = vrcp.pop %v826
      %v828 = vmul.f32 %v823, %v827
      %829 = vrot.lane.b32.xlu0 %v642, 48
      %v830 = vpop.permute.xlu0 %829
      %v833 = vsel %vm655, %v828, 0
      %835 = vmatpush.msra.mxu0 0.0
      %836 = vmatpush.msra.mxu0 0.0
      %837 = vmatpush.msra.mxu0 0.0
      %838 = vmatpush.msra.mxu0 0.0
      %839 = vmatpush.msra.mxu0 0.0
      %840 = vmatpush.msra.mxu0 0.0
      %841 = vmatpush.msra.mxu0 0.0
      %842 = vmatpush.msra.mxu0 0.0
      %843 = vmatpush.msra.mxu0 0.0
      %844 = vmatpush.msra.mxu0 0.0
      %845 = vmatpush.msra.mxu0 0.0
      %846 = vmatpush.msra.mxu0 0.0
      %847 = vmatpush.msra.mxu0 0.0
      %848 = vmatpush.msra.mxu0 0.0
      %849 = vmatpush.msra.mxu0 0.0
      %850 = vmatpush.msra.mxu0 %v830
      %851 = vmatmul.f32.gmra.mxu0 %v833
      %v852 = vpop.f32.mrf.mxu0
      %v853 = vadd.f32 0.0, %v852
      %854 = vdwg.mxu0
      %856 = vrot.lane.b32.xlu0 %v853, 16
      %v857 = vpop.permute.xlu0 %856
      %vm859 = vcmask 195712
      %860 = vst.msk [vmem:[#allocation2] sm:$0xff] %vm859, %v857
      %861 = vrot.lane.b32.xlu0 %v648, 104
      %v862 = vpop.permute.xlu0 %861
      %863 = vrot.lane.b32.xlu0 %v642, 72
      %v864 = vpop.permute.xlu0 %863
      %v865 = vsel %vm655, %v862, 0
      %v867 = vsel %vm655, %v864, 0
      %869 = vmatpush.xpose.msra.mxu0 0.0
      %870 = vmatpush.xpose.msra.mxu0 0.0
      %871 = vmatpush.xpose.msra.mxu0 0.0
      %872 = vmatpush.xpose.msra.mxu0 0.0
      %873 = vmatpush.xpose.msra.mxu0 0.0
      %874 = vmatpush.xpose.msra.mxu0 0.0
      %875 = vmatpush.xpose.msra.mxu0 0.0
      %876 = vmatpush.xpose.msra.mxu0 0.0
      %877 = vmatpush.xpose.msra.mxu0 0.0
      %878 = vmatpush.xpose.msra.mxu0 0.0
      %879 = vmatpush.xpose.msra.mxu0 0.0
      %880 = vmatpush.xpose.msra.mxu0 0.0
      %881 = vmatpush.xpose.msra.mxu0 0.0
      %882 = vmatpush.xpose.msra.mxu0 0.0
      %883 = vmatpush.xpose.msra.mxu0 0.0
      %884 = vmatpush.xpose.msra.mxu0 %v867
      %885 = vmatmul.f32.gmra.mxu0 %v865
      %v886 = vpop.f32.mrf.mxu0
      %v887 = vadd.f32 %v650, %v886
      %888 = vdwg.mxu0
      %v889 = vsel %vm655, %v887, -inf
      %890 = vmax.xlane.f32.xlu0 %v889
      %v891 = vpop.xlane.xlu0 %890
      %v892 = vsub.f32 %v887, %v891
      %v893 = vmul.f32 %v892, 1.442695
      %v894 = vpow.pop %v893
      %v895 = vsel %vm655, %v894, 0.0
      %896 = vadd.xlane.f32.xlu0 %v895
      %v897 = vpop.xlane.xlu0 %896
      %v898 = vrcp.pop %v897
      %v899 = vmul.f32 %v894, %v898
      %900 = vrot.lane.b32.xlu0 %v642, 40
      %v901 = vpop.permute.xlu0 %900
      %v904 = vsel %vm655, %v899, 0
      %906 = vmatpush.msra.mxu0 0.0
      %907 = vmatpush.msra.mxu0 0.0
      %908 = vmatpush.msra.mxu0 0.0
      %909 = vmatpush.msra.mxu0 0.0
      %910 = vmatpush.msra.mxu0 0.0
      %911 = vmatpush.msra.mxu0 0.0
      %912 = vmatpush.msra.mxu0 0.0
      %913 = vmatpush.msra.mxu0 0.0
      %914 = vmatpush.msra.mxu0 0.0
      %915 = vmatpush.msra.mxu0 0.0
      %916 = vmatpush.msra.mxu0 0.0
      %917 = vmatpush.msra.mxu0 0.0
      %918 = vmatpush.msra.mxu0 0.0
      %919 = vmatpush.msra.mxu0 0.0
      %920 = vmatpush.msra.mxu0 0.0
      %921 = vmatpush.msra.mxu0 %v901
      %922 = vmatmul.f32.gmra.mxu0 %v904
      %v923 = vpop.f32.mrf.mxu0
      %v924 = vadd.f32 0.0, %v923
      %925 = vdwg.mxu0
      %927 = vrot.lane.b32.xlu0 %v924, 24
      %v928 = vpop.permute.xlu0 %927
      %vm930 = vcmask 261312
      %931 = vst.msk [vmem:[#allocation2] sm:$0xff] %vm930, %v928
      %s932 = scalar_lea.vmem %s587, 1
      %v933 = vld [vmem:[%s932] sm:$0x1]
      %v934 = vmul.f32 %v645, 0.35355338
      %v936 = vperm.slane %v933, 0
      %939 = vrot.lane.b32.xlu0 %v645, 96
      %v940 = vpop.permute.xlu0 %939
      %v942 = vsel %vm655, %v934, 0
      %v944 = vsel %vm655, %v940, 0
      %946 = vmatpush.xpose.msra.mxu0 0.0
      %947 = vmatpush.xpose.msra.mxu0 0.0
      %948 = vmatpush.xpose.msra.mxu0 0.0
      %949 = vmatpush.xpose.msra.mxu0 0.0
      %950 = vmatpush.xpose.msra.mxu0 0.0
      %951 = vmatpush.xpose.msra.mxu0 0.0
      %952 = vmatpush.xpose.msra.mxu0 0.0
      %953 = vmatpush.xpose.msra.mxu0 0.0
      %954 = vmatpush.xpose.msra.mxu0 0.0
      %955 = vmatpush.xpose.msra.mxu0 0.0
      %956 = vmatpush.xpose.msra.mxu0 0.0
      %957 = vmatpush.xpose.msra.mxu0 0.0
      %958 = vmatpush.xpose.msra.mxu0 0.0
      %959 = vmatpush.xpose.msra.mxu0 0.0
      %960 = vmatpush.xpose.msra.mxu0 0.0
      %961 = vmatpush.xpose.msra.mxu0 %v944
      %962 = vmatmul.f32.gmra.mxu0 %v942
      %v963 = vpop.f32.mrf.mxu0
      %v964 = vadd.f32 %v936, %v963
      %965 = vdwg.mxu0
      %v966 = vsel %vm655, %v964, -inf
      %967 = vmax.xlane.f32.xlu0 %v966
      %v968 = vpop.xlane.xlu0 %967
      %v969 = vsub.f32 %v964, %v968
      %v970 = vmul.f32 %v969, 1.442695
      %v971 = vpow.pop %v970
      %v972 = vsel %vm655, %v971, 0.0
      %973 = vadd.xlane.f32.xlu0 %v972
      %v974 = vpop.xlane.xlu0 %973
      %v975 = vrcp.pop %v974
      %v976 = vmul.f32 %v971, %v975
      %977 = vrot.lane.b32.xlu0 %v645, 64
      %v978 = vpop.permute.xlu0 %977
      %v981 = vsel %vm655, %v976, 0
      %983 = vmatpush.msra.mxu0 0.0
      %984 = vmatpush.msra.mxu0 0.0
      %985 = vmatpush.msra.mxu0 0.0
      %986 = vmatpush.msra.mxu0 0.0
      %987 = vmatpush.msra.mxu0 0.0
      %988 = vmatpush.msra.mxu0 0.0
      %989 = vmatpush.msra.mxu0 0.0
      %990 = vmatpush.msra.mxu0 0.0
      %991 = vmatpush.msra.mxu0 0.0
      %992 = vmatpush.msra.mxu0 0.0
      %993 = vmatpush.msra.mxu0 0.0
      %994 = vmatpush.msra.mxu0 0.0
      %995 = vmatpush.msra.mxu0 0.0
      %996 = vmatpush.msra.mxu0 0.0
      %997 = vmatpush.msra.mxu0 0.0
      %998 = vmatpush.msra.mxu0 %v978
      %999 = vmatmul.f32.gmra.mxu0 %v981
      %v1000 = vpop.f32.mrf.mxu0
      %v1001 = vadd.f32 0.0, %v1000
      %1002 = vdwg.mxu0
      %1003 = vst.msk [vmem:[#allocation2 + $0x8] sm:$0xff] %vm655, %v1001
      %1004 = vrot.lane.b32.xlu0 %v934, 120
      %v1005 = vpop.permute.xlu0 %1004
      %1006 = vrot.lane.b32.xlu0 %v645, 88
      %v1007 = vpop.permute.xlu0 %1006
      %v1008 = vsel %vm655, %v1005, 0
      %v1010 = vsel %vm655, %v1007, 0
      %1012 = vmatpush.xpose.msra.mxu0 0.0
      %1013 = vmatpush.xpose.msra.mxu0 0.0
      %1014 = vmatpush.xpose.msra.mxu0 0.0
      %1015 = vmatpush.xpose.msra.mxu0 0.0
      %1016 = vmatpush.xpose.msra.mxu0 0.0
      %1017 = vmatpush.xpose.msra.mxu0 0.0
      %1018 = vmatpush.xpose.msra.mxu0 0.0
      %1019 = vmatpush.xpose.msra.mxu0 0.0
      %1020 = vmatpush.xpose.msra.mxu0 0.0
      %1021 = vmatpush.xpose.msra.mxu0 0.0
      %1022 = vmatpush.xpose.msra.mxu0 0.0
      %1023 = vmatpush.xpose.msra.mxu0 0.0
      %1024 = vmatpush.xpose.msra.mxu0 0.0
      %1025 = vmatpush.xpose.msra.mxu0 0.0
      %1026 = vmatpush.xpose.msra.mxu0 0.0
      %1027 = vmatpush.xpose.msra.mxu0 %v1010
      %1028 = vmatmul.f32.gmra.mxu0 %v1008
      %v1029 = vpop.f32.mrf.mxu0
      %v1030 = vadd.f32 %v936, %v1029
      %1031 = vdwg.mxu0
      %v1032 = vsel %vm655, %v1030, -inf
      %1033 = vmax.xlane.f32.xlu0 %v1032
      %v1034 = vpop.xlane.xlu0 %1033
      %v1035 = vsub.f32 %v1030, %v1034
      %v1036 = vmul.f32 %v1035, 1.442695
      %v1037 = vpow.pop %v1036
      %v1038 = vsel %vm655, %v1037, 0.0
      %1039 = vadd.xlane.f32.xlu0 %v1038
      %v1040 = vpop.xlane.xlu0 %1039
      %v1041 = vrcp.pop %v1040
      %v1042 = vmul.f32 %v1037, %v1041
      %1043 = vrot.lane.b32.xlu0 %v645, 56
      %v1044 = vpop.permute.xlu0 %1043
      %v1047 = vsel %vm655, %v1042, 0
      %1049 = vmatpush.msra.mxu0 0.0
      %1050 = vmatpush.msra.mxu0 0.0
      %1051 = vmatpush.msra.mxu0 0.0
      %1052 = vmatpush.msra.mxu0 0.0
      %1053 = vmatpush.msra.mxu0 0.0
      %1054 = vmatpush.msra.mxu0 0.0
      %1055 = vmatpush.msra.mxu0 0.0
      %1056 = vmatpush.msra.mxu0 0.0
      %1057 = vmatpush.msra.mxu0 0.0
      %1058 = vmatpush.msra.mxu0 0.0
      %1059 = vmatpush.msra.mxu0 0.0
      %1060 = vmatpush.msra.mxu0 0.0
      %1061 = vmatpush.msra.mxu0 0.0
      %1062 = vmatpush.msra.mxu0 0.0
      %1063 = vmatpush.msra.mxu0 0.0
      %1064 = vmatpush.msra.mxu0 %v1044
      %1065 = vmatmul.f32.gmra.mxu0 %v1047
      %v1066 = vpop.f32.mrf.mxu0
      %v1067 = vadd.f32 0.0, %v1066
      %1068 = vdwg.mxu0
      %1070 = vrot.lane.b32.xlu0 %v1067, 8
      %v1071 = vpop.permute.xlu0 %1070
      %1073 = vst.msk [vmem:[#allocation2 + $0x8] sm:$0xff] %vm788, %v1071
      %1074 = vrot.lane.b32.xlu0 %v934, 112
      %v1075 = vpop.permute.xlu0 %1074
      %1076 = vrot.lane.b32.xlu0 %v645, 80
      %v1077 = vpop.permute.xlu0 %1076
      %v1078 = vsel %vm655, %v1075, 0
      %v1080 = vsel %vm655, %v1077, 0
      %1082 = vmatpush.xpose.msra.mxu0 0.0
      %1083 = vmatpush.xpose.msra.mxu0 0.0
      %1084 = vmatpush.xpose.msra.mxu0 0.0
      %1085 = vmatpush.xpose.msra.mxu0 0.0
      %1086 = vmatpush.xpose.msra.mxu0 0.0
      %1087 = vmatpush.xpose.msra.mxu0 0.0
      %1088 = vmatpush.xpose.msra.mxu0 0.0
      %1089 = vmatpush.xpose.msra.mxu0 0.0
      %1090 = vmatpush.xpose.msra.mxu0 0.0
      %1091 = vmatpush.xpose.msra.mxu0 0.0
      %1092 = vmatpush.xpose.msra.mxu0 0.0
      %1093 = vmatpush.xpose.msra.mxu0 0.0
      %1094 = vmatpush.xpose.msra.mxu0 0.0
      %1095 = vmatpush.xpose.msra.mxu0 0.0
      %1096 = vmatpush.xpose.msra.mxu0 0.0
      %1097 = vmatpush.xpose.msra.mxu0 %v1080
      %1098 = vmatmul.f32.gmra.mxu0 %v1078
      %v1099 = vpop.f32.mrf.mxu0
      %v1100 = vadd.f32 %v936, %v1099
      %1101 = vdwg.mxu0
      %v1102 = vsel %vm655, %v1100, -inf
      %1103 = vmax.xlane.f32.xlu0 %v1102
      %v1104 = vpop.xlane.xlu0 %1103
      %v1105 = vsub.f32 %v1100, %v1104
      %v1106 = vmul.f32 %v1105, 1.442695
      %v1107 = vpow.pop %v1106
      %v1108 = vsel %vm655, %v1107, 0.0
      %1109 = vadd.xlane.f32.xlu0 %v1108
      %v1110 = vpop.xlane.xlu0 %1109
      %v1111 = vrcp.pop %v1110
      %v1112 = vmul.f32 %v1107, %v1111
      %1113 = vrot.lane.b32.xlu0 %v645, 48
      %v1114 = vpop.permute.xlu0 %1113
      %v1117 = vsel %vm655, %v1112, 0
      %1119 = vmatpush.msra.mxu0 0.0
      %1120 = vmatpush.msra.mxu0 0.0
      %1121 = vmatpush.msra.mxu0 0.0
      %1122 = vmatpush.msra.mxu0 0.0
      %1123 = vmatpush.msra.mxu0 0.0
      %1124 = vmatpush.msra.mxu0 0.0
      %1125 = vmatpush.msra.mxu0 0.0
      %1126 = vmatpush.msra.mxu0 0.0
      %1127 = vmatpush.msra.mxu0 0.0
      %1128 = vmatpush.msra.mxu0 0.0
      %1129 = vmatpush.msra.mxu0 0.0
      %1130 = vmatpush.msra.mxu0 0.0
      %1131 = vmatpush.msra.mxu0 0.0
      %1132 = vmatpush.msra.mxu0 0.0
      %1133 = vmatpush.msra.mxu0 0.0
      %1134 = vmatpush.msra.mxu0 %v1114
      %1135 = vmatmul.f32.gmra.mxu0 %v1117
      %v1136 = vpop.f32.mrf.mxu0
      %v1137 = vadd.f32 0.0, %v1136
      %1138 = vdwg.mxu0
      %1140 = vrot.lane.b32.xlu0 %v1137, 16
      %v1141 = vpop.permute.xlu0 %1140
      %1143 = vst.msk [vmem:[#allocation2 + $0x8] sm:$0xff] %vm859, %v1141
      %1144 = vrot.lane.b32.xlu0 %v934, 104
      %v1145 = vpop.permute.xlu0 %1144
      %1146 = vrot.lane.b32.xlu0 %v645, 72
      %v1147 = vpop.permute.xlu0 %1146
      %v1148 = vsel %vm655, %v1145, 0
      %v1150 = vsel %vm655, %v1147, 0
      %1152 = vmatpush.xpose.msra.mxu0 0.0
      %1153 = vmatpush.xpose.msra.mxu0 0.0
      %1154 = vmatpush.xpose.msra.mxu0 0.0
      %1155 = vmatpush.xpose.msra.mxu0 0.0
      %1156 = vmatpush.xpose.msra.mxu0 0.0
      %1157 = vmatpush.xpose.msra.mxu0 0.0
      %1158 = vmatpush.xpose.msra.mxu0 0.0
      %1159 = vmatpush.xpose.msra.mxu0 0.0
      %1160 = vmatpush.xpose.msra.mxu0 0.0
      %1161 = vmatpush.xpose.msra.mxu0 0.0
      %1162 = vmatpush.xpose.msra.mxu0 0.0
      %1163 = vmatpush.xpose.msra.mxu0 0.0
      %1164 = vmatpush.xpose.msra.mxu0 0.0
      %1165 = vmatpush.xpose.msra.mxu0 0.0
      %1166 = vmatpush.xpose.msra.mxu0 0.0
      %1167 = vmatpush.xpose.msra.mxu0 %v1150
      %1168 = vmatmul.f32.gmra.mxu0 %v1148
      %v1169 = vpop.f32.mrf.mxu0
      %v1170 = vadd.f32 %v936, %v1169
      %1171 = vdwg.mxu0
      %v1172 = vsel %vm655, %v1170, -inf
      %1173 = vmax.xlane.f32.xlu0 %v1172
      %v1174 = vpop.xlane.xlu0 %1173
      %v1175 = vsub.f32 %v1170, %v1174
      %v1176 = vmul.f32 %v1175, 1.442695
      %v1177 = vpow.pop %v1176
      %v1178 = vsel %vm655, %v1177, 0.0
      %1179 = vadd.xlane.f32.xlu0 %v1178
      %v1180 = vpop.xlane.xlu0 %1179
      %v1181 = vrcp.pop %v1180
      %v1182 = vmul.f32 %v1177, %v1181
      %1183 = vrot.lane.b32.xlu0 %v645, 40
      %v1184 = vpop.permute.xlu0 %1183
      %v1187 = vsel %vm655, %v1182, 0
      %1189 = vmatpush.msra.mxu0 0.0
      %1190 = vmatpush.msra.mxu0 0.0
      %1191 = vmatpush.msra.mxu0 0.0
      %1192 = vmatpush.msra.mxu0 0.0
      %1193 = vmatpush.msra.mxu0 0.0
      %1194 = vmatpush.msra.mxu0 0.0
      %1195 = vmatpush.msra.mxu0 0.0
      %1196 = vmatpush.msra.mxu0 0.0
      %1197 = vmatpush.msra.mxu0 0.0
      %1198 = vmatpush.msra.mxu0 0.0
      %1199 = vmatpush.msra.mxu0 0.0
      %1200 = vmatpush.msra.mxu0 0.0
      %1201 = vmatpush.msra.mxu0 0.0
      %1202 = vmatpush.msra.mxu0 0.0
      %1203 = vmatpush.msra.mxu0 0.0
      %1204 = vmatpush.msra.mxu0 %v1184
      %1205 = vmatmul.f32.gmra.mxu0 %v1187
      %v1206 = vpop.f32.mrf.mxu0
      %v1207 = vadd.f32 0.0, %v1206
      %1208 = vdwg.mxu0
      %1210 = vrot.lane.b32.xlu0 %v1207, 24
      %v1211 = vpop.permute.xlu0 %1210
      %1213 = vst.msk [vmem:[#allocation2 + $0x8] sm:$0xff] %vm930, %v1211
      %v1214 = vld [vmem:[#allocation2] sm:$0xff]
      %v1215 = vld [vmem:[#allocation2 + $0x8] sm:$0xff]
      %v1216 = vld [vmem:[%s5] sm:$0xff]
      %v1217 = vld [vmem:[%s5 + $0x8] sm:$0xff]
      %v1218 = vld [vmem:[%s5 + $0x10] sm:$0xff]
      %v1219 = vld [vmem:[%s5 + $0x18] sm:$0xff]
      %v1220 = vld [vmem:[%s6] sm:$0x1]
      %v1222 = vperm.slane %v1220, 0
      %v1225 = vsel %vm617, %v1214, 0
      %v1228 = vsel %vm617, %v1215, 0
      %1230 = vmatpush.msra.mxu0 0.0
      %1231 = vmatpush.msra.mxu0 0.0
      %1232 = vmatpush.msra.mxu0 0.0
      %1233 = vmatpush.msra.mxu0 0.0
      %1234 = vmatpush.msra.mxu0 0.0
      %1235 = vmatpush.msra.mxu0 0.0
      %1236 = vmatpush.msra.mxu0 0.0
      %1237 = vmatpush.msra.mxu0 0.0
      %1238 = vmatpush.msra.mxu0 0.0
      %1239 = vmatpush.msra.mxu0 0.0
      %1240 = vmatpush.msra.mxu0 0.0
      %1241 = vmatpush.msra.mxu0 0.0
      %1242 = vmatpush.msra.mxu0 %v1219
      %1243 = vmatpush.msra.mxu0 %v1218
      %1244 = vmatpush.msra.mxu0 %v1217
      %1245 = vmatpush.msra.mxu0 %v1216
      %1246 = vmatmul.f32.gmra.mxu0 %v1225
      %v1247 = vpop.f32.mrf.mxu0
      %v1248 = vadd.f32 %v1222, %v1247
      %1249 = vmatmul.f32.gmra.mxu0 %v1228
      %v1250 = vpop.f32.mrf.mxu0
      %v1251 = vadd.f32 %v1222, %v1250
      %1252 = vdwg.mxu0
      %v1253 = vadd.f32 %v607, %v1248
      %v1254 = vadd.f32 %v608, %v1251
      %v1255 = vld [vmem:[%s7] sm:$0x1]
      %v1256 = vld [vmem:[%s8] sm:$0x1]
      %v1257 = vsel %vm617, %v1253, 0.0
      %1258 = vadd.xlane.f32.xlu0 %v1257
      %v1259 = vpop.xlane.xlu0 %1258
      %v1260 = vsel %vm617, %v1254, 0.0
      %1261 = vadd.xlane.f32.xlu0 %v1260
      %v1262 = vpop.xlane.xlu0 %1261
      %v1263 = vrcp.pop 32.0
      %v1264 = vmul.f32 32.0, %v1263
      %v1265 = vsub.f32 1.0, %v1264
      %v1266 = vmul.f32 %v1263, %v1265
      %v1267 = vadd.f32 %v1263, %v1266
      %vm1268 = vweird.f32 %v1263
      %v1269 = vsel %vm1268, %v1263, %v1267
      %v1270 = vmul.f32 %v1259, %v1269
      %v1271 = vmul.f32 %v1262, %v1269
      %v1272 = vsub.f32 %v1253, %v1270
      %v1273 = vsub.f32 %v1254, %v1271
      %v1274 = vmul.f32 %v1272, %v1272
      %v1275 = vmul.f32 %v1273, %v1273
      %v1276 = vsel %vm617, %v1274, 0.0
      %1277 = vadd.xlane.f32.xlu0 %v1276
      %v1278 = vpop.xlane.xlu0 %1277
      %v1279 = vsel %vm617, %v1275, 0.0
      %1280 = vadd.xlane.f32.xlu0 %v1279
      %v1281 = vpop.xlane.xlu0 %1280
      %v1282 = vmul.f32 %v1278, %v1269
      %v1283 = vmul.f32 %v1281, %v1269
      %v1284 = vadd.f32 %v1282, 1e-05
      %v1285 = vadd.f32 %v1283, 1e-05
      %v1286 = vrsqrt.pop %v1284
      %v1287 = vmul.f32 %v1286, %v1284
      %v1288 = vmul.f32 %v1287, %v1286
      %v1289 = vmul.f32 0.5, %v1288
      %v1290 = vsub.f32 1.5, %v1289
      %v1291 = vmul.f32 %v1286, %v1290
      %vm1292 = vweird.f32 %v1284
      %vm1293 = vweird.f32 %v1286
      %vm1294 = vmor %vm1292, %vm1293
      %v1295 = vsel %vm1294, %v1286, %v1291
      %v1296 = vrsqrt.pop %v1285
      %v1297 = vmul.f32 %v1296, %v1285
      %v1298 = vmul.f32 %v1297, %v1296
      %v1299 = vmul.f32 0.5, %v1298
      %v1300 = vsub.f32 1.5, %v1299
      %v1301 = vmul.f32 %v1296, %v1300
      %vm1302 = vweird.f32 %v1285
      %vm1303 = vweird.f32 %v1296
      %vm1304 = vmor %vm1302, %vm1303
      %v1305 = vsel %vm1304, %v1296, %v1301
      %v1306 = vmul.f32 %v1272, %v1295
      %v1307 = vmul.f32 %v1273, %v1305
      %v1309 = vperm.slane %v1255, 0
      %v1311 = vmul.f32 %v1306, %v1309
      %v1312 = vmul.f32 %v1307, %v1309
      %v1314 = vperm.slane %v1256, 0
      %v1316 = vadd.f32 %v1311, %v1314
      %v1317 = vadd.f32 %v1312, %v1314
      %v1318 = vld [vmem:[%s9] sm:$0xff]
      %v1319 = vld [vmem:[%s9 + $0x8] sm:$0xff]
      %v1320 = vld [vmem:[%s9 + $0x10] sm:$0xff]
      %v1321 = vld [vmem:[%s9 + $0x18] sm:$0xff]
      %v1322 = vld [vmem:[%s10] sm:$0x1]
      %v1324 = vperm.slane %v1322, 0
      %v1327 = vsel %vm617, %v1316, 0
      %v1330 = vsel %vm617, %v1317, 0
      %1332 = vmatpush.msra.mxu0 0.0
      %1333 = vmatpush.msra.mxu0 0.0
      %1334 = vmatpush.msra.mxu0 0.0
      %1335 = vmatpush.msra.mxu0 0.0
      %1336 = vmatpush.msra.mxu0 0.0
      %1337 = vmatpush.msra.mxu0 0.0
      %1338 = vmatpush.msra.mxu0 0.0
      %1339 = vmatpush.msra.mxu0 0.0
      %1340 = vmatpush.msra.mxu0 0.0
      %1341 = vmatpush.msra.mxu0 0.0
      %1342 = vmatpush.msra.mxu0 0.0
      %1343 = vmatpush.msra.mxu0 0.0
      %1344 = vmatpush.msra.mxu0 %v1321
      %1345 = vmatpush.msra.mxu0 %v1320
      %1346 = vmatpush.msra.mxu0 %v1319
      %1347 = vmatpush.msra.mxu0 %v1318
      %1348 = vmatmul.f32.gmra.mxu0 %v1327
      %v1349 = vpop.f32.mrf.mxu0
      %v1350 = vadd.f32 %v1324, %v1349
      %1351 = vmatmul.f32.gmra.mxu0 %v1330
      %v1352 = vpop.f32.mrf.mxu0
      %v1353 = vadd.f32 %v1324, %v1352
      %1354 = vdwg.mxu0
      %v1355 = vmul.f32 %v1350, %v1350
      %v1356 = vmul.f32 %v1353, %v1353
      %v1357 = vmul.f32 %v1350, %v1355
      %v1358 = vmul.f32 %v1353, %v1356
      %v1359 = vmul.f32 %v1357, 0.044715
      %v1360 = vmul.f32 %v1358, 0.044715
      %v1361 = vadd.f32 %v1350, %v1359
      %v1362 = vadd.f32 %v1353, %v1360
      %v1363 = vmul.f32 %v1361, 0.7978846
      %v1364 = vmul.f32 %v1362, 0.7978846
      %v1365 = vtanh.pop %v1363
      %v1366 = vtanh.pop %v1364
      %v1367 = vadd.f32 %v1365, 1.0
      %v1368 = vadd.f32 %v1366, 1.0
      %v1369 = vmul.f32 %v1367, 0.5
      %v1370 = vmul.f32 %v1368, 0.5
      %v1371 = vmul.f32 %v1350, %v1369
      %v1372 = vmul.f32 %v1353, %v1370
      %v1373 = vld [vmem:[%s11] sm:$0xff]
      %v1374 = vld [vmem:[%s11 + $0x8] sm:$0xff]
      %v1375 = vld [vmem:[%s11 + $0x10] sm:$0xff]
      %v1376 = vld [vmem:[%s11 + $0x18] sm:$0xff]
      %v1377 = vld [vmem:[%s11 + $0x20] sm:$0xff]
      %v1378 = vld [vmem:[%s11 + $0x28] sm:$0xff]
      %v1379 = vld [vmem:[%s11 + $0x30] sm:$0xff]
      %v1380 = vld [vmem:[%s11 + $0x38] sm:$0xff]
      %v1381 = vld [vmem:[%s11 + $0x40] sm:$0xff]
      %v1382 = vld [vmem:[%s11 + $0x48] sm:$0xff]
      %v1383 = vld [vmem:[%s11 + $0x50] sm:$0xff]
      %v1384 = vld [vmem:[%s11 + $0x58] sm:$0xff]
      %v1385 = vld [vmem:[%s11 + $0x60] sm:$0xff]
      %v1386 = vld [vmem:[%s11 + $0x68] sm:$0xff]
      %v1387 = vld [vmem:[%s11 + $0x70] sm:$0xff]
      %v1388 = vld [vmem:[%s11 + $0x78] sm:$0xff]
      %v1389 = vld [vmem:[%s12] sm:$0x1]
      %v1391 = vperm.slane %v1389, 0
      %1393 = vmatpush.msra.mxu0 %v1388
      %1394 = vmatpush.msra.mxu0 %v1387
      %1395 = vmatpush.msra.mxu0 %v1386
      %1396 = vmatpush.msra.mxu0 %v1385
      %1397 = vmatpush.msra.mxu0 %v1384
      %1398 = vmatpush.msra.mxu0 %v1383
      %1399 = vmatpush.msra.mxu0 %v1382
      %1400 = vmatpush.msra.mxu0 %v1381
      %1401 = vmatpush.msra.mxu0 %v1380
      %1402 = vmatpush.msra.mxu0 %v1379
      %1403 = vmatpush.msra.mxu0 %v1378
      %1404 = vmatpush.msra.mxu0 %v1377
      %1405 = vmatpush.msra.mxu0 %v1376
      %1406 = vmatpush.msra.mxu0 %v1375
      %1407 = vmatpush.msra.mxu0 %v1374
      %1408 = vmatpush.msra.mxu0 %v1373
      %1409 = vmatmul.f32.gmra.mxu0 %v1371
      %v1410 = vpop.f32.mrf.mxu0
      %v1411 = vadd.f32 %v1391, %v1410
      %1412 = vmatmul.f32.gmra.mxu0 %v1372
      %v1413 = vpop.f32.mrf.mxu0
      %v1414 = vadd.f32 %v1391, %v1413
      %1415 = vdwg.mxu0
      %v1416 = vadd.f32 %v1316, %v1411
      %v1417 = vadd.f32 %v1317, %v1414
      %v1418 = vld [vmem:[%s13] sm:$0x1]
      %v1419 = vld [vmem:[%s14] sm:$0x1]
      %v1420 = vsel %vm617, %v1416, 0.0
      %1421 = vadd.xlane.f32.xlu0 %v1420
      %v1422 = vpop.xlane.xlu0 %1421
      %v1423 = vsel %vm617, %v1417, 0.0
      %1424 = vadd.xlane.f32.xlu0 %v1423
      %v1425 = vpop.xlane.xlu0 %1424
      %v1426 = vmul.f32 %v1422, %v1269
      %v1427 = vmul.f32 %v1425, %v1269
      %v1428 = vsub.f32 %v1416, %v1426
      %v1429 = vsub.f32 %v1417, %v1427
      %v1430 = vmul.f32 %v1428, %v1428
      %v1431 = vmul.f32 %v1429, %v1429
      %v1432 = vsel %vm617, %v1430, 0.0
      %1433 = vadd.xlane.f32.xlu0 %v1432
      %v1434 = vpop.xlane.xlu0 %1433
      %v1435 = vsel %vm617, %v1431, 0.0
      %1436 = vadd.xlane.f32.xlu0 %v1435
      %v1437 = vpop.xlane.xlu0 %1436
      %v1438 = vmul.f32 %v1434, %v1269
      %v1439 = vmul.f32 %v1437, %v1269
      %v1440 = vadd.f32 %v1438, 1e-05
      %v1441 = vadd.f32 %v1439, 1e-05
      %v1442 = vrsqrt.pop %v1440
      %v1443 = vmul.f32 %v1442, %v1440
      %v1444 = vmul.f32 %v1443, %v1442
      %v1445 = vmul.f32 0.5, %v1444
      %v1446 = vsub.f32 1.5, %v1445
      %v1447 = vmul.f32 %v1442, %v1446
      %vm1448 = vweird.f32 %v1440
      %vm1449 = vweird.f32 %v1442
      %vm1450 = vmor %vm1448, %vm1449
      %v1451 = vsel %vm1450, %v1442, %v1447
      %v1452 = vrsqrt.pop %v1441
      %v1453 = vmul.f32 %v1452, %v1441
      %v1454 = vmul.f32 %v1453, %v1452
      %v1455 = vmul.f32 0.5, %v1454
      %v1456 = vsub.f32 1.5, %v1455
      %v1457 = vmul.f32 %v1452, %v1456
      %vm1458 = vweird.f32 %v1441
      %vm1459 = vweird.f32 %v1452
      %vm1460 = vmor %vm1458, %vm1459
      %v1461 = vsel %vm1460, %v1452, %v1457
      %v1462 = vmul.f32 %v1428, %v1451
      %v1463 = vmul.f32 %v1429, %v1461
      %v1465 = vperm.slane %v1418, 0
      %v1467 = vmul.f32 %v1462, %v1465
      %v1468 = vmul.f32 %v1463, %v1465
      %v1470 = vperm.slane %v1419, 0
      %v1472 = vadd.f32 %v1467, %v1470
      %v1473 = vadd.f32 %v1468, %v1470
      %s1474 = scalar_lea.vmem %s3, 32
      %v1475 = vld [vmem:[%s1474] sm:$0xff]
      %v1476 = vld [vmem:[%s1474 + $0x8] sm:$0xff]
      %v1477 = vld [vmem:[%s1474 + $0x10] sm:$0xff]
      %v1478 = vld [vmem:[%s1474 + $0x18] sm:$0xff]
      %s1479 = scalar_lea.vmem %s4, 1
      %v1480 = vld [vmem:[%s1479] sm:$0x1]
      %v1482 = vperm.slane %v1480, 0
      %v1485 = vsel %vm617, %v1472, 0
      %v1488 = vsel %vm617, %v1473, 0
      %1490 = vmatpush.msra.mxu0 0.0
      %1491 = vmatpush.msra.mxu0 0.0
      %1492 = vmatpush.msra.mxu0 0.0
      %1493 = vmatpush.msra.mxu0 0.0
      %1494 = vmatpush.msra.mxu0 0.0
      %1495 = vmatpush.msra.mxu0 0.0
      %1496 = vmatpush.msra.mxu0 0.0
      %1497 = vmatpush.msra.mxu0 0.0
      %1498 = vmatpush.msra.mxu0 0.0
      %1499 = vmatpush.msra.mxu0 0.0
      %1500 = vmatpush.msra.mxu0 0.0
      %1501 = vmatpush.msra.mxu0 0.0
      %1502 = vmatpush.msra.mxu0 %v1478
      %1503 = vmatpush.msra.mxu0 %v1477
      %1504 = vmatpush.msra.mxu0 %v1476
      %1505 = vmatpush.msra.mxu0 %v1475
      %1506 = vmatmul.f32.gmra.mxu0 %v1485
      %v1507 = vpop.f32.mrf.mxu0
      %v1508 = vadd.f32 %v1482, %v1507
      %1509 = vmatmul.f32.gmra.mxu0 %v1488
      %v1510 = vpop.f32.mrf.mxu0
      %v1511 = vadd.f32 %v1482, %v1510
      %1512 = vdwg.mxu0
      %v1513 = vld [vmem:[%s587] sm:$0x1]
      %v1514 = vmul.f32 %v1508, 0.35355338
      %v1516 = vperm.slane %v1513, 0
      %1519 = vrot.lane.b32.xlu0 %v1508, 96
      %v1520 = vpop.permute.xlu0 %1519
      %v1522 = vsel %vm655, %v1514, 0
      %v1524 = vsel %vm655, %v1520, 0
      %1526 = vmatpush.xpose.msra.mxu0 0.0
      %1527 = vmatpush.xpose.msra.mxu0 0.0
      %1528 = vmatpush.xpose.msra.mxu0 0.0
      %1529 = vmatpush.xpose.msra.mxu0 0.0
      %1530 = vmatpush.xpose.msra.mxu0 0.0
      %1531 = vmatpush.xpose.msra.mxu0 0.0
      %1532 = vmatpush.xpose.msra.mxu0 0.0
      %1533 = vmatpush.xpose.msra.mxu0 0.0
      %1534 = vmatpush.xpose.msra.mxu0 0.0
      %1535 = vmatpush.xpose.msra.mxu0 0.0
      %1536 = vmatpush.xpose.msra.mxu0 0.0
      %1537 = vmatpush.xpose.msra.mxu0 0.0
      %1538 = vmatpush.xpose.msra.mxu0 0.0
      %1539 = vmatpush.xpose.msra.mxu0 0.0
      %1540 = vmatpush.xpose.msra.mxu0 0.0
      %1541 = vmatpush.xpose.msra.mxu0 %v1524
      %1542 = vmatmul.f32.gmra.mxu0 %v1522
      %v1543 = vpop.f32.mrf.mxu0
      %v1544 = vadd.f32 %v1516, %v1543
      %1545 = vdwg.mxu0
      %v1546 = vsel %vm655, %v1544, -inf
      %1547 = vmax.xlane.f32.xlu0 %v1546
      %v1548 = vpop.xlane.xlu0 %1547
      %v1549 = vsub.f32 %v1544, %v1548
      %v1550 = vmul.f32 %v1549, 1.442695
      %v1551 = vpow.pop %v1550
      %v1552 = vsel %vm655, %v1551, 0.0
      %1553 = vadd.xlane.f32.xlu0 %v1552
      %v1554 = vpop.xlane.xlu0 %1553
      %v1555 = vrcp.pop %v1554
      %v1556 = vmul.f32 %v1551, %v1555
      %1557 = vrot.lane.b32.xlu0 %v1508, 64
      %v1558 = vpop.permute.xlu0 %1557
      %v1561 = vsel %vm655, %v1556, 0
      %1563 = vmatpush.msra.mxu0 0.0
      %1564 = vmatpush.msra.mxu0 0.0
      %1565 = vmatpush.msra.mxu0 0.0
      %1566 = vmatpush.msra.mxu0 0.0
      %1567 = vmatpush.msra.mxu0 0.0
      %1568 = vmatpush.msra.mxu0 0.0
      %1569 = vmatpush.msra.mxu0 0.0
      %1570 = vmatpush.msra.mxu0 0.0
      %1571 = vmatpush.msra.mxu0 0.0
      %1572 = vmatpush.msra.mxu0 0.0
      %1573 = vmatpush.msra.mxu0 0.0
      %1574 = vmatpush.msra.mxu0 0.0
      %1575 = vmatpush.msra.mxu0 0.0
      %1576 = vmatpush.msra.mxu0 0.0
      %1577 = vmatpush.msra.mxu0 0.0
      %1578 = vmatpush.msra.mxu0 %v1558
      %1579 = vmatmul.f32.gmra.mxu0 %v1561
      %v1580 = vpop.f32.mrf.mxu0
      %v1581 = vadd.f32 0.0, %v1580
      %1582 = vdwg.mxu0
      %1583 = vst.msk [vmem:[#allocation2] sm:$0xff] %vm655, %v1581
      %1584 = vrot.lane.b32.xlu0 %v1514, 120
      %v1585 = vpop.permute.xlu0 %1584
      %1586 = vrot.lane.b32.xlu0 %v1508, 88
      %v1587 = vpop.permute.xlu0 %1586
      %v1588 = vsel %vm655, %v1585, 0
      %v1590 = vsel %vm655, %v1587, 0
      %1592 = vmatpush.xpose.msra.mxu0 0.0
      %1593 = vmatpush.xpose.msra.mxu0 0.0
      %1594 = vmatpush.xpose.msra.mxu0 0.0
      %1595 = vmatpush.xpose.msra.mxu0 0.0
      %1596 = vmatpush.xpose.msra.mxu0 0.0
      %1597 = vmatpush.xpose.msra.mxu0 0.0
      %1598 = vmatpush.xpose.msra.mxu0 0.0
      %1599 = vmatpush.xpose.msra.mxu0 0.0
      %1600 = vmatpush.xpose.msra.mxu0 0.0
      %1601 = vmatpush.xpose.msra.mxu0 0.0
      %1602 = vmatpush.xpose.msra.mxu0 0.0
      %1603 = vmatpush.xpose.msra.mxu0 0.0
      %1604 = vmatpush.xpose.msra.mxu0 0.0
      %1605 = vmatpush.xpose.msra.mxu0 0.0
      %1606 = vmatpush.xpose.msra.mxu0 0.0
      %1607 = vmatpush.xpose.msra.mxu0 %v1590
      %1608 = vmatmul.f32.gmra.mxu0 %v1588
      %v1609 = vpop.f32.mrf.mxu0
      %v1610 = vadd.f32 %v1516, %v1609
      %1611 = vdwg.mxu0
      %v1612 = vsel %vm655, %v1610, -inf
      %1613 = vmax.xlane.f32.xlu0 %v1612
      %v1614 = vpop.xlane.xlu0 %1613
      %v1615 = vsub.f32 %v1610, %v1614
      %v1616 = vmul.f32 %v1615, 1.442695
      %v1617 = vpow.pop %v1616
      %v1618 = vsel %vm655, %v1617, 0.0
      %1619 = vadd.xlane.f32.xlu0 %v1618
      %v1620 = vpop.xlane.xlu0 %1619
      %v1621 = vrcp.pop %v1620
      %v1622 = vmul.f32 %v1617, %v1621
      %1623 = vrot.lane.b32.xlu0 %v1508, 56
      %v1624 = vpop.permute.xlu0 %1623
      %v1627 = vsel %vm655, %v1622, 0
      %1629 = vmatpush.msra.mxu0 0.0
      %1630 = vmatpush.msra.mxu0 0.0
      %1631 = vmatpush.msra.mxu0 0.0
      %1632 = vmatpush.msra.mxu0 0.0
      %1633 = vmatpush.msra.mxu0 0.0
      %1634 = vmatpush.msra.mxu0 0.0
      %1635 = vmatpush.msra.mxu0 0.0
      %1636 = vmatpush.msra.mxu0 0.0
      %1637 = vmatpush.msra.mxu0 0.0
      %1638 = vmatpush.msra.mxu0 0.0
      %1639 = vmatpush.msra.mxu0 0.0
      %1640 = vmatpush.msra.mxu0 0.0
      %1641 = vmatpush.msra.mxu0 0.0
      %1642 = vmatpush.msra.mxu0 0.0
      %1643 = vmatpush.msra.mxu0 0.0
      %1644 = vmatpush.msra.mxu0 %v1624
      %1645 = vmatmul.f32.gmra.mxu0 %v1627
      %v1646 = vpop.f32.mrf.mxu0
      %v1647 = vadd.f32 0.0, %v1646
      %1648 = vdwg.mxu0
      %1650 = vrot.lane.b32.xlu0 %v1647, 8
      %v1651 = vpop.permute.xlu0 %1650
      %1653 = vst.msk [vmem:[#allocation2] sm:$0xff] %vm788, %v1651
      %1654 = vrot.lane.b32.xlu0 %v1514, 112
      %v1655 = vpop.permute.xlu0 %1654
      %1656 = vrot.lane.b32.xlu0 %v1508, 80
      %v1657 = vpop.permute.xlu0 %1656
      %v1658 = vsel %vm655, %v1655, 0
      %v1660 = vsel %vm655, %v1657, 0
      %1662 = vmatpush.xpose.msra.mxu0 0.0
      %1663 = vmatpush.xpose.msra.mxu0 0.0
      %1664 = vmatpush.xpose.msra.mxu0 0.0
      %1665 = vmatpush.xpose.msra.mxu0 0.0
      %1666 = vmatpush.xpose.msra.mxu0 0.0
      %1667 = vmatpush.xpose.msra.mxu0 0.0
      %1668 = vmatpush.xpose.msra.mxu0 0.0
      %1669 = vmatpush.xpose.msra.mxu0 0.0
      %1670 = vmatpush.xpose.msra.mxu0 0.0
      %1671 = vmatpush.xpose.msra.mxu0 0.0
      %1672 = vmatpush.xpose.msra.mxu0 0.0
      %1673 = vmatpush.xpose.msra.mxu0 0.0
      %1674 = vmatpush.xpose.msra.mxu0 0.0
      %1675 = vmatpush.xpose.msra.mxu0 0.0
      %1676 = vmatpush.xpose.msra.mxu0 0.0
      %1677 = vmatpush.xpose.msra.mxu0 %v1660
      %1678 = vmatmul.f32.gmra.mxu0 %v1658
      %v1679 = vpop.f32.mrf.mxu0
      %v1680 = vadd.f32 %v1516, %v1679
      %1681 = vdwg.mxu0
      %v1682 = vsel %vm655, %v1680, -inf
      %1683 = vmax.xlane.f32.xlu0 %v1682
      %v1684 = vpop.xlane.xlu0 %1683
      %v1685 = vsub.f32 %v1680, %v1684
      %v1686 = vmul.f32 %v1685, 1.442695
      %v1687 = vpow.pop %v1686
      %v1688 = vsel %vm655, %v1687, 0.0
      %1689 = vadd.xlane.f32.xlu0 %v1688
      %v1690 = vpop.xlane.xlu0 %1689
      %v1691 = vrcp.pop %v1690
      %v1692 = vmul.f32 %v1687, %v1691
      %1693 = vrot.lane.b32.xlu0 %v1508, 48
      %v1694 = vpop.permute.xlu0 %1693
      %v1697 = vsel %vm655, %v1692, 0
      %1699 = vmatpush.msra.mxu0 0.0
      %1700 = vmatpush.msra.mxu0 0.0
      %1701 = vmatpush.msra.mxu0 0.0
      %1702 = vmatpush.msra.mxu0 0.0
      %1703 = vmatpush.msra.mxu0 0.0
      %1704 = vmatpush.msra.mxu0 0.0
      %1705 = vmatpush.msra.mxu0 0.0
      %1706 = vmatpush.msra.mxu0 0.0
      %1707 = vmatpush.msra.mxu0 0.0
      %1708 = vmatpush.msra.mxu0 0.0
      %1709 = vmatpush.msra.mxu0 0.0
      %1710 = vmatpush.msra.mxu0 0.0
      %1711 = vmatpush.msra.mxu0 0.0
      %1712 = vmatpush.msra.mxu0 0.0
      %1713 = vmatpush.msra.mxu0 0.0
      %1714 = vmatpush.msra.mxu0 %v1694
      %1715 = vmatmul.f32.gmra.mxu0 %v1697
      %v1716 = vpop.f32.mrf.mxu0
      %v1717 = vadd.f32 0.0, %v1716
      %1718 = vdwg.mxu0
      %1720 = vrot.lane.b32.xlu0 %v1717, 16
      %v1721 = vpop.permute.xlu0 %1720
      %1723 = vst.msk [vmem:[#allocation2] sm:$0xff] %vm859, %v1721
      %1724 = vrot.lane.b32.xlu0 %v1514, 104
      %v1725 = vpop.permute.xlu0 %1724
      %1726 = vrot.lane.b32.xlu0 %v1508, 72
      %v1727 = vpop.permute.xlu0 %1726
      %v1728 = vsel %vm655, %v1725, 0
      %v1730 = vsel %vm655, %v1727, 0
      %1732 = vmatpush.xpose.msra.mxu0 0.0
      %1733 = vmatpush.xpose.msra.mxu0 0.0
      %1734 = vmatpush.xpose.msra.mxu0 0.0
      %1735 = vmatpush.xpose.msra.mxu0 0.0
      %1736 = vmatpush.xpose.msra.mxu0 0.0
      %1737 = vmatpush.xpose.msra.mxu0 0.0
      %1738 = vmatpush.xpose.msra.mxu0 0.0
      %1739 = vmatpush.xpose.msra.mxu0 0.0
      %1740 = vmatpush.xpose.msra.mxu0 0.0
      %1741 = vmatpush.xpose.msra.mxu0 0.0
      %1742 = vmatpush.xpose.msra.mxu0 0.0
      %1743 = vmatpush.xpose.msra.mxu0 0.0
      %1744 = vmatpush.xpose.msra.mxu0 0.0
      %1745 = vmatpush.xpose.msra.mxu0 0.0
      %1746 = vmatpush.xpose.msra.mxu0 0.0
      %1747 = vmatpush.xpose.msra.mxu0 %v1730
      %1748 = vmatmul.f32.gmra.mxu0 %v1728
      %v1749 = vpop.f32.mrf.mxu0
      %v1750 = vadd.f32 %v1516, %v1749
      %1751 = vdwg.mxu0
      %v1752 = vsel %vm655, %v1750, -inf
      %1753 = vmax.xlane.f32.xlu0 %v1752
      %v1754 = vpop.xlane.xlu0 %1753
      %v1755 = vsub.f32 %v1750, %v1754
      %v1756 = vmul.f32 %v1755, 1.442695
      %v1757 = vpow.pop %v1756
      %v1758 = vsel %vm655, %v1757, 0.0
      %1759 = vadd.xlane.f32.xlu0 %v1758
      %v1760 = vpop.xlane.xlu0 %1759
      %v1761 = vrcp.pop %v1760
      %v1762 = vmul.f32 %v1757, %v1761
      %1763 = vrot.lane.b32.xlu0 %v1508, 40
      %v1764 = vpop.permute.xlu0 %1763
      %v1767 = vsel %vm655, %v1762, 0
      %1769 = vmatpush.msra.mxu0 0.0
      %1770 = vmatpush.msra.mxu0 0.0
      %1771 = vmatpush.msra.mxu0 0.0
      %1772 = vmatpush.msra.mxu0 0.0
      %1773 = vmatpush.msra.mxu0 0.0
      %1774 = vmatpush.msra.mxu0 0.0
      %1775 = vmatpush.msra.mxu0 0.0
      %1776 = vmatpush.msra.mxu0 0.0
      %1777 = vmatpush.msra.mxu0 0.0
      %1778 = vmatpush.msra.mxu0 0.0
      %1779 = vmatpush.msra.mxu0 0.0
      %1780 = vmatpush.msra.mxu0 0.0
      %1781 = vmatpush.msra.mxu0 0.0
      %1782 = vmatpush.msra.mxu0 0.0
      %1783 = vmatpush.msra.mxu0 0.0
      %1784 = vmatpush.msra.mxu0 %v1764
      %1785 = vmatmul.f32.gmra.mxu0 %v1767
      %v1786 = vpop.f32.mrf.mxu0
      %v1787 = vadd.f32 0.0, %v1786
      %1788 = vdwg.mxu0
      %1790 = vrot.lane.b32.xlu0 %v1787, 24
      %v1791 = vpop.permute.xlu0 %1790
      %1793 = vst.msk [vmem:[#allocation2] sm:$0xff] %vm930, %v1791
      %v1794 = vld [vmem:[%s932] sm:$0x1]
      %v1795 = vmul.f32 %v1511, 0.35355338
      %v1797 = vperm.slane %v1794, 0
      %1800 = vrot.lane.b32.xlu0 %v1511, 96
      %v1801 = vpop.permute.xlu0 %1800
      %v1803 = vsel %vm655, %v1795, 0
      %v1805 = vsel %vm655, %v1801, 0
      %1807 = vmatpush.xpose.msra.mxu0 0.0
      %1808 = vmatpush.xpose.msra.mxu0 0.0
      %1809 = vmatpush.xpose.msra.mxu0 0.0
      %1810 = vmatpush.xpose.msra.mxu0 0.0
      %1811 = vmatpush.xpose.msra.mxu0 0.0
      %1812 = vmatpush.xpose.msra.mxu0 0.0
      %1813 = vmatpush.xpose.msra.mxu0 0.0
      %1814 = vmatpush.xpose.msra.mxu0 0.0
      %1815 = vmatpush.xpose.msra.mxu0 0.0
      %1816 = vmatpush.xpose.msra.mxu0 0.0
      %1817 = vmatpush.xpose.msra.mxu0 0.0
      %1818 = vmatpush.xpose.msra.mxu0 0.0
      %1819 = vmatpush.xpose.msra.mxu0 0.0
      %1820 = vmatpush.xpose.msra.mxu0 0.0
      %1821 = vmatpush.xpose.msra.mxu0 0.0
      %1822 = vmatpush.xpose.msra.mxu0 %v1805
      %1823 = vmatmul.f32.gmra.mxu0 %v1803
      %v1824 = vpop.f32.mrf.mxu0
      %v1825 = vadd.f32 %v1797, %v1824
      %1826 = vdwg.mxu0
      %v1827 = vsel %vm655, %v1825, -inf
      %1828 = vmax.xlane.f32.xlu0 %v1827
      %v1829 = vpop.xlane.xlu0 %1828
      %v1830 = vsub.f32 %v1825, %v1829
      %v1831 = vmul.f32 %v1830, 1.442695
      %v1832 = vpow.pop %v1831
      %v1833 = vsel %vm655, %v1832, 0.0
      %1834 = vadd.xlane.f32.xlu0 %v1833
      %v1835 = vpop.xlane.xlu0 %1834
      %v1836 = vrcp.pop %v1835
      %v1837 = vmul.f32 %v1832, %v1836
      %1838 = vrot.lane.b32.xlu0 %v1511, 64
      %v1839 = vpop.permute.xlu0 %1838
      %v1842 = vsel %vm655, %v1837, 0
      %1844 = vmatpush.msra.mxu0 0.0
      %1845 = vmatpush.msra.mxu0 0.0
      %1846 = vmatpush.msra.mxu0 0.0
      %1847 = vmatpush.msra.mxu0 0.0
      %1848 = vmatpush.msra.mxu0 0.0
      %1849 = vmatpush.msra.mxu0 0.0
      %1850 = vmatpush.msra.mxu0 0.0
      %1851 = vmatpush.msra.mxu0 0.0
      %1852 = vmatpush.msra.mxu0 0.0
      %1853 = vmatpush.msra.mxu0 0.0
      %1854 = vmatpush.msra.mxu0 0.0
      %1855 = vmatpush.msra.mxu0 0.0
      %1856 = vmatpush.msra.mxu0 0.0
      %1857 = vmatpush.msra.mxu0 0.0
      %1858 = vmatpush.msra.mxu0 0.0
      %1859 = vmatpush.msra.mxu0 %v1839
      %1860 = vmatmul.f32.gmra.mxu0 %v1842
      %v1861 = vpop.f32.mrf.mxu0
      %v1862 = vadd.f32 0.0, %v1861
      %1863 = vdwg.mxu0
      %1864 = vst.msk [vmem:[#allocation2 + $0x8] sm:$0xff] %vm655, %v1862
      %1865 = vrot.lane.b32.xlu0 %v1795, 120
      %v1866 = vpop.permute.xlu0 %1865
      %1867 = vrot.lane.b32.xlu0 %v1511, 88
      %v1868 = vpop.permute.xlu0 %1867
      %v1869 = vsel %vm655, %v1866, 0
      %v1871 = vsel %vm655, %v1868, 0
      %1873 = vmatpush.xpose.msra.mxu0 0.0
      %1874 = vmatpush.xpose.msra.mxu0 0.0
      %1875 = vmatpush.xpose.msra.mxu0 0.0
      %1876 = vmatpush.xpose.msra.mxu0 0.0
      %1877 = vmatpush.xpose.msra.mxu0 0.0
      %1878 = vmatpush.xpose.msra.mxu0 0.0
      %1879 = vmatpush.xpose.msra.mxu0 0.0
      %1880 = vmatpush.xpose.msra.mxu0 0.0
      %1881 = vmatpush.xpose.msra.mxu0 0.0
      %1882 = vmatpush.xpose.msra.mxu0 0.0
      %1883 = vmatpush.xpose.msra.mxu0 0.0
      %1884 = vmatpush.xpose.msra.mxu0 0.0
      %1885 = vmatpush.xpose.msra.mxu0 0.0
      %1886 = vmatpush.xpose.msra.mxu0 0.0
      %1887 = vmatpush.xpose.msra.mxu0 0.0
      %1888 = vmatpush.xpose.msra.mxu0 %v1871
      %1889 = vmatmul.f32.gmra.mxu0 %v1869
      %v1890 = vpop.f32.mrf.mxu0
      %v1891 = vadd.f32 %v1797, %v1890
      %1892 = vdwg.mxu0
      %v1893 = vsel %vm655, %v1891, -inf
      %1894 = vmax.xlane.f32.xlu0 %v1893
      %v1895 = vpop.xlane.xlu0 %1894
      %v1896 = vsub.f32 %v1891, %v1895
      %v1897 = vmul.f32 %v1896, 1.442695
      %v1898 = vpow.pop %v1897
      %v1899 = vsel %vm655, %v1898, 0.0
      %1900 = vadd.xlane.f32.xlu0 %v1899
      %v1901 = vpop.xlane.xlu0 %1900
      %v1902 = vrcp.pop %v1901
      %v1903 = vmul.f32 %v1898, %v1902
      %1904 = vrot.lane.b32.xlu0 %v1511, 56
      %v1905 = vpop.permute.xlu0 %1904
      %v1908 = vsel %vm655, %v1903, 0
      %1910 = vmatpush.msra.mxu0 0.0
      %1911 = vmatpush.msra.mxu0 0.0
      %1912 = vmatpush.msra.mxu0 0.0
      %1913 = vmatpush.msra.mxu0 0.0
      %1914 = vmatpush.msra.mxu0 0.0
      %1915 = vmatpush.msra.mxu0 0.0
      %1916 = vmatpush.msra.mxu0 0.0
      %1917 = vmatpush.msra.mxu0 0.0
      %1918 = vmatpush.msra.mxu0 0.0
      %1919 = vmatpush.msra.mxu0 0.0
      %1920 = vmatpush.msra.mxu0 0.0
      %1921 = vmatpush.msra.mxu0 0.0
      %1922 = vmatpush.msra.mxu0 0.0
      %1923 = vmatpush.msra.mxu0 0.0
      %1924 = vmatpush.msra.mxu0 0.0
      %1925 = vmatpush.msra.mxu0 %v1905
      %1926 = vmatmul.f32.gmra.mxu0 %v1908
      %v1927 = vpop.f32.mrf.mxu0
      %v1928 = vadd.f32 0.0, %v1927
      %1929 = vdwg.mxu0
      %1931 = vrot.lane.b32.xlu0 %v1928, 8
      %v1932 = vpop.permute.xlu0 %1931
      %1934 = vst.msk [vmem:[#allocation2 + $0x8] sm:$0xff] %vm788, %v1932
      %1935 = vrot.lane.b32.xlu0 %v1795, 112
      %v1936 = vpop.permute.xlu0 %1935
      %1937 = vrot.lane.b32.xlu0 %v1511, 80
      %v1938 = vpop.permute.xlu0 %1937
      %v1939 = vsel %vm655, %v1936, 0
      %v1941 = vsel %vm655, %v1938, 0
      %1943 = vmatpush.xpose.msra.mxu0 0.0
      %1944 = vmatpush.xpose.msra.mxu0 0.0
      %1945 = vmatpush.xpose.msra.mxu0 0.0
      %1946 = vmatpush.xpose.msra.mxu0 0.0
      %1947 = vmatpush.xpose.msra.mxu0 0.0
      %1948 = vmatpush.xpose.msra.mxu0 0.0
      %1949 = vmatpush.xpose.msra.mxu0 0.0
      %1950 = vmatpush.xpose.msra.mxu0 0.0
      %1951 = vmatpush.xpose.msra.mxu0 0.0
      %1952 = vmatpush.xpose.msra.mxu0 0.0
      %1953 = vmatpush.xpose.msra.mxu0 0.0
      %1954 = vmatpush.xpose.msra.mxu0 0.0
      %1955 = vmatpush.xpose.msra.mxu0 0.0
      %1956 = vmatpush.xpose.msra.mxu0 0.0
      %1957 = vmatpush.xpose.msra.mxu0 0.0
      %1958 = vmatpush.xpose.msra.mxu0 %v1941
      %1959 = vmatmul.f32.gmra.mxu0 %v1939
      %v1960 = vpop.f32.mrf.mxu0
      %v1961 = vadd.f32 %v1797, %v1960
      %1962 = vdwg.mxu0
      %v1963 = vsel %vm655, %v1961, -inf
      %1964 = vmax.xlane.f32.xlu0 %v1963
      %v1965 = vpop.xlane.xlu0 %1964
      %v1966 = vsub.f32 %v1961, %v1965
      %v1967 = vmul.f32 %v1966, 1.442695
      %v1968 = vpow.pop %v1967
      %v1969 = vsel %vm655, %v1968, 0.0
      %1970 = vadd.xlane.f32.xlu0 %v1969
      %v1971 = vpop.xlane.xlu0 %1970
      %v1972 = vrcp.pop %v1971
      %v1973 = vmul.f32 %v1968, %v1972
      %1974 = vrot.lane.b32.xlu0 %v1511, 48
      %v1975 = vpop.permute.xlu0 %1974
      %v1978 = vsel %vm655, %v1973, 0
      %1980 = vmatpush.msra.mxu0 0.0
      %1981 = vmatpush.msra.mxu0 0.0
      %1982 = vmatpush.msra.mxu0 0.0
      %1983 = vmatpush.msra.mxu0 0.0
      %1984 = vmatpush.msra.mxu0 0.0
      %1985 = vmatpush.msra.mxu0 0.0
      %1986 = vmatpush.msra.mxu0 0.0
      %1987 = vmatpush.msra.mxu0 0.0
      %1988 = vmatpush.msra.mxu0 0.0
      %1989 = vmatpush.msra.mxu0 0.0
      %1990 = vmatpush.msra.mxu0 0.0
      %1991 = vmatpush.msra.mxu0 0.0
      %1992 = vmatpush.msra.mxu0 0.0
      %1993 = vmatpush.msra.mxu0 0.0
      %1994 = vmatpush.msra.mxu0 0.0
      %1995 = vmatpush.msra.mxu0 %v1975
      %1996 = vmatmul.f32.gmra.mxu0 %v1978
      %v1997 = vpop.f32.mrf.mxu0
      %v1998 = vadd.f32 0.0, %v1997
      %1999 = vdwg.mxu0
      %2001 = vrot.lane.b32.xlu0 %v1998, 16
      %v2002 = vpop.permute.xlu0 %2001
      %2004 = vst.msk [vmem:[#allocation2 + $0x8] sm:$0xff] %vm859, %v2002
      %2005 = vrot.lane.b32.xlu0 %v1795, 104
      %v2006 = vpop.permute.xlu0 %2005
      %2007 = vrot.lane.b32.xlu0 %v1511, 72
      %v2008 = vpop.permute.xlu0 %2007
      %v2009 = vsel %vm655, %v2006, 0
      %v2011 = vsel %vm655, %v2008, 0
      %2013 = vmatpush.xpose.msra.mxu0 0.0
      %2014 = vmatpush.xpose.msra.mxu0 0.0
      %2015 = vmatpush.xpose.msra.mxu0 0.0
      %2016 = vmatpush.xpose.msra.mxu0 0.0
      %2017 = vmatpush.xpose.msra.mxu0 0.0
      %2018 = vmatpush.xpose.msra.mxu0 0.0
      %2019 = vmatpush.xpose.msra.mxu0 0.0
      %2020 = vmatpush.xpose.msra.mxu0 0.0
      %2021 = vmatpush.xpose.msra.mxu0 0.0
      %2022 = vmatpush.xpose.msra.mxu0 0.0
      %2023 = vmatpush.xpose.msra.mxu0 0.0
      %2024 = vmatpush.xpose.msra.mxu0 0.0
      %2025 = vmatpush.xpose.msra.mxu0 0.0
      %2026 = vmatpush.xpose.msra.mxu0 0.0
      %2027 = vmatpush.xpose.msra.mxu0 0.0
      %2028 = vmatpush.xpose.msra.mxu0 %v2011
      %2029 = vmatmul.f32.gmra.mxu0 %v2009
      %v2030 = vpop.f32.mrf.mxu0
      %v2031 = vadd.f32 %v1797, %v2030
      %2032 = vdwg.mxu0
      %v2033 = vsel %vm655, %v2031, -inf
      %2034 = vmax.xlane.f32.xlu0 %v2033
      %v2035 = vpop.xlane.xlu0 %2034
      %v2036 = vsub.f32 %v2031, %v2035
      %v2037 = vmul.f32 %v2036, 1.442695
      %v2038 = vpow.pop %v2037
      %v2039 = vsel %vm655, %v2038, 0.0
      %2040 = vadd.xlane.f32.xlu0 %v2039
      %v2041 = vpop.xlane.xlu0 %2040
      %v2042 = vrcp.pop %v2041
      %v2043 = vmul.f32 %v2038, %v2042
      %2044 = vrot.lane.b32.xlu0 %v1511, 40
      %v2045 = vpop.permute.xlu0 %2044
      %v2048 = vsel %vm655, %v2043, 0
      %2050 = vmatpush.msra.mxu0 0.0
      %2051 = vmatpush.msra.mxu0 0.0
      %2052 = vmatpush.msra.mxu0 0.0
      %2053 = vmatpush.msra.mxu0 0.0
      %2054 = vmatpush.msra.mxu0 0.0
      %2055 = vmatpush.msra.mxu0 0.0
      %2056 = vmatpush.msra.mxu0 0.0
      %2057 = vmatpush.msra.mxu0 0.0
      %2058 = vmatpush.msra.mxu0 0.0
      %2059 = vmatpush.msra.mxu0 0.0
      %2060 = vmatpush.msra.mxu0 0.0
      %2061 = vmatpush.msra.mxu0 0.0
      %2062 = vmatpush.msra.mxu0 0.0
      %2063 = vmatpush.msra.mxu0 0.0
      %2064 = vmatpush.msra.mxu0 0.0
      %2065 = vmatpush.msra.mxu0 %v2045
      %2066 = vmatmul.f32.gmra.mxu0 %v2048
      %v2067 = vpop.f32.mrf.mxu0
      %v2068 = vadd.f32 0.0, %v2067
      %2069 = vdwg.mxu0
      %2071 = vrot.lane.b32.xlu0 %v2068, 24
      %v2072 = vpop.permute.xlu0 %2071
      %2074 = vst.msk [vmem:[#allocation2 + $0x8] sm:$0xff] %vm930, %v2072
      %v2075 = vld [vmem:[#allocation2] sm:$0xff]
      %v2076 = vld [vmem:[#allocation2 + $0x8] sm:$0xff]
      %s2077 = scalar_lea.vmem %s5, 32
      %v2078 = vld [vmem:[%s2077] sm:$0xff]
      %v2079 = vld [vmem:[%s2077 + $0x8] sm:$0xff]
      %v2080 = vld [vmem:[%s2077 + $0x10] sm:$0xff]
      %v2081 = vld [vmem:[%s2077 + $0x18] sm:$0xff]
      %s2082 = scalar_lea.vmem %s6, 1
      %v2083 = vld [vmem:[%s2082] sm:$0x1]
      %v2085 = vperm.slane %v2083, 0
      %v2088 = vsel %vm617, %v2075, 0
      %v2091 = vsel %vm617, %v2076, 0
      %2093 = vmatpush.msra.mxu0 0.0
      %2094 = vmatpush.msra.mxu0 0.0
      %2095 = vmatpush.msra.mxu0 0.0
      %2096 = vmatpush.msra.mxu0 0.0
      %2097 = vmatpush.msra.mxu0 0.0
      %2098 = vmatpush.msra.mxu0 0.0
      %2099 = vmatpush.msra.mxu0 0.0
      %2100 = vmatpush.msra.mxu0 0.0
      %2101 = vmatpush.msra.mxu0 0.0
      %2102 = vmatpush.msra.mxu0 0.0
      %2103 = vmatpush.msra.mxu0 0.0
      %2104 = vmatpush.msra.mxu0 0.0
      %2105 = vmatpush.msra.mxu0 %v2081
      %2106 = vmatpush.msra.mxu0 %v2080
      %2107 = vmatpush.msra.mxu0 %v2079
      %2108 = vmatpush.msra.mxu0 %v2078
      %2109 = vmatmul.f32.gmra.mxu0 %v2088
      %v2110 = vpop.f32.mrf.mxu0
      %v2111 = vadd.f32 %v2085, %v2110
      %2112 = vmatmul.f32.gmra.mxu0 %v2091
      %v2113 = vpop.f32.mrf.mxu0
      %v2114 = vadd.f32 %v2085, %v2113
      %2115 = vdwg.mxu0
      %v2116 = vadd.f32 %v1472, %v2111
      %v2117 = vadd.f32 %v1473, %v2114
      %s2118 = scalar_lea.vmem %s7, 1
      %v2119 = vld [vmem:[%s2118] sm:$0x1]
      %s2120 = scalar_lea.vmem %s8, 1
      %v2121 = vld [vmem:[%s2120] sm:$0x1]
      %v2122 = vsel %vm617, %v2116, 0.0
      %2123 = vadd.xlane.f32.xlu0 %v2122
      %v2124 = vpop.xlane.xlu0 %2123
      %v2125 = vsel %vm617, %v2117, 0.0
      %2126 = vadd.xlane.f32.xlu0 %v2125
      %v2127 = vpop.xlane.xlu0 %2126
      %v2128 = vmul.f32 %v2124, %v1269
      %v2129 = vmul.f32 %v2127, %v1269
      %v2130 = vsub.f32 %v2116, %v2128
      %v2131 = vsub.f32 %v2117, %v2129
      %v2132 = vmul.f32 %v2130, %v2130
      %v2133 = vmul.f32 %v2131, %v2131
      %v2134 = vsel %vm617, %v2132, 0.0
      %2135 = vadd.xlane.f32.xlu0 %v2134
      %v2136 = vpop.xlane.xlu0 %2135
      %v2137 = vsel %vm617, %v2133, 0.0
      %2138 = vadd.xlane.f32.xlu0 %v2137
      %v2139 = vpop.xlane.xlu0 %2138
      %v2140 = vmul.f32 %v2136, %v1269
      %v2141 = vmul.f32 %v2139, %v1269
      %v2142 = vadd.f32 %v2140, 1e-05
      %v2143 = vadd.f32 %v2141, 1e-05
      %v2144 = vrsqrt.pop %v2142
      %v2145 = vmul.f32 %v2144, %v2142
      %v2146 = vmul.f32 %v2145, %v2144
      %v2147 = vmul.f32 0.5, %v2146
      %v2148 = vsub.f32 1.5, %v2147
      %v2149 = vmul.f32 %v2144, %v2148
      %vm2150 = vweird.f32 %v2142
      %vm2151 = vweird.f32 %v2144
      %vm2152 = vmor %vm2150, %vm2151
      %v2153 = vsel %vm2152, %v2144, %v2149
      %v2154 = vrsqrt.pop %v2143
      %v2155 = vmul.f32 %v2154, %v2143
      %v2156 = vmul.f32 %v2155, %v2154
      %v2157 = vmul.f32 0.5, %v2156
      %v2158 = vsub.f32 1.5, %v2157
      %v2159 = vmul.f32 %v2154, %v2158
      %vm2160 = vweird.f32 %v2143
      %vm2161 = vweird.f32 %v2154
      %vm2162 = vmor %vm2160, %vm2161
      %v2163 = vsel %vm2162, %v2154, %v2159
      %v2164 = vmul.f32 %v2130, %v2153
      %v2165 = vmul.f32 %v2131, %v2163
      %v2167 = vperm.slane %v2119, 0
      %v2169 = vmul.f32 %v2164, %v2167
      %v2170 = vmul.f32 %v2165, %v2167
      %v2172 = vperm.slane %v2121, 0
      %v2174 = vadd.f32 %v2169, %v2172
      %v2175 = vadd.f32 %v2170, %v2172
      %s2176 = scalar_lea.vmem %s9, 32
      %v2177 = vld [vmem:[%s2176] sm:$0xff]
      %v2178 = vld [vmem:[%s2176 + $0x8] sm:$0xff]
      %v2179 = vld [vmem:[%s2176 + $0x10] sm:$0xff]
      %v2180 = vld [vmem:[%s2176 + $0x18] sm:$0xff]
      %s2181 = scalar_lea.vmem %s10, 1
      %v2182 = vld [vmem:[%s2181] sm:$0x1]
      %v2184 = vperm.slane %v2182, 0
      %v2187 = vsel %vm617, %v2174, 0
      %v2190 = vsel %vm617, %v2175, 0
      %2192 = vmatpush.msra.mxu0 0.0
      %2193 = vmatpush.msra.mxu0 0.0
      %2194 = vmatpush.msra.mxu0 0.0
      %2195 = vmatpush.msra.mxu0 0.0
      %2196 = vmatpush.msra.mxu0 0.0
      %2197 = vmatpush.msra.mxu0 0.0
      %2198 = vmatpush.msra.mxu0 0.0
      %2199 = vmatpush.msra.mxu0 0.0
      %2200 = vmatpush.msra.mxu0 0.0
      %2201 = vmatpush.msra.mxu0 0.0
      %2202 = vmatpush.msra.mxu0 0.0
      %2203 = vmatpush.msra.mxu0 0.0
      %2204 = vmatpush.msra.mxu0 %v2180
      %2205 = vmatpush.msra.mxu0 %v2179
      %2206 = vmatpush.msra.mxu0 %v2178
      %2207 = vmatpush.msra.mxu0 %v2177
      %2208 = vmatmul.f32.gmra.mxu0 %v2187
      %v2209 = vpop.f32.mrf.mxu0
      %v2210 = vadd.f32 %v2184, %v2209
      %2211 = vmatmul.f32.gmra.mxu0 %v2190
      %v2212 = vpop.f32.mrf.mxu0
      %v2213 = vadd.f32 %v2184, %v2212
      %2214 = vdwg.mxu0
      %v2215 = vmul.f32 %v2210, %v2210
      %v2216 = vmul.f32 %v2213, %v2213
      %v2217 = vmul.f32 %v2210, %v2215
      %v2218 = vmul.f32 %v2213, %v2216
      %v2219 = vmul.f32 %v2217, 0.044715
      %v2220 = vmul.f32 %v2218, 0.044715
      %v2221 = vadd.f32 %v2210, %v2219
      %v2222 = vadd.f32 %v2213, %v2220
      %v2223 = vmul.f32 %v2221, 0.7978846
      %v2224 = vmul.f32 %v2222, 0.7978846
      %v2225 = vtanh.pop %v2223
      %v2226 = vtanh.pop %v2224
      %v2227 = vadd.f32 %v2225, 1.0
      %v2228 = vadd.f32 %v2226, 1.0
      %v2229 = vmul.f32 %v2227, 0.5
      %v2230 = vmul.f32 %v2228, 0.5
      %v2231 = vmul.f32 %v2210, %v2229
      %v2232 = vmul.f32 %v2213, %v2230
      %s2233 = scalar_lea.vmem %s11, 128
      %v2234 = vld [vmem:[%s2233] sm:$0xff]
      %v2235 = vld [vmem:[%s2233 + $0x8] sm:$0xff]
      %v2236 = vld [vmem:[%s2233 + $0x10] sm:$0xff]
      %v2237 = vld [vmem:[%s2233 + $0x18] sm:$0xff]
      %v2238 = vld [vmem:[%s2233 + $0x20] sm:$0xff]
      %v2239 = vld [vmem:[%s2233 + $0x28] sm:$0xff]
      %v2240 = vld [vmem:[%s2233 + $0x30] sm:$0xff]
      %v2241 = vld [vmem:[%s2233 + $0x38] sm:$0xff]
      %v2242 = vld [vmem:[%s2233 + $0x40] sm:$0xff]
      %v2243 = vld [vmem:[%s2233 + $0x48] sm:$0xff]
      %v2244 = vld [vmem:[%s2233 + $0x50] sm:$0xff]
      %v2245 = vld [vmem:[%s2233 + $0x58] sm:$0xff]
      %v2246 = vld [vmem:[%s2233 + $0x60] sm:$0xff]
      %v2247 = vld [vmem:[%s2233 + $0x68] sm:$0xff]
      %v2248 = vld [vmem:[%s2233 + $0x70] sm:$0xff]
      %v2249 = vld [vmem:[%s2233 + $0x78] sm:$0xff]
      %s2250 = scalar_lea.vmem %s12, 1
      %v2251 = vld [vmem:[%s2250] sm:$0x1]
      %v2253 = vperm.slane %v2251, 0
      %2255 = vmatpush.msra.mxu0 %v2249
      %2256 = vmatpush.msra.mxu0 %v2248
      %2257 = vmatpush.msra.mxu0 %v2247
      %2258 = vmatpush.msra.mxu0 %v2246
      %2259 = vmatpush.msra.mxu0 %v2245
      %2260 = vmatpush.msra.mxu0 %v2244
      %2261 = vmatpush.msra.mxu0 %v2243
      %2262 = vmatpush.msra.mxu0 %v2242
      %2263 = vmatpush.msra.mxu0 %v2241
      %2264 = vmatpush.msra.mxu0 %v2240
      %2265 = vmatpush.msra.mxu0 %v2239
      %2266 = vmatpush.msra.mxu0 %v2238
      %2267 = vmatpush.msra.mxu0 %v2237
      %2268 = vmatpush.msra.mxu0 %v2236
      %2269 = vmatpush.msra.mxu0 %v2235
      %2270 = vmatpush.msra.mxu0 %v2234
      %2271 = vmatmul.f32.gmra.mxu0 %v2231
      %v2272 = vpop.f32.mrf.mxu0
      %v2273 = vadd.f32 %v2253, %v2272
      %2274 = vmatmul.f32.gmra.mxu0 %v2232
      %v2275 = vpop.f32.mrf.mxu0
      %v2276 = vadd.f32 %v2253, %v2275
      %2277 = vdwg.mxu0
      %v2278 = vadd.f32 %v2174, %v2273
      %v2279 = vadd.f32 %v2175, %v2276
      %s2280 = scalar_lea.vmem %s13, 1
      %v2281 = vld [vmem:[%s2280] sm:$0x1]
      %s2282 = scalar_lea.vmem %s14, 1
      %v2283 = vld [vmem:[%s2282] sm:$0x1]
      %v2284 = vsel %vm617, %v2278, 0.0
      %2285 = vadd.xlane.f32.xlu0 %v2284
      %v2286 = vpop.xlane.xlu0 %2285
      %v2287 = vsel %vm617, %v2279, 0.0
      %2288 = vadd.xlane.f32.xlu0 %v2287
      %v2289 = vpop.xlane.xlu0 %2288
      %v2290 = vmul.f32 %v2286, %v1269
      %v2291 = vmul.f32 %v2289, %v1269
      %v2292 = vsub.f32 %v2278, %v2290
      %v2293 = vsub.f32 %v2279, %v2291
      %v2294 = vmul.f32 %v2292, %v2292
      %v2295 = vmul.f32 %v2293, %v2293
      %v2296 = vsel %vm617, %v2294, 0.0
      %2297 = vadd.xlane.f32.xlu0 %v2296
      %v2298 = vpop.xlane.xlu0 %2297
      %v2299 = vsel %vm617, %v2295, 0.0
      %2300 = vadd.xlane.f32.xlu0 %v2299
      %v2301 = vpop.xlane.xlu0 %2300
      %v2302 = vmul.f32 %v2298, %v1269
      %v2303 = vmul.f32 %v2301, %v1269
      %v2304 = vadd.f32 %v2302, 1e-05
      %v2305 = vadd.f32 %v2303, 1e-05
      %v2306 = vrsqrt.pop %v2304
      %v2307 = vmul.f32 %v2306, %v2304
      %v2308 = vmul.f32 %v2307, %v2306
      %v2309 = vmul.f32 0.5, %v2308
      %v2310 = vsub.f32 1.5, %v2309
      %v2311 = vmul.f32 %v2306, %v2310
      %vm2312 = vweird.f32 %v2304
      %vm2313 = vweird.f32 %v2306
      %vm2314 = vmor %vm2312, %vm2313
      %v2315 = vsel %vm2314, %v2306, %v2311
      %v2316 = vrsqrt.pop %v2305
      %v2317 = vmul.f32 %v2316, %v2305
      %v2318 = vmul.f32 %v2317, %v2316
      %v2319 = vmul.f32 0.5, %v2318
      %v2320 = vsub.f32 1.5, %v2319
      %v2321 = vmul.f32 %v2316, %v2320
      %vm2322 = vweird.f32 %v2305
      %vm2323 = vweird.f32 %v2316
      %vm2324 = vmor %vm2322, %vm2323
      %v2325 = vsel %vm2324, %v2316, %v2321
      %v2326 = vmul.f32 %v2292, %v2315
      %v2327 = vmul.f32 %v2293, %v2325
      %v2329 = vperm.slane %v2281, 0
      %v2331 = vmul.f32 %v2326, %v2329
      %v2332 = vmul.f32 %v2327, %v2329
      %v2334 = vperm.slane %v2283, 0
      %v2336 = vadd.f32 %v2331, %v2334
      %v2337 = vadd.f32 %v2332, %v2334
      %v2338 = vld [vmem:[%s593] sm:$0xff]
      %v2339 = vld [vmem:[%s593 + $0x8] sm:$0xff]
      %2341 = vset.pattern.permute.xlu0 0
      %2342 = vperm.xlu0 %2341, %v2338
      %v2343 = vpop.permute.xlu0 %2342
      %2346 = vset.pattern.permute.xlu0 0
      %2347 = vperm.xlu0 %2346, %v2339
      %v2348 = vpop.permute.xlu0 %2347
      %v2350 = vmul.f32 %v2336, %v2343
      %v2351 = vmul.f32 %v2337, %v2348
      %2352 = vst.msk [vmem:[%s599] sm:$0xff] %vm617, %v2350
      %2353 = vst.msk [vmem:[%s599 + $0x8] sm:$0xff] %vm617, %v2351
      %v2354 = vld [vmem:[%s15] sm:$0xff]
      %v2355 = vld [vmem:[%s15 + $0x8] sm:$0xff]
      %v2356 = vld [vmem:[%s15 + $0x10] sm:$0xff]
      %v2357 = vld [vmem:[%s15 + $0x18] sm:$0xff]
      %v2359 = vsel %vm617, %v2350, 0
      %v2362 = vsel %vm617, %v2351, 0
      %2364 = vmatpush.msra.mxu0 0.0
      %2365 = vmatpush.msra.mxu0 0.0
      %2366 = vmatpush.msra.mxu0 0.0
      %2367 = vmatpush.msra.mxu0 0.0
      %2368 = vmatpush.msra.mxu0 0.0
      %2369 = vmatpush.msra.mxu0 0.0
      %2370 = vmatpush.msra.mxu0 0.0
      %2371 = vmatpush.msra.mxu0 0.0
      %2372 = vmatpush.msra.mxu0 0.0
      %2373 = vmatpush.msra.mxu0 0.0
      %2374 = vmatpush.msra.mxu0 0.0
      %2375 = vmatpush.msra.mxu0 0.0
      %2376 = vmatpush.msra.mxu0 %v2357
      %2377 = vmatpush.msra.mxu0 %v2356
      %2378 = vmatpush.msra.mxu0 %v2355
      %2379 = vmatpush.msra.mxu0 %v2354
      %2380 = vmatmul.f32.gmra.mxu0 %v2359
      %v2381 = vpop.f32.mrf.mxu0
      %v2382 = vadd.f32 0.0, %v2381
      %2383 = vmatmul.f32.gmra.mxu0 %v2362
      %v2384 = vpop.f32.mrf.mxu0
      %v2385 = vadd.f32 0.0, %v2384
      %2386 = vdwg.mxu0
      %2387 = vst [vmem:[%s605] sm:$0xff] %v2382
      %2388 = vst [vmem:[%s605 + $0x8] sm:$0xff] %v2385
      %s2389 = smul.u32 2, %s29
      %p2390 = scmp.lt.s32.totalorder %s2389, 3
      %s2391 = scalar_select %p2390, %s2389, 3
      %s2392 = smul.addr %s2391, 8
      %s2393 = scalar_lea.vmem %s16, %s2392
      %s2394 = smul.u32 2, %s29
      %p2395 = scmp.lt.s32.totalorder %s2394, 3
      %s2396 = scalar_select %p2395, %s2394, 3
      %s2397 = smul.addr %s2396, 8
      %s2398 = scalar_lea.vmem %s17, %s2397
      // Predicated region
      $region85: #{transformer_model_forward.1} parent=83 // pred_check
        %p2399 = pneg %p398
      $region86: #{transformer_model_forward.1} parent=83 // pred_check_branch
        %2401 = sbr.rel (%p2399) target = $region88
      $region87: #{transformer_model_forward.1} parent=83 // pred_region
        %s2402 = smul.u32 2, %s29
      $region88: #{transformer_model_forward.1} parent=83 // pred_fallthru
        _
      // Predicated region
      $region89: #{transformer_model_forward.1} parent=83 // pred_check
        %p2403 = pneg %p424
      $region90: #{transformer_model_forward.1} parent=83 // pred_check_branch
        %2405 = sbr.rel (%p2403) target = $region92
      $region91: #{transformer_model_forward.1} parent=83 // pred_region
        %s2406 = smul.u32 2, %s29
      $region92: #{transformer_model_forward.1} parent=83 // pred_fallthru
        _
    $region84: #{transformer_model_forward.1} parent=5 // pred_fallthru
      _
    %p2407 = scmp.le.s32.totalorder 2, %s24
    // Predicated region
    $region93: #{transformer_model_forward.1} parent=5 // pred_check
      %p2408 = pneg %p2407
    $region94: #{transformer_model_forward.1} parent=5 // pred_check_branch
      %2410 = sbr.rel (%p2408) target = $region96
    $region95: #{transformer_model_forward.1} parent=5 // pred_region
      %s2411 = ssub.s32 %s24, 2
      // Predicated region
      $region97: #{transformer_model_forward.1} parent=95 // pred_check
        %p2412 = pneg %p404
      $region98: #{transformer_model_forward.1} parent=95 // pred_check_branch
        %2414 = sbr.rel (%p2412) target = $region100
      $region99: #{transformer_model_forward.1} parent=95 // pred_region
        %s2415 = smul.u32 2, %s30
        %p2416 = scmp.lt.s32.totalorder %s2415, 3
        %s2417 = scalar_select %p2416, %s2415, 3
        %s2418 = smul.addr %s2417, 8
        %s2419 = scalar_lea.vmem %s16, %s2418
      $region100: #{transformer_model_forward.1} parent=95 // pred_fallthru
        _
      // Predicated region
      $region101: #{transformer_model_forward.1} parent=95 // pred_check
        %p2420 = pneg %p430
      $region102: #{transformer_model_forward.1} parent=95 // pred_check_branch
        %2422 = sbr.rel (%p2420) target = $region104
      $region103: #{transformer_model_forward.1} parent=95 // pred_region
        %s2423 = smul.u32 2, %s30
        %p2424 = scmp.lt.s32.totalorder %s2423, 3
        %s2425 = scalar_select %p2424, %s2423, 3
        %s2426 = smul.addr %s2425, 8
        %s2427 = scalar_lea.vmem %s17, %s2426
      $region104: #{transformer_model_forward.1} parent=95 // pred_fallthru
        _
    $region96: #{transformer_model_forward.1} parent=5 // pred_fallthru
      _
  $region6: #{transformer_model_forward.1} parent=0 // loop_footer
    %s28 = sadd.s32 1, %s24
  $region7: #{transformer_model_forward.1} parent=0 // loop_footer_branch
    %23 = sbr.rel target = $region3
  $region8: #{transformer_model_forward.1} parent=0 // loop_exit
    _

</llo_original>
